<compile_context>
chip_gen: v7x
topology: tpu7x:2x2x1
jax: 0.10.0
libtpu: 0.0.40
codegen_flags: <defaults>
</compile_context>

<pallas_src>
import functools

import jax
import jax.numpy as jnp
from jax import lax
from jax.experimental import pallas as pl
from jax.experimental.pallas import tpu as pltpu


_APPROX_GELU = False   # True -> tanh GELU on the EUP (use if VALU-bound)

# Abramowitz & Stegun 7.1.26 erf approximation (max abs error 1.5e-7); keeps
# torch's default exact-erf GELU semantics with only exp/abs/mul/add/where.
_ERF_P = 0.3275911
_ERF_A1 = 0.254829592
_ERF_A2 = -0.284496736
_ERF_A3 = 1.421413741
_ERF_A4 = -1.453152027
_ERF_A5 = 1.061405429


def _erf(x):
    a = jnp.abs(x)
    t = 1.0 / (1.0 + _ERF_P * a)
    poly = t * (_ERF_A1 + t * (_ERF_A2 + t * (_ERF_A3 + t * (_ERF_A4 + t * _ERF_A5))))
    y = 1.0 - poly * jnp.exp(-(a * a))
    return jnp.where(x < 0.0, -y, y)


def _gelu(x):
    if _APPROX_GELU:
        return jax.nn.gelu(x, approximate=True)     # tanh -> EUP
    return 0.5 * x * (1.0 + _erf(x * 0.7071067811865476))


def _vig_kernel(k, bt, n_pad, n_real, c_pad,
                x_ref,
                w1_ref, b1_ref,                      # in_layer1 (folded)
                fce_ref, fco_ref, fcb_ref,           # multi_head_fc (split)
                wo1_ref, bo1_ref,                    # out_layer1 (folded)
                wi2_ref, bi2_ref,                    # in_layer2 (folded)
                wo2_ref, bo2_ref,                    # out_layer2 (folded)
                o_ref):
    f32 = jnp.float32
    bf16 = jnp.bfloat16

    x2 = x_ref[0]                                    # (bt*n_pad, c_pad) f32
    xb = x2.reshape(bt, n_pad, c_pad)                # free: n_pad%8==0, c_pad%128==0

    def mm(a, w_ref, b_ref):
        # bf16 MXU operands, f32 accumulation, f32 bias add.
        return (jnp.dot(a.astype(bf16), w_ref[...],
                        preferred_element_type=f32) + b_ref[...])

    # ---- in_layer1 (folded Linear) on all fused rows ----
    h2 = mm(x2, w1_ref, b1_ref)                      # (bt*n_pad, c_pad) f32
    h2_bf = h2.astype(bf16)
    h = h2.reshape(bt, n_pad, c_pad)
    h_bf = h2_bf.reshape(bt, n_pad, c_pad)

    # ---- top-k graph on raw x (as in the reference), max-relative agg of h ----
    xb_bf = xb.astype(bf16)
    sim = jnp.einsum('bnc,bmc->bnm', xb_bf, xb_bf,
                     preferred_element_type=f32)     # (bt, n_pad, n_pad)
    col = lax.broadcasted_iota(jnp.int32, (n_pad, n_pad), 1)   # built once, shared
    if n_pad != n_real:
        # zero-padded tokens must never be selected as neighbours
        sim = jnp.where(col < n_real, sim, -jnp.inf)

    s = sim
    nbr = None
    for _ in range(k):                               # k small & static -> unrolled
        # max-reduce + min-index-reduce; ties -> lowest column index.
        # (lax.argmax has no reliable Pallas/Mosaic lowering, so keep the two
        #  supported reductions; torch.topk tie order is unspecified.)
        m = jnp.max(s, axis=-1, keepdims=True)
        idx = jnp.min(jnp.where(s == m, col, n_pad), axis=-1, keepdims=True)
        sel = col == idx                             # exactly one True per row
        # exact one-hot gather of selected neighbour rows on the MXU (bf16 0/1)
        sel_bf = jnp.where(sel, 1.0, 0.0).astype(bf16)
        gathered = jnp.einsum('bnm,bmc->bnc', sel_bf, h_bf,
                              preferred_element_type=f32)
        nbr = gathered if nbr is None else jnp.maximum(nbr, gathered)
        s = jnp.where(sel, -jnp.inf, s)

    # amax_j (h_j - h_i) over selected j  ==  (max over selected j of h_j) - h_i
    rel2 = (nbr - h).reshape(bt * n_pad, c_pad)

    # ---- multi_head_fc: 1x1 conv on interleaved [h, rel] channels ----
    y = (jnp.dot(h2_bf, fce_ref[...], preferred_element_type=f32)
         + jnp.dot(rel2.astype(bf16), fco_ref[...], preferred_element_type=f32)
         + fcb_ref[...])

    # ---- out_layer1(gelu(.)) + shortcut ----
    x1 = mm(_gelu(y), wo1_ref, bo1_ref) + x2

    # ---- FFN branch: out_layer2(gelu(in_layer2(x1))) + x1 ----
    z2 = mm(_gelu(mm(x1, wi2_ref, bi2_ref)), wo2_ref, bo2_ref)

    o_ref[0] = (x1 + z2).astype(o_ref.dtype)


def init_params(key, c):
    """Deterministic parameters with PyTorch-default-like uniform init (f32)."""
    def linear(k, fan_in, fan_out):
        k1, k2 = jax.random.split(k)
        bound = 1.0 / (fan_in ** 0.5)
        w = jax.random.uniform(k1, (fan_in, fan_out), jnp.float32, -bound, bound)
        b = jax.random.uniform(k2, (1, fan_out), jnp.float32, -bound, bound)
        return w, b

    keys = jax.random.split(key, 9)
    p = {}
    p["w1a"], p["b1a"] = linear(keys[0], c, c)          # in_layer1
    p["w1b"], p["b1b"] = linear(keys[1], c, c)
    # multi_head_fc: Conv1d(2c -> c, kernel=1, groups=1): weight (c, 2c), bias (c,)
    kw, kb = jax.random.split(keys[2])
    bound = 1.0 / ((2 * c) ** 0.5)
    w_fc = jax.random.uniform(kw, (c, 2 * c), jnp.float32, -bound, bound)
    b_fc = jax.random.uniform(kb, (1, c), jnp.float32, -bound, bound)
    # torch.stack([h, rel], -1).view(B*N, 2C) interleaves channels as
    # [h_0, rel_0, h_1, rel_1, ...] -> even input channels act on h, odd on rel
    p["fce"] = jnp.transpose(w_fc[:, 0::2])             # (c, c)
    p["fco"] = jnp.transpose(w_fc[:, 1::2])             # (c, c)
    p["fcb"] = b_fc
    p["wo1a"], p["bo1a"] = linear(keys[3], c, c)        # out_layer1
    p["wo1b"], p["bo1b"] = linear(keys[4], c, c)
    p["wi2a"], p["bi2a"] = linear(keys[5], c, 4 * c)    # in_layer2 (hidden = 4C)
    p["wi2b"], p["bi2b"] = linear(keys[6], 4 * c, c)
    p["wo2a"], p["bo2a"] = linear(keys[7], c, 4 * c)    # out_layer2 (hidden = 4C)
    p["wo2b"], p["bo2b"] = linear(keys[8], 4 * c, c)
    return p


def _fold_linear(wa, ba, wb, bb):
    # (x @ wa + ba) @ wb + bb  ==  x @ (wa @ wb) + (ba @ wb + bb)
    # TODO(synk): only valid because TwoLayerNN is assumed activation-free.
    return wa @ wb, ba @ wb + bb


def _round_up(x, m):
    return (x + m - 1) // m * m


def _pad_to(a, shape):
    return jnp.pad(a, [(0, t - s) for s, t in zip(a.shape, shape)])


def _tpu_generation():
    try:
        kind = jax.devices()[0].device_kind.lower()
    except Exception:
        return None
    if "v7" in kind or "7x" in kind:
        return 7
    if "v6" in kind:
        return 6
    if "v5" in kind and ("lite" in kind or "5e" in kind):
        return 5
    return None


def _choose_batch_tile(batch, n_pad, target_rows, max_tile_rows, require_grid2):
    """Pick a divisor of `batch`: fill the MXU rows, stay inside the VMEM
    budget, and (on v7x) keep >= 2 grid steps for the two TensorCores."""
    divs = [d for d in range(1, batch + 1) if batch % d == 0]
    if require_grid2 and batch >= 2:
        two = [d for d in divs if batch // d >= 2]
        if two:
            divs = two
    fits = [d for d in divs if d * n_pad <= max_tile_rows] or divs[:1]
    for d in fits:
        if d * n_pad >= target_rows:
            return d
    return fits[-1]


def vig_block(x, params, num_edges=9):
    B, N, C = x.shape
    if not (1 <= num_edges <= N):
        raise ValueError(f"num_edges={num_edges} must be in [1, N={N}]")

    # ---- fold the four TwoLayerNN stacks; conv already split into fce/fco ----
    w1, b1 = _fold_linear(params["w1a"], params["b1a"], params["w1b"], params["b1b"])
    wo1, bo1 = _fold_linear(params["wo1a"], params["bo1a"], params["wo1b"], params["bo1b"])
    wi2, bi2 = _fold_linear(params["wi2a"], params["bi2a"], params["wi2b"], params["bi2b"])
    wo2, bo2 = _fold_linear(params["wo2a"], params["bo2a"], params["wo2b"], params["bo2b"])
    fce, fco, fcb = params["fce"], params["fco"], params["fcb"]

    # ---- pad to TPU-friendly shapes (zero padding is exact for this block) ----
    Np = _round_up(N, 8)        # sublane granularity
    Cp = _round_up(C, 128)      # lane-dense loads/stores, full MXU K/N
    xp = jnp.pad(x, ((0, 0), (0, Np - N), (0, Cp - C)))

    weight_args = []
    for a, is_bias in ((w1, False), (b1, True), (fce, False), (fco, False),
                       (fcb, True), (wo1, False), (bo1, True),
                       (wi2, False), (bi2, True), (wo2, False), (bo2, True)):
        a = _pad_to(a, (1, Cp) if is_bias else (Cp, Cp))
        weight_args.append(a.astype(jnp.float32 if is_bias else jnp.bfloat16))

    # ---- generation-aware tiling / VMEM budget ----
    gen = _tpu_generation()
    vmem_cap = (48 << 20) if gen == 7 else ((96 << 20) if gen in (5, 6) else (64 << 20))
    target_rows = 128 if gen == 5 else 256
    per_row_bytes = 48 * Cp + 24 * Np          # live f32 activations + graph temps
    max_tile_rows = max(Np, (vmem_cap // 2) // per_row_bytes)
    Bt = _choose_batch_tile(B, Np, target_rows, max_tile_rows,
                            require_grid2=(gen == 7))
    G = B // Bt
    xg = xp.reshape(G, Bt * Np, Cp)            # fuse Bt batches of matmul rows

    weight_bytes = sum(int(a.size) * a.dtype.itemsize for a in weight_args)
    block_bytes = Bt * Np * Cp * 4
    graph_bytes = Bt * Np * Np * 4
    needed = 14 * block_bytes + 2 * weight_bytes + 5 * graph_bytes
    vmem_limit = int(min(vmem_cap, max(32 << 20, 2 * needed)))

    # Constant block index -> each weight tile is DMA'd into VMEM once and
    # reused for every grid step (no per-step re-fetch).
    w_specs = [pl.BlockSpec(a.shape, lambda g, nd=a.ndim: (0,) * nd)
               for a in weight_args]
    in_specs = [pl.BlockSpec((1, Bt * Np, Cp), lambda g: (g, 0, 0))] + w_specs
    out_specs = pl.BlockSpec((1, Bt * Np, Cp), lambda g: (g, 0, 0))

    rows = B * Np
    cost = pl.CostEstimate(
        flops=int(2 * rows * Cp * Cp * 6                       # 6 dense (Cp,Cp) matmuls/row
                  + 2 * B * Np * Np * Cp * (1 + num_edges)),   # sim + k one-hot gathers
        transcendentals=int(2 * rows * Cp),                    # two C-wide GELUs
        bytes_accessed=int(2 * rows * Cp * 4 + weight_bytes))

    kernel = functools.partial(_vig_kernel, num_edges, Bt, Np, N, Cp)
    out = pl.pallas_call(
        kernel,
        out_shape=jax.ShapeDtypeStruct((G, Bt * Np, Cp), x.dtype),
        grid_spec=pltpu.PrefetchScalarGridSpec(
            num_scalar_prefetch=0,
            grid=(G,),
            in_specs=in_specs,
            out_specs=out_specs),
        compiler_params=pltpu.CompilerParams(
            dimension_semantics=("parallel",),
            vmem_limit_bytes=vmem_limit),
        cost_estimate=cost,
    )(xg, *weight_args)
    return out.reshape(B, Np, Cp)[:, :N, :C]


if __name__ == "__main__":
    B, N, C = 2, 16, 32        # num_edges=9 requires N >= 9
    key = jax.random.PRNGKey(0)
    kx, kp = jax.random.split(key)
    x = jax.random.normal(kx, (B, N, C), dtype=jnp.float32)
    params = init_params(kp, C)

    out = vig_block(x, params, num_edges=9)
    out = jax.block_until_ready(out)
    assert out.shape == (B, N, C) and out.dtype == jnp.float32
    assert bool(jnp.all(jnp.isfinite(out)))
    print("KERNEL_OK")
</pallas_src>

<mosaic_0001>
module attributes {stable_mosaic.version = 11 : i64} {
  func.func @_vig_kernel(%arg0: i32, %arg1: memref<1x32x128xf32, #tpu.memory_space<vmem>>, %arg2: memref<128x128xbf16, #tpu.memory_space<vmem>>, %arg3: memref<1x128xf32, #tpu.memory_space<vmem>>, %arg4: memref<128x128xbf16, #tpu.memory_space<vmem>>, %arg5: memref<128x128xbf16, #tpu.memory_space<vmem>>, %arg6: memref<1x128xf32, #tpu.memory_space<vmem>>, %arg7: memref<128x128xbf16, #tpu.memory_space<vmem>>, %arg8: memref<1x128xf32, #tpu.memory_space<vmem>>, %arg9: memref<128x128xbf16, #tpu.memory_space<vmem>>, %arg10: memref<1x128xf32, #tpu.memory_space<vmem>>, %arg11: memref<128x128xbf16, #tpu.memory_space<vmem>>, %arg12: memref<1x128xf32, #tpu.memory_space<vmem>>, %arg13: memref<1x32x128xf32, #tpu.memory_space<vmem>>) attributes {dimension_semantics = [#tpu.dimension_semantics<parallel>], iteration_bounds = array<i64: 1>, scalar_prefetch = 0 : i64, scratch_operands = 0 : i64, tpu.core_type = #tpu.core_type<tc>, window_params = [{transform_indices = @transform_0, window_bounds = array<i64: 1, 32, 128>}, {pipeline_mode = #tpu.pipeline_mode<synchronous>, transform_indices = @transform_1, window_bounds = array<i64: 128, 128>}, {pipeline_mode = #tpu.pipeline_mode<synchronous>, transform_indices = @transform_2, window_bounds = array<i64: 1, 128>}, {pipeline_mode = #tpu.pipeline_mode<synchronous>, transform_indices = @transform_3, window_bounds = array<i64: 128, 128>}, {pipeline_mode = #tpu.pipeline_mode<synchronous>, transform_indices = @transform_4, window_bounds = array<i64: 128, 128>}, {pipeline_mode = #tpu.pipeline_mode<synchronous>, transform_indices = @transform_5, window_bounds = array<i64: 1, 128>}, {pipeline_mode = #tpu.pipeline_mode<synchronous>, transform_indices = @transform_6, window_bounds = array<i64: 128, 128>}, {pipeline_mode = #tpu.pipeline_mode<synchronous>, transform_indices = @transform_7, window_bounds = array<i64: 1, 128>}, {pipeline_mode = #tpu.pipeline_mode<synchronous>, transform_indices = @transform_8, window_bounds = array<i64: 128, 128>}, {pipeline_mode = #tpu.pipeline_mode<synchronous>, transform_indices = @transform_9, window_bounds = array<i64: 1, 128>}, {pipeline_mode = #tpu.pipeline_mode<synchronous>, transform_indices = @transform_10, window_bounds = array<i64: 128, 128>}, {pipeline_mode = #tpu.pipeline_mode<synchronous>, transform_indices = @transform_11, window_bounds = array<i64: 1, 128>}, {transform_indices = @transform_12, window_bounds = array<i64: 1, 32, 128>}]} {
    %c0 = arith.constant 0 : index
    %c0_0 = arith.constant 0 : index
    %c0_1 = arith.constant 0 : index
    %0 = vector.load %arg1[%c0, %c0_0, %c0_1] : memref<1x32x128xf32, #tpu.memory_space<vmem>>, vector<1x32x128xf32>
    %1 = vector.shape_cast %0 : vector<1x32x128xf32> to vector<32x128xf32>
    %2 = vector.shape_cast %1 : vector<32x128xf32> to vector<2x16x128xf32>
    %3 = arith.truncf %1 : vector<32x128xf32> to vector<32x128xbf16>
    %c0_2 = arith.constant 0 : index
    %c0_3 = arith.constant 0 : index
    %4 = vector.load %arg2[%c0_2, %c0_3] : memref<128x128xbf16, #tpu.memory_space<vmem>>, vector<128x128xbf16>
    %cst = arith.constant dense<0.000000e+00> : vector<32x128xf32>
    %5 = tpu.matmul %3, %4, %cst {dimension_numbers = #tpu.dot_dimension_numbers<[1], [0], [0], [1], [0, 0, 1, 1], [], []>} : vector<32x128xbf16>, vector<128x128xbf16>, vector<32x128xf32> -> vector<32x128xf32>
    %c0_4 = arith.constant 0 : index
    %c0_5 = arith.constant 0 : index
    %6 = vector.load %arg3[%c0_4, %c0_5] : memref<1x128xf32, #tpu.memory_space<vmem>>, vector<1x128xf32>
    %7 = vector.broadcast %6 : vector<1x128xf32> to vector<32x128xf32>
    %8 = arith.addf %5, %7 : vector<32x128xf32>
    %9 = arith.truncf %8 : vector<32x128xf32> to vector<32x128xbf16>
    %10 = vector.shape_cast %8 : vector<32x128xf32> to vector<2x16x128xf32>
    %11 = vector.shape_cast %9 : vector<32x128xbf16> to vector<2x16x128xbf16>
    %12 = arith.truncf %2 : vector<2x16x128xf32> to vector<2x16x128xbf16>
    "tpu.trace_start"() <{level = 10 : i32, message = "bnc,bmc->bnm"}> : () -> ()
    %cst_6 = arith.constant dense<0.000000e+00> : vector<2x16x16xf32>
    %13 = tpu.matmul %12, %12, %cst_6 {dimension_numbers = #tpu.dot_dimension_numbers<[2], [2], [1], [1], [0, 0, 0, 1, 1, 1], [0], [0]>} : vector<2x16x128xbf16>, vector<2x16x128xbf16>, vector<2x16x16xf32> -> vector<2x16x16xf32>
    "tpu.trace_stop"() : () -> ()
    %14 = tpu.iota {dimensions = array<i32: 1>} : vector<16x16xi32>
    %cst_7 = arith.constant dense<0xFF800000> : vector<2x16xf32>
    %15 = vector.multi_reduction <maximumf>, %13, %cst_7 [2] : vector<2x16x16xf32> to vector<2x16xf32>
    %16 = vector.shape_cast %15 : vector<2x16xf32> to vector<2x16x1xf32>
    %17 = vector.broadcast %16 : vector<2x16x1xf32> to vector<2x16x16xf32>
    %18 = arith.cmpf oeq, %13, %17 : vector<2x16x16xf32>
    %c16_i32 = arith.constant 16 : i32
    %19 = vector.shape_cast %14 : vector<16x16xi32> to vector<1x16x16xi32>
    %20 = vector.broadcast %19 : vector<1x16x16xi32> to vector<2x16x16xi32>
    %21 = vector.broadcast %c16_i32 : i32 to vector<2x16x16xi32>
    %22 = arith.select %18, %20, %21 : vector<2x16x16xi1>, vector<2x16x16xi32>
    %cst_8 = arith.constant dense<2147483647> : vector<2x16xi32>
    %23 = vector.multi_reduction <minsi>, %22, %cst_8 [2] : vector<2x16x16xi32> to vector<2x16xi32>
    %24 = vector.shape_cast %23 : vector<2x16xi32> to vector<2x16x1xi32>
    %25 = vector.shape_cast %14 : vector<16x16xi32> to vector<1x16x16xi32>
    %26 = vector.broadcast %25 : vector<1x16x16xi32> to vector<2x16x16xi32>
    %27 = vector.broadcast %24 : vector<2x16x1xi32> to vector<2x16x16xi32>
    %28 = arith.cmpi eq, %26, %27 : vector<2x16x16xi32>
    %cst_9 = arith.constant 1.000000e+00 : f32
    %cst_10 = arith.constant 0.000000e+00 : f32
    %29 = vector.broadcast %cst_9 : f32 to vector<2x16x16xf32>
    %30 = vector.broadcast %cst_10 : f32 to vector<2x16x16xf32>
    %31 = arith.select %28, %29, %30 : vector<2x16x16xi1>, vector<2x16x16xf32>
    %32 = arith.truncf %31 : vector<2x16x16xf32> to vector<2x16x16xbf16>
    "tpu.trace_start"() <{level = 10 : i32, message = "bnm,bmc->bnc"}> : () -> ()
    %cst_11 = arith.constant dense<0.000000e+00> : vector<2x16x128xf32>
    %33 = tpu.matmul %32, %11, %cst_11 {dimension_numbers = #tpu.dot_dimension_numbers<[2], [1], [1], [2], [0, 0, 0, 1, 1, 2], [0], [0]>} : vector<2x16x16xbf16>, vector<2x16x128xbf16>, vector<2x16x128xf32> -> vector<2x16x128xf32>
    %cst_12 = arith.constant 0xFF800000 : f32
    "tpu.trace_stop"() : () -> ()
    %34 = vector.broadcast %cst_12 : f32 to vector<2x16x16xf32>
    %35 = arith.select %28, %34, %13 : vector<2x16x16xi1>, vector<2x16x16xf32>
    %cst_13 = arith.constant dense<0xFF800000> : vector<2x16xf32>
    %36 = vector.multi_reduction <maximumf>, %35, %cst_13 [2] : vector<2x16x16xf32> to vector<2x16xf32>
    %37 = vector.shape_cast %36 : vector<2x16xf32> to vector<2x16x1xf32>
    %38 = vector.broadcast %37 : vector<2x16x1xf32> to vector<2x16x16xf32>
    %39 = arith.cmpf oeq, %35, %38 : vector<2x16x16xf32>
    %c16_i32_14 = arith.constant 16 : i32
    %40 = vector.shape_cast %14 : vector<16x16xi32> to vector<1x16x16xi32>
    %41 = vector.broadcast %40 : vector<1x16x16xi32> to vector<2x16x16xi32>
    %42 = vector.broadcast %c16_i32_14 : i32 to vector<2x16x16xi32>
    %43 = arith.select %39, %41, %42 : vector<2x16x16xi1>, vector<2x16x16xi32>
    %cst_15 = arith.constant dense<2147483647> : vector<2x16xi32>
    %44 = vector.multi_reduction <minsi>, %43, %cst_15 [2] : vector<2x16x16xi32> to vector<2x16xi32>
    %45 = vector.shape_cast %44 : vector<2x16xi32> to vector<2x16x1xi32>
    %46 = vector.shape_cast %14 : vector<16x16xi32> to vector<1x16x16xi32>
    %47 = vector.broadcast %46 : vector<1x16x16xi32> to vector<2x16x16xi32>
    %48 = vector.broadcast %45 : vector<2x16x1xi32> to vector<2x16x16xi32>
    %49 = arith.cmpi eq, %47, %48 : vector<2x16x16xi32>
    %cst_16 = arith.constant 1.000000e+00 : f32
    %cst_17 = arith.constant 0.000000e+00 : f32
    %50 = vector.broadcast %cst_16 : f32 to vector<2x16x16xf32>
    %51 = vector.broadcast %cst_17 : f32 to vector<2x16x16xf32>
    %52 = arith.select %49, %50, %51 : vector<2x16x16xi1>, vector<2x16x16xf32>
    %53 = arith.truncf %52 : vector<2x16x16xf32> to vector<2x16x16xbf16>
    "tpu.trace_start"() <{level = 10 : i32, message = "bnm,bmc->bnc"}> : () -> ()
    %cst_18 = arith.constant dense<0.000000e+00> : vector<2x16x128xf32>
    %54 = tpu.matmul %53, %11, %cst_18 {dimension_numbers = #tpu.dot_dimension_numbers<[2], [1], [1], [2], [0, 0, 0, 1, 1, 2], [0], [0]>} : vector<2x16x16xbf16>, vector<2x16x128xbf16>, vector<2x16x128xf32> -> vector<2x16x128xf32>
    "tpu.trace_stop"() : () -> ()
    %55 = arith.maximumf %33, %54 : vector<2x16x128xf32>
    %cst_19 = arith.constant 0xFF800000 : f32
    %56 = vector.broadcast %cst_19 : f32 to vector<2x16x16xf32>
    %57 = arith.select %49, %56, %35 : vector<2x16x16xi1>, vector<2x16x16xf32>
    %cst_20 = arith.constant dense<0xFF800000> : vector<2x16xf32>
    %58 = vector.multi_reduction <maximumf>, %57, %cst_20 [2] : vector<2x16x16xf32> to vector<2x16xf32>
    %59 = vector.shape_cast %58 : vector<2x16xf32> to vector<2x16x1xf32>
    %60 = vector.broadcast %59 : vector<2x16x1xf32> to vector<2x16x16xf32>
    %61 = arith.cmpf oeq, %57, %60 : vector<2x16x16xf32>
    %c16_i32_21 = arith.constant 16 : i32
    %62 = vector.shape_cast %14 : vector<16x16xi32> to vector<1x16x16xi32>
    %63 = vector.broadcast %62 : vector<1x16x16xi32> to vector<2x16x16xi32>
    %64 = vector.broadcast %c16_i32_21 : i32 to vector<2x16x16xi32>
    %65 = arith.select %61, %63, %64 : vector<2x16x16xi1>, vector<2x16x16xi32>
    %cst_22 = arith.constant dense<2147483647> : vector<2x16xi32>
    %66 = vector.multi_reduction <minsi>, %65, %cst_22 [2] : vector<2x16x16xi32> to vector<2x16xi32>
    %67 = vector.shape_cast %66 : vector<2x16xi32> to vector<2x16x1xi32>
    %68 = vector.shape_cast %14 : vector<16x16xi32> to vector<1x16x16xi32>
    %69 = vector.broadcast %68 : vector<1x16x16xi32> to vector<2x16x16xi32>
    %70 = vector.broadcast %67 : vector<2x16x1xi32> to vector<2x16x16xi32>
    %71 = arith.cmpi eq, %69, %70 : vector<2x16x16xi32>
    %cst_23 = arith.constant 1.000000e+00 : f32
    %cst_24 = arith.constant 0.000000e+00 : f32
    %72 = vector.broadcast %cst_23 : f32 to vector<2x16x16xf32>
    %73 = vector.broadcast %cst_24 : f32 to vector<2x16x16xf32>
    %74 = arith.select %71, %72, %73 : vector<2x16x16xi1>, vector<2x16x16xf32>
    %75 = arith.truncf %74 : vector<2x16x16xf32> to vector<2x16x16xbf16>
    "tpu.trace_start"() <{level = 10 : i32, message = "bnm,bmc->bnc"}> : () -> ()
    %cst_25 = arith.constant dense<0.000000e+00> : vector<2x16x128xf32>
    %76 = tpu.matmul %75, %11, %cst_25 {dimension_numbers = #tpu.dot_dimension_numbers<[2], [1], [1], [2], [0, 0, 0, 1, 1, 2], [0], [0]>} : vector<2x16x16xbf16>, vector<2x16x128xbf16>, vector<2x16x128xf32> -> vector<2x16x128xf32>
    "tpu.trace_stop"() : () -> ()
    %77 = arith.maximumf %55, %76 : vector<2x16x128xf32>
    %cst_26 = arith.constant 0xFF800000 : f32
    %78 = vector.broadcast %cst_26 : f32 to vector<2x16x16xf32>
    %79 = arith.select %71, %78, %57 : vector<2x16x16xi1>, vector<2x16x16xf32>
    %cst_27 = arith.constant dense<0xFF800000> : vector<2x16xf32>
    %80 = vector.multi_reduction <maximumf>, %79, %cst_27 [2] : vector<2x16x16xf32> to vector<2x16xf32>
    %81 = vector.shape_cast %80 : vector<2x16xf32> to vector<2x16x1xf32>
    %82 = vector.broadcast %81 : vector<2x16x1xf32> to vector<2x16x16xf32>
    %83 = arith.cmpf oeq, %79, %82 : vector<2x16x16xf32>
    %c16_i32_28 = arith.constant 16 : i32
    %84 = vector.shape_cast %14 : vector<16x16xi32> to vector<1x16x16xi32>
    %85 = vector.broadcast %84 : vector<1x16x16xi32> to vector<2x16x16xi32>
    %86 = vector.broadcast %c16_i32_28 : i32 to vector<2x16x16xi32>
    %87 = arith.select %83, %85, %86 : vector<2x16x16xi1>, vector<2x16x16xi32>
    %cst_29 = arith.constant dense<2147483647> : vector<2x16xi32>
    %88 = vector.multi_reduction <minsi>, %87, %cst_29 [2] : vector<2x16x16xi32> to vector<2x16xi32>
    %89 = vector.shape_cast %88 : vector<2x16xi32> to vector<2x16x1xi32>
    %90 = vector.shape_cast %14 : vector<16x16xi32> to vector<1x16x16xi32>
    %91 = vector.broadcast %90 : vector<1x16x16xi32> to vector<2x16x16xi32>
    %92 = vector.broadcast %89 : vector<2x16x1xi32> to vector<2x16x16xi32>
    %93 = arith.cmpi eq, %91, %92 : vector<2x16x16xi32>
    %cst_30 = arith.constant 1.000000e+00 : f32
    %cst_31 = arith.constant 0.000000e+00 : f32
    %94 = vector.broadcast %cst_30 : f32 to vector<2x16x16xf32>
    %95 = vector.broadcast %cst_31 : f32 to vector<2x16x16xf32>
    %96 = arith.select %93, %94, %95 : vector<2x16x16xi1>, vector<2x16x16xf32>
    %97 = arith.truncf %96 : vector<2x16x16xf32> to vector<2x16x16xbf16>
    "tpu.trace_start"() <{level = 10 : i32, message = "bnm,bmc->bnc"}> : () -> ()
    %cst_32 = arith.constant dense<0.000000e+00> : vector<2x16x128xf32>
    %98 = tpu.matmul %97, %11, %cst_32 {dimension_numbers = #tpu.dot_dimension_numbers<[2], [1], [1], [2], [0, 0, 0, 1, 1, 2], [0], [0]>} : vector<2x16x16xbf16>, vector<2x16x128xbf16>, vector<2x16x128xf32> -> vector<2x16x128xf32>
    "tpu.trace_stop"() : () -> ()
    %99 = arith.maximumf %77, %98 : vector<2x16x128xf32>
    %cst_33 = arith.constant 0xFF800000 : f32
    %100 = vector.broadcast %cst_33 : f32 to vector<2x16x16xf32>
    %101 = arith.select %93, %100, %79 : vector<2x16x16xi1>, vector<2x16x16xf32>
    %cst_34 = arith.constant dense<0xFF800000> : vector<2x16xf32>
    %102 = vector.multi_reduction <maximumf>, %101, %cst_34 [2] : vector<2x16x16xf32> to vector<2x16xf32>
    %103 = vector.shape_cast %102 : vector<2x16xf32> to vector<2x16x1xf32>
    %104 = vector.broadcast %103 : vector<2x16x1xf32> to vector<2x16x16xf32>
    %105 = arith.cmpf oeq, %101, %104 : vector<2x16x16xf32>
    %c16_i32_35 = arith.constant 16 : i32
    %106 = vector.shape_cast %14 : vector<16x16xi32> to vector<1x16x16xi32>
    %107 = vector.broadcast %106 : vector<1x16x16xi32> to vector<2x16x16xi32>
    %108 = vector.broadcast %c16_i32_35 : i32 to vector<2x16x16xi32>
    %109 = arith.select %105, %107, %108 : vector<2x16x16xi1>, vector<2x16x16xi32>
    %cst_36 = arith.constant dense<2147483647> : vector<2x16xi32>
    %110 = vector.multi_reduction <minsi>, %109, %cst_36 [2] : vector<2x16x16xi32> to vector<2x16xi32>
    %111 = vector.shape_cast %110 : vector<2x16xi32> to vector<2x16x1xi32>
    %112 = vector.shape_cast %14 : vector<16x16xi32> to vector<1x16x16xi32>
    %113 = vector.broadcast %112 : vector<1x16x16xi32> to vector<2x16x16xi32>
    %114 = vector.broadcast %111 : vector<2x16x1xi32> to vector<2x16x16xi32>
    %115 = arith.cmpi eq, %113, %114 : vector<2x16x16xi32>
    %cst_37 = arith.constant 1.000000e+00 : f32
    %cst_38 = arith.constant 0.000000e+00 : f32
    %116 = vector.broadcast %cst_37 : f32 to vector<2x16x16xf32>
    %117 = vector.broadcast %cst_38 : f32 to vector<2x16x16xf32>
    %118 = arith.select %115, %116, %117 : vector<2x16x16xi1>, vector<2x16x16xf32>
    %119 = arith.truncf %118 : vector<2x16x16xf32> to vector<2x16x16xbf16>
    "tpu.trace_start"() <{level = 10 : i32, message = "bnm,bmc->bnc"}> : () -> ()
    %cst_39 = arith.constant dense<0.000000e+00> : vector<2x16x128xf32>
    %120 = tpu.matmul %119, %11, %cst_39 {dimension_numbers = #tpu.dot_dimension_numbers<[2], [1], [1], [2], [0, 0, 0, 1, 1, 2], [0], [0]>} : vector<2x16x16xbf16>, vector<2x16x128xbf16>, vector<2x16x128xf32> -> vector<2x16x128xf32>
    "tpu.trace_stop"() : () -> ()
    %121 = arith.maximumf %99, %120 : vector<2x16x128xf32>
    %cst_40 = arith.constant 0xFF800000 : f32
    %122 = vector.broadcast %cst_40 : f32 to vector<2x16x16xf32>
    %123 = arith.select %115, %122, %101 : vector<2x16x16xi1>, vector<2x16x16xf32>
    %cst_41 = arith.constant dense<0xFF800000> : vector<2x16xf32>
    %124 = vector.multi_reduction <maximumf>, %123, %cst_41 [2] : vector<2x16x16xf32> to vector<2x16xf32>
    %125 = vector.shape_cast %124 : vector<2x16xf32> to vector<2x16x1xf32>
    %126 = vector.broadcast %125 : vector<2x16x1xf32> to vector<2x16x16xf32>
    %127 = arith.cmpf oeq, %123, %126 : vector<2x16x16xf32>
    %c16_i32_42 = arith.constant 16 : i32
    %128 = vector.shape_cast %14 : vector<16x16xi32> to vector<1x16x16xi32>
    %129 = vector.broadcast %128 : vector<1x16x16xi32> to vector<2x16x16xi32>
    %130 = vector.broadcast %c16_i32_42 : i32 to vector<2x16x16xi32>
    %131 = arith.select %127, %129, %130 : vector<2x16x16xi1>, vector<2x16x16xi32>
    %cst_43 = arith.constant dense<2147483647> : vector<2x16xi32>
    %132 = vector.multi_reduction <minsi>, %131, %cst_43 [2] : vector<2x16x16xi32> to vector<2x16xi32>
    %133 = vector.shape_cast %132 : vector<2x16xi32> to vector<2x16x1xi32>
    %134 = vector.shape_cast %14 : vector<16x16xi32> to vector<1x16x16xi32>
    %135 = vector.broadcast %134 : vector<1x16x16xi32> to vector<2x16x16xi32>
    %136 = vector.broadcast %133 : vector<2x16x1xi32> to vector<2x16x16xi32>
    %137 = arith.cmpi eq, %135, %136 : vector<2x16x16xi32>
    %cst_44 = arith.constant 1.000000e+00 : f32
    %cst_45 = arith.constant 0.000000e+00 : f32
    %138 = vector.broadcast %cst_44 : f32 to vector<2x16x16xf32>
    %139 = vector.broadcast %cst_45 : f32 to vector<2x16x16xf32>
    %140 = arith.select %137, %138, %139 : vector<2x16x16xi1>, vector<2x16x16xf32>
    %141 = arith.truncf %140 : vector<2x16x16xf32> to vector<2x16x16xbf16>
    "tpu.trace_start"() <{level = 10 : i32, message = "bnm,bmc->bnc"}> : () -> ()
    %cst_46 = arith.constant dense<0.000000e+00> : vector<2x16x128xf32>
    %142 = tpu.matmul %141, %11, %cst_46 {dimension_numbers = #tpu.dot_dimension_numbers<[2], [1], [1], [2], [0, 0, 0, 1, 1, 2], [0], [0]>} : vector<2x16x16xbf16>, vector<2x16x128xbf16>, vector<2x16x128xf32> -> vector<2x16x128xf32>
    "tpu.trace_stop"() : () -> ()
    %143 = arith.maximumf %121, %142 : vector<2x16x128xf32>
    %cst_47 = arith.constant 0xFF800000 : f32
    %144 = vector.broadcast %cst_47 : f32 to vector<2x16x16xf32>
    %145 = arith.select %137, %144, %123 : vector<2x16x16xi1>, vector<2x16x16xf32>
    %cst_48 = arith.constant dense<0xFF800000> : vector<2x16xf32>
    %146 = vector.multi_reduction <maximumf>, %145, %cst_48 [2] : vector<2x16x16xf32> to vector<2x16xf32>
    %147 = vector.shape_cast %146 : vector<2x16xf32> to vector<2x16x1xf32>
    %148 = vector.broadcast %147 : vector<2x16x1xf32> to vector<2x16x16xf32>
    %149 = arith.cmpf oeq, %145, %148 : vector<2x16x16xf32>
    %c16_i32_49 = arith.constant 16 : i32
    %150 = vector.shape_cast %14 : vector<16x16xi32> to vector<1x16x16xi32>
    %151 = vector.broadcast %150 : vector<1x16x16xi32> to vector<2x16x16xi32>
    %152 = vector.broadcast %c16_i32_49 : i32 to vector<2x16x16xi32>
    %153 = arith.select %149, %151, %152 : vector<2x16x16xi1>, vector<2x16x16xi32>
    %cst_50 = arith.constant dense<2147483647> : vector<2x16xi32>
    %154 = vector.multi_reduction <minsi>, %153, %cst_50 [2] : vector<2x16x16xi32> to vector<2x16xi32>
    %155 = vector.shape_cast %154 : vector<2x16xi32> to vector<2x16x1xi32>
    %156 = vector.shape_cast %14 : vector<16x16xi32> to vector<1x16x16xi32>
    %157 = vector.broadcast %156 : vector<1x16x16xi32> to vector<2x16x16xi32>
    %158 = vector.broadcast %155 : vector<2x16x1xi32> to vector<2x16x16xi32>
    %159 = arith.cmpi eq, %157, %158 : vector<2x16x16xi32>
    %cst_51 = arith.constant 1.000000e+00 : f32
    %cst_52 = arith.constant 0.000000e+00 : f32
    %160 = vector.broadcast %cst_51 : f32 to vector<2x16x16xf32>
    %161 = vector.broadcast %cst_52 : f32 to vector<2x16x16xf32>
    %162 = arith.select %159, %160, %161 : vector<2x16x16xi1>, vector<2x16x16xf32>
    %163 = arith.truncf %162 : vector<2x16x16xf32> to vector<2x16x16xbf16>
    "tpu.trace_start"() <{level = 10 : i32, message = "bnm,bmc->bnc"}> : () -> ()
    %cst_53 = arith.constant dense<0.000000e+00> : vector<2x16x128xf32>
    %164 = tpu.matmul %163, %11, %cst_53 {dimension_numbers = #tpu.dot_dimension_numbers<[2], [1], [1], [2], [0, 0, 0, 1, 1, 2], [0], [0]>} : vector<2x16x16xbf16>, vector<2x16x128xbf16>, vector<2x16x128xf32> -> vector<2x16x128xf32>
    "tpu.trace_stop"() : () -> ()
    %165 = arith.maximumf %143, %164 : vector<2x16x128xf32>
    %cst_54 = arith.constant 0xFF800000 : f32
    %166 = vector.broadcast %cst_54 : f32 to vector<2x16x16xf32>
    %167 = arith.select %159, %166, %145 : vector<2x16x16xi1>, vector<2x16x16xf32>
    %cst_55 = arith.constant dense<0xFF800000> : vector<2x16xf32>
    %168 = vector.multi_reduction <maximumf>, %167, %cst_55 [2] : vector<2x16x16xf32> to vector<2x16xf32>
    %169 = vector.shape_cast %168 : vector<2x16xf32> to vector<2x16x1xf32>
    %170 = vector.broadcast %169 : vector<2x16x1xf32> to vector<2x16x16xf32>
    %171 = arith.cmpf oeq, %167, %170 : vector<2x16x16xf32>
    %c16_i32_56 = arith.constant 16 : i32
    %172 = vector.shape_cast %14 : vector<16x16xi32> to vector<1x16x16xi32>
    %173 = vector.broadcast %172 : vector<1x16x16xi32> to vector<2x16x16xi32>
    %174 = vector.broadcast %c16_i32_56 : i32 to vector<2x16x16xi32>
    %175 = arith.select %171, %173, %174 : vector<2x16x16xi1>, vector<2x16x16xi32>
    %cst_57 = arith.constant dense<2147483647> : vector<2x16xi32>
    %176 = vector.multi_reduction <minsi>, %175, %cst_57 [2] : vector<2x16x16xi32> to vector<2x16xi32>
    %177 = vector.shape_cast %176 : vector<2x16xi32> to vector<2x16x1xi32>
    %178 = vector.shape_cast %14 : vector<16x16xi32> to vector<1x16x16xi32>
    %179 = vector.broadcast %178 : vector<1x16x16xi32> to vector<2x16x16xi32>
    %180 = vector.broadcast %177 : vector<2x16x1xi32> to vector<2x16x16xi32>
    %181 = arith.cmpi eq, %179, %180 : vector<2x16x16xi32>
    %cst_58 = arith.constant 1.000000e+00 : f32
    %cst_59 = arith.constant 0.000000e+00 : f32
    %182 = vector.broadcast %cst_58 : f32 to vector<2x16x16xf32>
    %183 = vector.broadcast %cst_59 : f32 to vector<2x16x16xf32>
    %184 = arith.select %181, %182, %183 : vector<2x16x16xi1>, vector<2x16x16xf32>
    %185 = arith.truncf %184 : vector<2x16x16xf32> to vector<2x16x16xbf16>
    "tpu.trace_start"() <{level = 10 : i32, message = "bnm,bmc->bnc"}> : () -> ()
    %cst_60 = arith.constant dense<0.000000e+00> : vector<2x16x128xf32>
    %186 = tpu.matmul %185, %11, %cst_60 {dimension_numbers = #tpu.dot_dimension_numbers<[2], [1], [1], [2], [0, 0, 0, 1, 1, 2], [0], [0]>} : vector<2x16x16xbf16>, vector<2x16x128xbf16>, vector<2x16x128xf32> -> vector<2x16x128xf32>
    "tpu.trace_stop"() : () -> ()
    %187 = arith.maximumf %165, %186 : vector<2x16x128xf32>
    %cst_61 = arith.constant 0xFF800000 : f32
    %188 = vector.broadcast %cst_61 : f32 to vector<2x16x16xf32>
    %189 = arith.select %181, %188, %167 : vector<2x16x16xi1>, vector<2x16x16xf32>
    %cst_62 = arith.constant dense<0xFF800000> : vector<2x16xf32>
    %190 = vector.multi_reduction <maximumf>, %189, %cst_62 [2] : vector<2x16x16xf32> to vector<2x16xf32>
    %191 = vector.shape_cast %190 : vector<2x16xf32> to vector<2x16x1xf32>
    %192 = vector.broadcast %191 : vector<2x16x1xf32> to vector<2x16x16xf32>
    %193 = arith.cmpf oeq, %189, %192 : vector<2x16x16xf32>
    %c16_i32_63 = arith.constant 16 : i32
    %194 = vector.shape_cast %14 : vector<16x16xi32> to vector<1x16x16xi32>
    %195 = vector.broadcast %194 : vector<1x16x16xi32> to vector<2x16x16xi32>
    %196 = vector.broadcast %c16_i32_63 : i32 to vector<2x16x16xi32>
    %197 = arith.select %193, %195, %196 : vector<2x16x16xi1>, vector<2x16x16xi32>
    %cst_64 = arith.constant dense<2147483647> : vector<2x16xi32>
    %198 = vector.multi_reduction <minsi>, %197, %cst_64 [2] : vector<2x16x16xi32> to vector<2x16xi32>
    %199 = vector.shape_cast %198 : vector<2x16xi32> to vector<2x16x1xi32>
    %200 = vector.shape_cast %14 : vector<16x16xi32> to vector<1x16x16xi32>
    %201 = vector.broadcast %200 : vector<1x16x16xi32> to vector<2x16x16xi32>
    %202 = vector.broadcast %199 : vector<2x16x1xi32> to vector<2x16x16xi32>
    %203 = arith.cmpi eq, %201, %202 : vector<2x16x16xi32>
    %cst_65 = arith.constant 1.000000e+00 : f32
    %cst_66 = arith.constant 0.000000e+00 : f32
    %204 = vector.broadcast %cst_65 : f32 to vector<2x16x16xf32>
    %205 = vector.broadcast %cst_66 : f32 to vector<2x16x16xf32>
    %206 = arith.select %203, %204, %205 : vector<2x16x16xi1>, vector<2x16x16xf32>
    %207 = arith.truncf %206 : vector<2x16x16xf32> to vector<2x16x16xbf16>
    "tpu.trace_start"() <{level = 10 : i32, message = "bnm,bmc->bnc"}> : () -> ()
    %cst_67 = arith.constant dense<0.000000e+00> : vector<2x16x128xf32>
    %208 = tpu.matmul %207, %11, %cst_67 {dimension_numbers = #tpu.dot_dimension_numbers<[2], [1], [1], [2], [0, 0, 0, 1, 1, 2], [0], [0]>} : vector<2x16x16xbf16>, vector<2x16x128xbf16>, vector<2x16x128xf32> -> vector<2x16x128xf32>
    "tpu.trace_stop"() : () -> ()
    %209 = arith.maximumf %187, %208 : vector<2x16x128xf32>
    %210 = arith.subf %209, %10 : vector<2x16x128xf32>
    %211 = vector.shape_cast %210 : vector<2x16x128xf32> to vector<32x128xf32>
    %c0_68 = arith.constant 0 : index
    %c0_69 = arith.constant 0 : index
    %212 = vector.load %arg4[%c0_68, %c0_69] : memref<128x128xbf16, #tpu.memory_space<vmem>>, vector<128x128xbf16>
    %cst_70 = arith.constant dense<0.000000e+00> : vector<32x128xf32>
    %213 = tpu.matmul %9, %212, %cst_70 {dimension_numbers = #tpu.dot_dimension_numbers<[1], [0], [0], [1], [0, 0, 1, 1], [], []>} : vector<32x128xbf16>, vector<128x128xbf16>, vector<32x128xf32> -> vector<32x128xf32>
    %214 = arith.truncf %211 : vector<32x128xf32> to vector<32x128xbf16>
    %c0_71 = arith.constant 0 : index
    %c0_72 = arith.constant 0 : index
    %215 = vector.load %arg5[%c0_71, %c0_72] : memref<128x128xbf16, #tpu.memory_space<vmem>>, vector<128x128xbf16>
    %cst_73 = arith.constant dense<0.000000e+00> : vector<32x128xf32>
    %216 = tpu.matmul %214, %215, %cst_73 {dimension_numbers = #tpu.dot_dimension_numbers<[1], [0], [0], [1], [0, 0, 1, 1], [], []>} : vector<32x128xbf16>, vector<128x128xbf16>, vector<32x128xf32> -> vector<32x128xf32>
    %217 = arith.addf %213, %216 : vector<32x128xf32>
    %c0_74 = arith.constant 0 : index
    %c0_75 = arith.constant 0 : index
    %218 = vector.load %arg6[%c0_74, %c0_75] : memref<1x128xf32, #tpu.memory_space<vmem>>, vector<1x128xf32>
    %219 = vector.broadcast %218 : vector<1x128xf32> to vector<32x128xf32>
    %220 = arith.addf %217, %219 : vector<32x128xf32>
    %cst_76 = arith.constant 5.000000e-01 : f32
    %221 = vector.broadcast %cst_76 : f32 to vector<32x128xf32>
    %222 = arith.mulf %221, %220 : vector<32x128xf32>
    %cst_77 = arith.constant 0.707106769 : f32
    %223 = vector.broadcast %cst_77 : f32 to vector<32x128xf32>
    %224 = arith.mulf %220, %223 : vector<32x128xf32>
    %225 = math.absf %224 : vector<32x128xf32>
    %cst_78 = arith.constant 0.327591091 : f32
    %226 = vector.broadcast %cst_78 : f32 to vector<32x128xf32>
    %227 = arith.mulf %226, %225 : vector<32x128xf32>
    %cst_79 = arith.constant 1.000000e+00 : f32
    %228 = vector.broadcast %cst_79 : f32 to vector<32x128xf32>
    %229 = arith.addf %228, %227 : vector<32x128xf32>
    %cst_80 = arith.constant 1.000000e+00 : f32
    %230 = vector.broadcast %cst_80 : f32 to vector<32x128xf32>
    %231 = arith.divf %230, %229 : vector<32x128xf32>
    %cst_81 = arith.constant 1.06140542 : f32
    %232 = vector.broadcast %cst_81 : f32 to vector<32x128xf32>
    %233 = arith.mulf %231, %232 : vector<32x128xf32>
    %cst_82 = arith.constant -1.45315206 : f32
    %234 = vector.broadcast %cst_82 : f32 to vector<32x128xf32>
    %235 = arith.addf %234, %233 : vector<32x128xf32>
    %236 = arith.mulf %231, %235 : vector<32x128xf32>
    %cst_83 = arith.constant 1.42141378 : f32
    %237 = vector.broadcast %cst_83 : f32 to vector<32x128xf32>
    %238 = arith.addf %237, %236 : vector<32x128xf32>
    %239 = arith.mulf %231, %238 : vector<32x128xf32>
    %cst_84 = arith.constant -0.284496725 : f32
    %240 = vector.broadcast %cst_84 : f32 to vector<32x128xf32>
    %241 = arith.addf %240, %239 : vector<32x128xf32>
    %242 = arith.mulf %231, %241 : vector<32x128xf32>
    %cst_85 = arith.constant 0.254829586 : f32
    %243 = vector.broadcast %cst_85 : f32 to vector<32x128xf32>
    %244 = arith.addf %243, %242 : vector<32x128xf32>
    %245 = arith.mulf %231, %244 : vector<32x128xf32>
    %246 = arith.mulf %225, %225 : vector<32x128xf32>
    %cst_86 = arith.constant 0.000000e+00 : f32
    %247 = vector.broadcast %cst_86 : f32 to vector<32x128xf32>
    %248 = arith.subf %247, %246 : vector<32x128xf32>
    %249 = math.exp %248 : vector<32x128xf32>
    %250 = arith.mulf %245, %249 : vector<32x128xf32>
    %cst_87 = arith.constant 1.000000e+00 : f32
    %251 = vector.broadcast %cst_87 : f32 to vector<32x128xf32>
    %252 = arith.subf %251, %250 : vector<32x128xf32>
    %cst_88 = arith.constant 0.000000e+00 : f32
    %253 = vector.broadcast %cst_88 : f32 to vector<32x128xf32>
    %254 = arith.cmpf olt, %224, %253 : vector<32x128xf32>
    %cst_89 = arith.constant 0.000000e+00 : f32
    %255 = vector.broadcast %cst_89 : f32 to vector<32x128xf32>
    %256 = arith.subf %255, %252 : vector<32x128xf32>
    %257 = arith.select %254, %256, %252 : vector<32x128xi1>, vector<32x128xf32>
    %cst_90 = arith.constant 1.000000e+00 : f32
    %258 = vector.broadcast %cst_90 : f32 to vector<32x128xf32>
    %259 = arith.addf %258, %257 : vector<32x128xf32>
    %260 = arith.mulf %222, %259 : vector<32x128xf32>
    %261 = arith.truncf %260 : vector<32x128xf32> to vector<32x128xbf16>
    %c0_91 = arith.constant 0 : index
    %c0_92 = arith.constant 0 : index
    %262 = vector.load %arg7[%c0_91, %c0_92] : memref<128x128xbf16, #tpu.memory_space<vmem>>, vector<128x128xbf16>
    %cst_93 = arith.constant dense<0.000000e+00> : vector<32x128xf32>
    %263 = tpu.matmul %261, %262, %cst_93 {dimension_numbers = #tpu.dot_dimension_numbers<[1], [0], [0], [1], [0, 0, 1, 1], [], []>} : vector<32x128xbf16>, vector<128x128xbf16>, vector<32x128xf32> -> vector<32x128xf32>
    %c0_94 = arith.constant 0 : index
    %c0_95 = arith.constant 0 : index
    %264 = vector.load %arg8[%c0_94, %c0_95] : memref<1x128xf32, #tpu.memory_space<vmem>>, vector<1x128xf32>
    %265 = vector.broadcast %264 : vector<1x128xf32> to vector<32x128xf32>
    %266 = arith.addf %263, %265 : vector<32x128xf32>
    %267 = arith.addf %266, %1 : vector<32x128xf32>
    %268 = arith.truncf %267 : vector<32x128xf32> to vector<32x128xbf16>
    %c0_96 = arith.constant 0 : index
    %c0_97 = arith.constant 0 : index
    %269 = vector.load %arg9[%c0_96, %c0_97] : memref<128x128xbf16, #tpu.memory_space<vmem>>, vector<128x128xbf16>
    %cst_98 = arith.constant dense<0.000000e+00> : vector<32x128xf32>
    %270 = tpu.matmul %268, %269, %cst_98 {dimension_numbers = #tpu.dot_dimension_numbers<[1], [0], [0], [1], [0, 0, 1, 1], [], []>} : vector<32x128xbf16>, vector<128x128xbf16>, vector<32x128xf32> -> vector<32x128xf32>
    %c0_99 = arith.constant 0 : index
    %c0_100 = arith.constant 0 : index
    %271 = vector.load %arg10[%c0_99, %c0_100] : memref<1x128xf32, #tpu.memory_space<vmem>>, vector<1x128xf32>
    %272 = vector.broadcast %271 : vector<1x128xf32> to vector<32x128xf32>
    %273 = arith.addf %270, %272 : vector<32x128xf32>
    %cst_101 = arith.constant 5.000000e-01 : f32
    %274 = vector.broadcast %cst_101 : f32 to vector<32x128xf32>
    %275 = arith.mulf %274, %273 : vector<32x128xf32>
    %cst_102 = arith.constant 0.707106769 : f32
    %276 = vector.broadcast %cst_102 : f32 to vector<32x128xf32>
    %277 = arith.mulf %273, %276 : vector<32x128xf32>
    %278 = math.absf %277 : vector<32x128xf32>
    %cst_103 = arith.constant 0.327591091 : f32
    %279 = vector.broadcast %cst_103 : f32 to vector<32x128xf32>
    %280 = arith.mulf %279, %278 : vector<32x128xf32>
    %cst_104 = arith.constant 1.000000e+00 : f32
    %281 = vector.broadcast %cst_104 : f32 to vector<32x128xf32>
    %282 = arith.addf %281, %280 : vector<32x128xf32>
    %cst_105 = arith.constant 1.000000e+00 : f32
    %283 = vector.broadcast %cst_105 : f32 to vector<32x128xf32>
    %284 = arith.divf %283, %282 : vector<32x128xf32>
    %cst_106 = arith.constant 1.06140542 : f32
    %285 = vector.broadcast %cst_106 : f32 to vector<32x128xf32>
    %286 = arith.mulf %284, %285 : vector<32x128xf32>
    %cst_107 = arith.constant -1.45315206 : f32
    %287 = vector.broadcast %cst_107 : f32 to vector<32x128xf32>
    %288 = arith.addf %287, %286 : vector<32x128xf32>
    %289 = arith.mulf %284, %288 : vector<32x128xf32>
    %cst_108 = arith.constant 1.42141378 : f32
    %290 = vector.broadcast %cst_108 : f32 to vector<32x128xf32>
    %291 = arith.addf %290, %289 : vector<32x128xf32>
    %292 = arith.mulf %284, %291 : vector<32x128xf32>
    %cst_109 = arith.constant -0.284496725 : f32
    %293 = vector.broadcast %cst_109 : f32 to vector<32x128xf32>
    %294 = arith.addf %293, %292 : vector<32x128xf32>
    %295 = arith.mulf %284, %294 : vector<32x128xf32>
    %cst_110 = arith.constant 0.254829586 : f32
    %296 = vector.broadcast %cst_110 : f32 to vector<32x128xf32>
    %297 = arith.addf %296, %295 : vector<32x128xf32>
    %298 = arith.mulf %284, %297 : vector<32x128xf32>
    %299 = arith.mulf %278, %278 : vector<32x128xf32>
    %cst_111 = arith.constant 0.000000e+00 : f32
    %300 = vector.broadcast %cst_111 : f32 to vector<32x128xf32>
    %301 = arith.subf %300, %299 : vector<32x128xf32>
    %302 = math.exp %301 : vector<32x128xf32>
    %303 = arith.mulf %298, %302 : vector<32x128xf32>
    %cst_112 = arith.constant 1.000000e+00 : f32
    %304 = vector.broadcast %cst_112 : f32 to vector<32x128xf32>
    %305 = arith.subf %304, %303 : vector<32x128xf32>
    %cst_113 = arith.constant 0.000000e+00 : f32
    %306 = vector.broadcast %cst_113 : f32 to vector<32x128xf32>
    %307 = arith.cmpf olt, %277, %306 : vector<32x128xf32>
    %cst_114 = arith.constant 0.000000e+00 : f32
    %308 = vector.broadcast %cst_114 : f32 to vector<32x128xf32>
    %309 = arith.subf %308, %305 : vector<32x128xf32>
    %310 = arith.select %307, %309, %305 : vector<32x128xi1>, vector<32x128xf32>
    %cst_115 = arith.constant 1.000000e+00 : f32
    %311 = vector.broadcast %cst_115 : f32 to vector<32x128xf32>
    %312 = arith.addf %311, %310 : vector<32x128xf32>
    %313 = arith.mulf %275, %312 : vector<32x128xf32>
    %314 = arith.truncf %313 : vector<32x128xf32> to vector<32x128xbf16>
    %c0_116 = arith.constant 0 : index
    %c0_117 = arith.constant 0 : index
    %315 = vector.load %arg11[%c0_116, %c0_117] : memref<128x128xbf16, #tpu.memory_space<vmem>>, vector<128x128xbf16>
    %cst_118 = arith.constant dense<0.000000e+00> : vector<32x128xf32>
    %316 = tpu.matmul %314, %315, %cst_118 {dimension_numbers = #tpu.dot_dimension_numbers<[1], [0], [0], [1], [0, 0, 1, 1], [], []>} : vector<32x128xbf16>, vector<128x128xbf16>, vector<32x128xf32> -> vector<32x128xf32>
    %c0_119 = arith.constant 0 : index
    %c0_120 = arith.constant 0 : index
    %317 = vector.load %arg12[%c0_119, %c0_120] : memref<1x128xf32, #tpu.memory_space<vmem>>, vector<1x128xf32>
    %318 = vector.broadcast %317 : vector<1x128xf32> to vector<32x128xf32>
    %319 = arith.addf %316, %318 : vector<32x128xf32>
    %320 = arith.addf %267, %319 : vector<32x128xf32>
    %c0_121 = arith.constant 0 : index
    %c0_122 = arith.constant 0 : index
    %c0_123 = arith.constant 0 : index
    %321 = vector.load %arg13[%c0_121, %c0_122, %c0_123] : memref<1x32x128xf32, #tpu.memory_space<vmem>>, vector<1x32x128xf32>
    %322 = vector.shape_cast %321 : vector<1x32x128xf32> to vector<32x128xf32>
    %323 = vector.shape_cast %320 : vector<32x128xf32> to vector<1x32x128xf32>
    tpu.vector_store %arg13[%c0_121, %c0_122, %c0_123], %323 {strides = array<i32>} : memref<1x32x128xf32, #tpu.memory_space<vmem>>, vector<1x32x128xf32>,
    return
  }
  func.func @transform_0(%arg0: i32) -> (i32, i32, i32) {
    %c0_i32 = arith.constant 0 : i32
    %c0_i32_0 = arith.constant 0 : i32
    %c0_i32_1 = arith.constant 0 : i32
    return %arg0, %c0_i32, %c0_i32_0 : i32, i32, i32
  }
  func.func @transform_1(%arg0: i32) -> (i32, i32) {
    %c0_i32 = arith.constant 0 : i32
    %c0_i32_0 = arith.constant 0 : i32
    %c0_i32_1 = arith.constant 0 : i32
    return %c0_i32, %c0_i32_0 : i32, i32
  }
  func.func @transform_2(%arg0: i32) -> (i32, i32) {
    %c0_i32 = arith.constant 0 : i32
    %c0_i32_0 = arith.constant 0 : i32
    %c0_i32_1 = arith.constant 0 : i32
    return %c0_i32, %c0_i32_0 : i32, i32
  }
  func.func @transform_3(%arg0: i32) -> (i32, i32) {
    %c0_i32 = arith.constant 0 : i32
    %c0_i32_0 = arith.constant 0 : i32
    %c0_i32_1 = arith.constant 0 : i32
    return %c0_i32, %c0_i32_0 : i32, i32
  }
  func.func @transform_4(%arg0: i32) -> (i32, i32) {
    %c0_i32 = arith.constant 0 : i32
    %c0_i32_0 = arith.constant 0 : i32
    %c0_i32_1 = arith.constant 0 : i32
    return %c0_i32, %c0_i32_0 : i32, i32
  }
  func.func @transform_5(%arg0: i32) -> (i32, i32) {
    %c0_i32 = arith.constant 0 : i32
    %c0_i32_0 = arith.constant 0 : i32
    %c0_i32_1 = arith.constant 0 : i32
    return %c0_i32, %c0_i32_0 : i32, i32
  }
  func.func @transform_6(%arg0: i32) -> (i32, i32) {
    %c0_i32 = arith.constant 0 : i32
    %c0_i32_0 = arith.constant 0 : i32
    %c0_i32_1 = arith.constant 0 : i32
    return %c0_i32, %c0_i32_0 : i32, i32
  }
  func.func @transform_7(%arg0: i32) -> (i32, i32) {
    %c0_i32 = arith.constant 0 : i32
    %c0_i32_0 = arith.constant 0 : i32
    %c0_i32_1 = arith.constant 0 : i32
    return %c0_i32, %c0_i32_0 : i32, i32
  }
  func.func @transform_8(%arg0: i32) -> (i32, i32) {
    %c0_i32 = arith.constant 0 : i32
    %c0_i32_0 = arith.constant 0 : i32
    %c0_i32_1 = arith.constant 0 : i32
    return %c0_i32, %c0_i32_0 : i32, i32
  }
  func.func @transform_9(%arg0: i32) -> (i32, i32) {
    %c0_i32 = arith.constant 0 : i32
    %c0_i32_0 = arith.constant 0 : i32
    %c0_i32_1 = arith.constant 0 : i32
    return %c0_i32, %c0_i32_0 : i32, i32
  }
  func.func @transform_10(%arg0: i32) -> (i32, i32) {
    %c0_i32 = arith.constant 0 : i32
    %c0_i32_0 = arith.constant 0 : i32
    %c0_i32_1 = arith.constant 0 : i32
    return %c0_i32, %c0_i32_0 : i32, i32
  }
  func.func @transform_11(%arg0: i32) -> (i32, i32) {
    %c0_i32 = arith.constant 0 : i32
    %c0_i32_0 = arith.constant 0 : i32
    %c0_i32_1 = arith.constant 0 : i32
    return %c0_i32, %c0_i32_0 : i32, i32
  }
  func.func @transform_12(%arg0: i32) -> (i32, i32, i32) {
    %c0_i32 = arith.constant 0 : i32
    %c0_i32_0 = arith.constant 0 : i32
    %c0_i32_1 = arith.constant 0 : i32
    return %arg0, %c0_i32, %c0_i32_0 : i32, i32, i32
  }
}

</mosaic_0001>

<llo_original>
// kernel: tpu_custom_call.1
$region0: #{tpu_custom_call.1}
  #allocation0 [shape = 'u32[]', space=smem, size = 0x4, offset = 0x4, fixed_abs, tag = 'smem constant byte address 0x4 - core index']
  #allocation1 [shape = 'u32[144,128]{1,0:T(1,128)}', space=vmem, size = 0x12000, scoped, tag = 'internal scratch']
  %s0 = inlined_call_operand.hbm [shape: f32[1,32,128], index: 0, kind: input, shape index: {}]
  %s1 = inlined_call_operand.hbm [shape: bf16[128,128], index: 1, kind: input, shape index: {}]
  %s2 = inlined_call_operand.vmem [shape: f32[1,128], index: 2, kind: input, shape index: {}]
  %s3 = inlined_call_operand.hbm [shape: bf16[128,128], index: 3, kind: input, shape index: {}]
  %s4 = inlined_call_operand.hbm [shape: bf16[128,128], index: 4, kind: input, shape index: {}]
  %s5 = inlined_call_operand.vmem [shape: f32[1,128], index: 5, kind: input, shape index: {}]
  %s6 = inlined_call_operand.hbm [shape: bf16[128,128], index: 6, kind: input, shape index: {}]
  %s7 = inlined_call_operand.vmem [shape: f32[1,128], index: 7, kind: input, shape index: {}]
  %s8 = inlined_call_operand.hbm [shape: bf16[128,128], index: 8, kind: input, shape index: {}]
  %s9 = inlined_call_operand.vmem [shape: f32[1,128], index: 9, kind: input, shape index: {}]
  %s10 = inlined_call_operand.hbm [shape: bf16[128,128], index: 10, kind: input, shape index: {}]
  %s11 = inlined_call_operand.vmem [shape: f32[1,128], index: 11, kind: input, shape index: {}]
  %s12 = inlined_call_operand.hbm [shape: f32[1,32,128], index: 12, kind: output, shape index: {}]
  %s13 = sld [smem:[#allocation0]]
  $region86: #{tpu_custom_call.1} parent=0
    _
  %s15 = ssub.s32 1, %s13
  %s16 = scalar_select 0, %s15, %s13
  $region1: #{tpu_custom_call.1} parent=0
    #allocation2 [shape = 'u8[16384]{0}', space=vmem, size = 0x4000, scoped, tag = 'input window, operand 0, single buffered']
    #allocation3 [shape = 's32[1]{0}', space=sflag, size = 0x4, scoped, tag = 'scoped memory for tpu_custom_call.1']
    #allocation4 [shape = 's32[1]{0}', space=sflag, size = 0x4, scoped, tag = 'scoped memory for tpu_custom_call.1']
    #allocation5 [shape = 'u8[32768]{0}', space=vmem, size = 0x8000, scoped, tag = 'input window, operand 1, single buffered']
    #allocation6 [shape = 's32[1]{0}', space=sflag, size = 0x4, scoped, tag = 'scoped memory for tpu_custom_call.1']
    #allocation7 [shape = 'u8[32768]{0}', space=vmem, size = 0x8000, scoped, tag = 'input window, operand 3, single buffered']
    #allocation8 [shape = 'u8[32768]{0}', space=vmem, size = 0x8000, scoped, tag = 'input window, operand 4, single buffered']
    #allocation9 [shape = 's32[1]{0}', space=sflag, size = 0x4, scoped, tag = 'scoped memory for tpu_custom_call.1']
    #allocation10 [shape = 'u8[32768]{0}', space=vmem, size = 0x8000, scoped, tag = 'input window, operand 6, single buffered']
    #allocation11 [shape = 'u8[32768]{0}', space=vmem, size = 0x8000, scoped, tag = 'input window, operand 8, single buffered']
    #allocation12 [shape = 's32[1]{0}', space=sflag, size = 0x4, scoped, tag = 'scoped memory for tpu_custom_call.1']
    #allocation13 [shape = 'u8[32768]{0}', space=vmem, size = 0x8000, scoped, tag = 'input window, operand 10, single buffered']
    #allocation14 [shape = 'u8[16384]{0}', space=vmem, size = 0x4000, scoped, tag = 'output window, operand 0, single buffered']
    %17 = vsyncpa [#allocation3], 0
    %18 = vsyncpa [#allocation6], 0
    %19 = vsyncpa [#allocation9], 0
    %20 = vsyncpa [#allocation12], 0
    %21 = vsyncpa [#allocation4], 0
    // Predicated region
    $region2: #{tpu_custom_call.1} parent=1 // pred_check
      _
    $region3: #{tpu_custom_call.1} parent=1 // pred_check_branch
      %23 = sbr.rel (0) target = $region5
    $region4: #{tpu_custom_call.1} parent=1 // pred_region
      %s25 = ssub.s32 512, 512
      %26 = vsyncadd [#allocation3], %s25
      %s27 = sshll.u32 [#allocation2], 4
      %s28 = int_to_ptr.vmem [resolvable:$true] %s27
      %33 = dma.hbm_to_vmem [thread:$0]  %s0, 512, %s28, [#allocation3], 128, 128, 8
    $region5: #{tpu_custom_call.1} parent=1 // pred_fallthru
      _
    // Predicated region
    $region6: #{tpu_custom_call.1} parent=1 // pred_check
      _
    $region7: #{tpu_custom_call.1} parent=1 // pred_check_branch
      %35 = sbr.rel (0) target = $region9
    $region8: #{tpu_custom_call.1} parent=1 // pred_region
      %s37 = ssub.s32 1024, 1024
      %38 = vsyncadd [#allocation6], %s37
      %s39 = sshll.u32 [#allocation5], 4
      %s40 = int_to_ptr.vmem [resolvable:$true] %s39
      %45 = dma.hbm_to_vmem [thread:$0]  %s1, 1024, %s40, [#allocation6], 64, 64, 4
    $region9: #{tpu_custom_call.1} parent=1 // pred_fallthru
      _
    // Predicated region
    $region10: #{tpu_custom_call.1} parent=1 // pred_check
      _
    $region11: #{tpu_custom_call.1} parent=1 // pred_check_branch
      %47 = sbr.rel (0) target = $region13
    $region12: #{tpu_custom_call.1} parent=1 // pred_region
      _
    $region13: #{tpu_custom_call.1} parent=1 // pred_fallthru
      _
    // Predicated region
    $region14: #{tpu_custom_call.1} parent=1 // pred_check
      _
    $region15: #{tpu_custom_call.1} parent=1 // pred_check_branch
      %49 = sbr.rel (0) target = $region17
    $region16: #{tpu_custom_call.1} parent=1 // pred_region
      %s51 = ssub.s32 1024, 1024
      %52 = vsyncadd [#allocation6], %s51
      %s53 = sshll.u32 [#allocation7], 4
      %s54 = int_to_ptr.vmem [resolvable:$true] %s53
      %59 = dma.hbm_to_vmem [thread:$0]  %s3, 1024, %s54, [#allocation6], 64, 64, 4
    $region17: #{tpu_custom_call.1} parent=1 // pred_fallthru
      _
    // Predicated region
    $region18: #{tpu_custom_call.1} parent=1 // pred_check
      _
    $region19: #{tpu_custom_call.1} parent=1 // pred_check_branch
      %61 = sbr.rel (0) target = $region21
    $region20: #{tpu_custom_call.1} parent=1 // pred_region
      %s63 = ssub.s32 1024, 1024
      %64 = vsyncadd [#allocation9], %s63
      %s65 = sshll.u32 [#allocation8], 4
      %s66 = int_to_ptr.vmem [resolvable:$true] %s65
      %71 = dma.hbm_to_vmem [thread:$0]  %s4, 1024, %s66, [#allocation9], 64, 64, 4
    $region21: #{tpu_custom_call.1} parent=1 // pred_fallthru
      _
    // Predicated region
    $region22: #{tpu_custom_call.1} parent=1 // pred_check
      _
    $region23: #{tpu_custom_call.1} parent=1 // pred_check_branch
      %73 = sbr.rel (0) target = $region25
    $region24: #{tpu_custom_call.1} parent=1 // pred_region
      _
    $region25: #{tpu_custom_call.1} parent=1 // pred_fallthru
      _
    // Predicated region
    $region26: #{tpu_custom_call.1} parent=1 // pred_check
      _
    $region27: #{tpu_custom_call.1} parent=1 // pred_check_branch
      %75 = sbr.rel (0) target = $region29
    $region28: #{tpu_custom_call.1} parent=1 // pred_region
      %s77 = ssub.s32 1024, 1024
      %78 = vsyncadd [#allocation9], %s77
      %s79 = sshll.u32 [#allocation10], 4
      %s80 = int_to_ptr.vmem [resolvable:$true] %s79
      %85 = dma.hbm_to_vmem [thread:$0]  %s6, 1024, %s80, [#allocation9], 64, 64, 4
    $region29: #{tpu_custom_call.1} parent=1 // pred_fallthru
      _
    // Predicated region
    $region30: #{tpu_custom_call.1} parent=1 // pred_check
      _
    $region31: #{tpu_custom_call.1} parent=1 // pred_check_branch
      %87 = sbr.rel (0) target = $region33
    $region32: #{tpu_custom_call.1} parent=1 // pred_region
      _
    $region33: #{tpu_custom_call.1} parent=1 // pred_fallthru
      _
    // Predicated region
    $region34: #{tpu_custom_call.1} parent=1 // pred_check
      _
    $region35: #{tpu_custom_call.1} parent=1 // pred_check_branch
      %89 = sbr.rel (0) target = $region37
    $region36: #{tpu_custom_call.1} parent=1 // pred_region
      %s91 = ssub.s32 1024, 1024
      %92 = vsyncadd [#allocation12], %s91
      %s93 = sshll.u32 [#allocation11], 4
      %s94 = int_to_ptr.vmem [resolvable:$true] %s93
      %99 = dma.hbm_to_vmem [thread:$0]  %s8, 1024, %s94, [#allocation12], 64, 64, 4
    $region37: #{tpu_custom_call.1} parent=1 // pred_fallthru
      _
    // Predicated region
    $region38: #{tpu_custom_call.1} parent=1 // pred_check
      _
    $region39: #{tpu_custom_call.1} parent=1 // pred_check_branch
      %101 = sbr.rel (0) target = $region41
    $region40: #{tpu_custom_call.1} parent=1 // pred_region
      _
    $region41: #{tpu_custom_call.1} parent=1 // pred_fallthru
      _
    // Predicated region
    $region42: #{tpu_custom_call.1} parent=1 // pred_check
      _
    $region43: #{tpu_custom_call.1} parent=1 // pred_check_branch
      %103 = sbr.rel (0) target = $region45
    $region44: #{tpu_custom_call.1} parent=1 // pred_region
      %s105 = ssub.s32 1024, 1024
      %106 = vsyncadd [#allocation12], %s105
      %s107 = sshll.u32 [#allocation13], 4
      %s108 = int_to_ptr.vmem [resolvable:$true] %s107
      %113 = dma.hbm_to_vmem [thread:$0]  %s10, 1024, %s108, [#allocation12], 64, 64, 4
    $region45: #{tpu_custom_call.1} parent=1 // pred_fallthru
      _
    // Predicated region
    $region46: #{tpu_custom_call.1} parent=1 // pred_check
      _
    $region47: #{tpu_custom_call.1} parent=1 // pred_check_branch
      %115 = sbr.rel (0) target = $region49
    $region48: #{tpu_custom_call.1} parent=1 // pred_region
      _
    $region49: #{tpu_custom_call.1} parent=1 // pred_fallthru
      _
    // Predicated region
    $region50: #{tpu_custom_call.1} parent=1 // pred_check
      _
    $region51: #{tpu_custom_call.1} parent=1 // pred_check_branch
      %117 = sbr.rel (0) target = $region53
    $region52: #{tpu_custom_call.1} parent=1 // pred_region
      %118 = dma.done [#allocation3], 512
    $region53: #{tpu_custom_call.1} parent=1 // pred_fallthru
      _
    // Predicated region
    $region54: #{tpu_custom_call.1} parent=1 // pred_check
      _
    $region55: #{tpu_custom_call.1} parent=1 // pred_check_branch
      %120 = sbr.rel (0) target = $region57
    $region56: #{tpu_custom_call.1} parent=1 // pred_region
      %121 = dma.done [#allocation6], 1024
    $region57: #{tpu_custom_call.1} parent=1 // pred_fallthru
      _
    // Predicated region
    $region58: #{tpu_custom_call.1} parent=1 // pred_check
      _
    $region59: #{tpu_custom_call.1} parent=1 // pred_check_branch
      %123 = sbr.rel (0) target = $region61
    $region60: #{tpu_custom_call.1} parent=1 // pred_region
      %124 = dma.done [#allocation6], 1024
    $region61: #{tpu_custom_call.1} parent=1 // pred_fallthru
      _
    // Predicated region
    $region62: #{tpu_custom_call.1} parent=1 // pred_check
      _
    $region63: #{tpu_custom_call.1} parent=1 // pred_check_branch
      %126 = sbr.rel (0) target = $region65
    $region64: #{tpu_custom_call.1} parent=1 // pred_region
      %127 = dma.done [#allocation9], 1024
    $region65: #{tpu_custom_call.1} parent=1 // pred_fallthru
      _
    // Predicated region
    $region66: #{tpu_custom_call.1} parent=1 // pred_check
      _
    $region67: #{tpu_custom_call.1} parent=1 // pred_check_branch
      %129 = sbr.rel (0) target = $region69
    $region68: #{tpu_custom_call.1} parent=1 // pred_region
      %130 = dma.done [#allocation9], 1024
    $region69: #{tpu_custom_call.1} parent=1 // pred_fallthru
      _
    // Predicated region
    $region70: #{tpu_custom_call.1} parent=1 // pred_check
      _
    $region71: #{tpu_custom_call.1} parent=1 // pred_check_branch
      %132 = sbr.rel (0) target = $region73
    $region72: #{tpu_custom_call.1} parent=1 // pred_region
      %133 = dma.done [#allocation12], 1024
    $region73: #{tpu_custom_call.1} parent=1 // pred_fallthru
      _
    // Predicated region
    $region74: #{tpu_custom_call.1} parent=1 // pred_check
      _
    $region75: #{tpu_custom_call.1} parent=1 // pred_check_branch
      %135 = sbr.rel (0) target = $region77
    $region76: #{tpu_custom_call.1} parent=1 // pred_region
      %136 = dma.done [#allocation12], 1024
    $region77: #{tpu_custom_call.1} parent=1 // pred_fallthru
      _
    %v138 = vld [vmem:[#allocation2] sm:$0xff]
    %v139 = vld [vmem:[#allocation2 + $0x8] sm:$0xff]
    %v140 = vld [vmem:[#allocation2 + $0x10] sm:$0xff]
    %v141 = vld [vmem:[#allocation2 + $0x18] sm:$0xff]
    %v142 = vpack.c.bf16 %v139, %v138
    %v143 = vpack.c.bf16 %v141, %v140
    %v144 = vld [vmem:[#allocation5] sm:$0xf]
    %v145 = vld [vmem:[#allocation5 + $0x4] sm:$0xf]
    %v146 = vld [vmem:[#allocation5 + $0x8] sm:$0xf]
    %v147 = vld [vmem:[#allocation5 + $0xc] sm:$0xf]
    %v148 = vld [vmem:[#allocation5 + $0x10] sm:$0xf]
    %v149 = vld [vmem:[#allocation5 + $0x14] sm:$0xf]
    %v150 = vld [vmem:[#allocation5 + $0x18] sm:$0xf]
    %v151 = vld [vmem:[#allocation5 + $0x1c] sm:$0xf]
    %v152 = vld [vmem:[#allocation5 + $0x20] sm:$0xf]
    %v153 = vld [vmem:[#allocation5 + $0x24] sm:$0xf]
    %v154 = vld [vmem:[#allocation5 + $0x28] sm:$0xf]
    %v155 = vld [vmem:[#allocation5 + $0x2c] sm:$0xf]
    %v156 = vld [vmem:[#allocation5 + $0x30] sm:$0xf]
    %v157 = vld [vmem:[#allocation5 + $0x34] sm:$0xf]
    %v158 = vld [vmem:[#allocation5 + $0x38] sm:$0xf]
    %v159 = vld [vmem:[#allocation5 + $0x3c] sm:$0xf]
    %v160 = vld [vmem:[%s2] sm:$0x1]
    %v162 = vlaneseq
    %v163 = vshrl.u32 %v162, 7
    %v164 = vsub.s32 0, %v163
    %v165 = vrot.slane %v160, %v164
    %v183 = vunpack.c.l.b16 %v144
    %v184 = vunpack.c.l.b16 %v145
    %v185 = vunpack.c.l.b16 %v146
    %v186 = vunpack.c.l.b16 %v147
    %v187 = vunpack.c.l.b16 %v148
    %v188 = vunpack.c.l.b16 %v149
    %v189 = vunpack.c.l.b16 %v150
    %v190 = vunpack.c.l.b16 %v151
    %v191 = vunpack.c.l.b16 %v152
    %v192 = vunpack.c.l.b16 %v153
    %v193 = vunpack.c.l.b16 %v154
    %v194 = vunpack.c.l.b16 %v155
    %v195 = vunpack.c.l.b16 %v156
    %v196 = vunpack.c.l.b16 %v157
    %v197 = vunpack.c.l.b16 %v158
    %v198 = vunpack.c.l.b16 %v159
    %v199 = vpack.c.b16 %v184, %v183
    %v200 = vpack.c.b16 %v186, %v185
    %v201 = vpack.c.b16 %v188, %v187
    %v202 = vpack.c.b16 %v190, %v189
    %v203 = vpack.c.b16 %v192, %v191
    %v204 = vpack.c.b16 %v194, %v193
    %v205 = vpack.c.b16 %v196, %v195
    %v206 = vpack.c.b16 %v198, %v197
    %215 = vmatprep.subr.bf16.mxu0 0
    %216 = vmatpush1.bf16.msra.mxu0 %v199
    %217 = vmatprep.subr.bf16.mxu0 0
    %218 = vmatpush1.bf16.msra.mxu0 %v200
    %219 = vmatprep.subr.bf16.mxu0 0
    %220 = vmatpush1.bf16.msra.mxu0 %v201
    %221 = vmatprep.subr.bf16.mxu0 0
    %222 = vmatpush1.bf16.msra.mxu0 %v202
    %223 = vmatprep.subr.bf16.mxu0 0
    %224 = vmatpush1.bf16.msra.mxu0 %v203
    %225 = vmatprep.subr.bf16.mxu0 0
    %226 = vmatpush1.bf16.msra.mxu0 %v204
    %227 = vmatprep.subr.bf16.mxu0 0
    %228 = vmatpush1.bf16.msra.mxu0 %v205
    %229 = vmatprep.subr.bf16.mxu0 0
    %230 = vmatpush1.bf16.msra.mxu0 %v206
    %231 = vmatprep.subr.bf16.mxu0 0
    %232 = vmatpush1.bf16.msra.mxu0 0
    %233 = vmatprep.subr.bf16.mxu0 0
    %234 = vmatpush1.bf16.msra.mxu0 0
    %235 = vmatprep.subr.bf16.mxu0 0
    %236 = vmatpush1.bf16.msra.mxu0 0
    %237 = vmatprep.subr.bf16.mxu0 0
    %238 = vmatpush1.bf16.msra.mxu0 0
    %239 = vmatprep.subr.bf16.mxu0 0
    %240 = vmatpush1.bf16.msra.mxu0 0
    %241 = vmatprep.subr.bf16.mxu0 0
    %242 = vmatpush1.bf16.msra.mxu0 0
    %243 = vmatprep.subr.bf16.mxu0 0
    %244 = vmatpush1.bf16.msra.mxu0 0
    %245 = vmatprep.subr.bf16.mxu0 0
    %246 = vmatpush1.bf16.msra.mxu0 0
    %247 = vmatprep.mubr.bf16.mxu0 0
    %248 = vmatmul.mubr.bf16.gmra.mrb[0].mxu0 %v142
    %v249 = vpop.f32.mrb[0].mxu0
    %v250 = vadd.f32 %v165, %v249
    %v251 = vpop.f32.mrb[0].mxu0
    %v252 = vpop.f32.mrb[0].mxu0
    %v253 = vadd.f32 %v165, %v252
    %v254 = vpop.f32.mrb[0].mxu0
    %255 = vmatprep.mubr.bf16.mxu0 0
    %256 = vmatmul.mubr.bf16.gmra.mrb[0].mxu0 %v143
    %v257 = vpop.f32.mrb[0].mxu0
    %v258 = vadd.f32 %v165, %v257
    %v259 = vpop.f32.mrb[0].mxu0
    %v260 = vpop.f32.mrb[0].mxu0
    %v261 = vadd.f32 %v165, %v260
    %v262 = vpop.f32.mrb[0].mxu0
    %263 = vdwg.mxu0
    %v264 = vpack.c.bf16 %v253, %v250
    %v265 = vpack.c.bf16 %v261, %v258
    %266 = vmatprep.subr.bf16.mxu0 0
    %267 = vmatpush1.bf16.xpose.msra.mxu0 %v142
    %268 = vmatprep.subr.bf16.mxu0 0
    %269 = vmatpush1.bf16.xpose.msra.mxu0 0
    %270 = vmatprep.subr.bf16.mxu0 0
    %271 = vmatpush1.bf16.xpose.msra.mxu0 0
    %272 = vmatprep.subr.bf16.mxu0 0
    %273 = vmatpush1.bf16.xpose.msra.mxu0 0
    %274 = vmatprep.subr.bf16.mxu0 0
    %275 = vmatpush1.bf16.xpose.msra.mxu0 0
    %276 = vmatprep.subr.bf16.mxu0 0
    %277 = vmatpush1.bf16.xpose.msra.mxu0 0
    %278 = vmatprep.subr.bf16.mxu0 0
    %279 = vmatpush1.bf16.xpose.msra.mxu0 0
    %280 = vmatprep.subr.bf16.mxu0 0
    %281 = vmatpush1.bf16.xpose.msra.mxu0 0
    %282 = vmatprep.subr.bf16.mxu0 0
    %283 = vmatpush1.bf16.xpose.msra.mxu0 0
    %284 = vmatprep.subr.bf16.mxu0 0
    %285 = vmatpush1.bf16.xpose.msra.mxu0 0
    %286 = vmatprep.subr.bf16.mxu0 0
    %287 = vmatpush1.bf16.xpose.msra.mxu0 0
    %288 = vmatprep.subr.bf16.mxu0 0
    %289 = vmatpush1.bf16.xpose.msra.mxu0 0
    %290 = vmatprep.subr.bf16.mxu0 0
    %291 = vmatpush1.bf16.xpose.msra.mxu0 0
    %292 = vmatprep.subr.bf16.mxu0 0
    %293 = vmatpush1.bf16.xpose.msra.mxu0 0
    %294 = vmatprep.subr.bf16.mxu0 0
    %295 = vmatpush1.bf16.xpose.msra.mxu0 0
    %296 = vmatprep.subr.bf16.mxu0 0
    %297 = vmatpush1.bf16.xpose.msra.mxu0 0
    %298 = vmatprep.mubr.bf16.mxu0 0
    %299 = vmatmul.mubr.bf16.gmra.mrb[0].mxu0 %v142
    %v300 = vpop.f32.mrb[0].mxu0
    %v301 = vadd.f32 0.0, %v300
    %v302 = vpop.f32.mrb[0].mxu0
    %v303 = vpop.f32.mrb[0].mxu0
    %v304 = vadd.f32 0.0, %v303
    %v305 = vpop.f32.mrb[0].mxu0
    %306 = vdwg.mxu0
    %307 = vmatprep.subr.bf16.mxu0 0
    %308 = vmatpush1.bf16.xpose.msra.mxu0 %v143
    %309 = vmatprep.subr.bf16.mxu0 0
    %310 = vmatpush1.bf16.xpose.msra.mxu0 0
    %311 = vmatprep.subr.bf16.mxu0 0
    %312 = vmatpush1.bf16.xpose.msra.mxu0 0
    %313 = vmatprep.subr.bf16.mxu0 0
    %314 = vmatpush1.bf16.xpose.msra.mxu0 0
    %315 = vmatprep.subr.bf16.mxu0 0
    %316 = vmatpush1.bf16.xpose.msra.mxu0 0
    %317 = vmatprep.subr.bf16.mxu0 0
    %318 = vmatpush1.bf16.xpose.msra.mxu0 0
    %319 = vmatprep.subr.bf16.mxu0 0
    %320 = vmatpush1.bf16.xpose.msra.mxu0 0
    %321 = vmatprep.subr.bf16.mxu0 0
    %322 = vmatpush1.bf16.xpose.msra.mxu0 0
    %323 = vmatprep.subr.bf16.mxu0 0
    %324 = vmatpush1.bf16.xpose.msra.mxu0 0
    %325 = vmatprep.subr.bf16.mxu0 0
    %326 = vmatpush1.bf16.xpose.msra.mxu0 0
    %327 = vmatprep.subr.bf16.mxu0 0
    %328 = vmatpush1.bf16.xpose.msra.mxu0 0
    %329 = vmatprep.subr.bf16.mxu0 0
    %330 = vmatpush1.bf16.xpose.msra.mxu0 0
    %331 = vmatprep.subr.bf16.mxu0 0
    %332 = vmatpush1.bf16.xpose.msra.mxu0 0
    %333 = vmatprep.subr.bf16.mxu0 0
    %334 = vmatpush1.bf16.xpose.msra.mxu0 0
    %335 = vmatprep.subr.bf16.mxu0 0
    %336 = vmatpush1.bf16.xpose.msra.mxu0 0
    %337 = vmatprep.subr.bf16.mxu0 0
    %338 = vmatpush1.bf16.xpose.msra.mxu0 0
    %339 = vmatprep.mubr.bf16.mxu0 0
    %340 = vmatmul.mubr.bf16.gmra.mrb[0].mxu0 %v143
    %v341 = vpop.f32.mrb[0].mxu0
    %v342 = vadd.f32 0.0, %v341
    %v343 = vpop.f32.mrb[0].mxu0
    %v344 = vpop.f32.mrb[0].mxu0
    %v345 = vadd.f32 0.0, %v344
    %v346 = vpop.f32.mrb[0].mxu0
    %347 = vdwg.mxu0
    %v348 = vlaneseq
    %v349 = vand.u32 %v348, 127
    %vm350 = vcmask 130048
    %v351 = vsel %vm350, %v301, -inf
    %352 = vmax.xlane.f32.xlu0 %v351
    %v353 = vpop.xlane.xlu0 %352
    %v354 = vsel %vm350, %v304, -inf
    %355 = vmax.xlane.f32.xlu0 %v354
    %v356 = vpop.xlane.xlu0 %355
    %v357 = vsel %vm350, %v342, -inf
    %358 = vmax.xlane.f32.xlu0 %v357
    %v359 = vpop.xlane.xlu0 %358
    %v360 = vsel %vm350, %v345, -inf
    %361 = vmax.xlane.f32.xlu0 %v360
    %v362 = vpop.xlane.xlu0 %361
    %vm363 = vcmp.eq.f32.partialorder %v301, %v353
    %vm364 = vcmp.eq.f32.partialorder %v304, %v356
    %vm365 = vcmp.eq.f32.partialorder %v342, %v359
    %vm366 = vcmp.eq.f32.partialorder %v345, %v362
    %v367 = vsel %vm363, %v349, 16
    %v368 = vsel %vm364, %v349, 16
    %v369 = vsel %vm365, %v349, 16
    %v370 = vsel %vm366, %v349, 16
    %v371 = vsel %vm350, %v367, 2147483647
    %v372 = vand.u32 %v371, 65535
    %v373 = vshra.s32 %v371, 16
    %v374 = vcvt.s32.f32 %v372
    %v375 = vcvt.s32.f32 %v373
    %376 = vmin.xlane.f32.xlu0 %v375
    %v377 = vpop.xlane.xlu0 %376
    %vm378 = vcmp.eq.f32.partialorder %v375, %v377
    %v379 = vsel %vm378, %v374, inf
    %380 = vmin.xlane.f32.xlu0 %v379
    %v381 = vpop.xlane.xlu0 %380
    %v382 = vcvt.f32.s32 %v381
    %v383 = vcvt.f32.s32 %v377
    %v384 = vshll.u32 %v383, 16
    %v385 = vadd.s32 %v384, %v382
    %v386 = vsel %vm350, %v368, 2147483647
    %v387 = vand.u32 %v386, 65535
    %v388 = vshra.s32 %v386, 16
    %v389 = vcvt.s32.f32 %v387
    %v390 = vcvt.s32.f32 %v388
    %391 = vmin.xlane.f32.xlu0 %v390
    %v392 = vpop.xlane.xlu0 %391
    %vm393 = vcmp.eq.f32.partialorder %v390, %v392
    %v394 = vsel %vm393, %v389, inf
    %395 = vmin.xlane.f32.xlu0 %v394
    %v396 = vpop.xlane.xlu0 %395
    %v397 = vcvt.f32.s32 %v396
    %v398 = vcvt.f32.s32 %v392
    %v399 = vshll.u32 %v398, 16
    %v400 = vadd.s32 %v399, %v397
    %v401 = vsel %vm350, %v369, 2147483647
    %v402 = vand.u32 %v401, 65535
    %v403 = vshra.s32 %v401, 16
    %v404 = vcvt.s32.f32 %v402
    %v405 = vcvt.s32.f32 %v403
    %406 = vmin.xlane.f32.xlu0 %v405
    %v407 = vpop.xlane.xlu0 %406
    %vm408 = vcmp.eq.f32.partialorder %v405, %v407
    %v409 = vsel %vm408, %v404, inf
    %410 = vmin.xlane.f32.xlu0 %v409
    %v411 = vpop.xlane.xlu0 %410
    %v412 = vcvt.f32.s32 %v411
    %v413 = vcvt.f32.s32 %v407
    %v414 = vshll.u32 %v413, 16
    %v415 = vadd.s32 %v414, %v412
    %v416 = vsel %vm350, %v370, 2147483647
    %v417 = vand.u32 %v416, 65535
    %v418 = vshra.s32 %v416, 16
    %v419 = vcvt.s32.f32 %v417
    %v420 = vcvt.s32.f32 %v418
    %421 = vmin.xlane.f32.xlu0 %v420
    %v422 = vpop.xlane.xlu0 %421
    %vm423 = vcmp.eq.f32.partialorder %v420, %v422
    %v424 = vsel %vm423, %v419, inf
    %425 = vmin.xlane.f32.xlu0 %v424
    %v426 = vpop.xlane.xlu0 %425
    %v427 = vcvt.f32.s32 %v426
    %v428 = vcvt.f32.s32 %v422
    %v429 = vshll.u32 %v428, 16
    %v430 = vadd.s32 %v429, %v427
    %vm431 = vcmp.eq.s32.totalorder %v349, %v385
    %vm432 = vcmp.eq.s32.totalorder %v349, %v400
    %vm433 = vcmp.eq.s32.totalorder %v349, %v415
    %vm434 = vcmp.eq.s32.totalorder %v349, %v430
    %v435 = vsel %vm431, 1.0, 0.0
    %v436 = vsel %vm432, 1.0, 0.0
    %v437 = vsel %vm433, 1.0, 0.0
    %v438 = vsel %vm434, 1.0, 0.0
    %v439 = vpack.c.bf16 %v436, %v435
    %v440 = vpack.c.bf16 %v438, %v437
    %v442 = vsel %vm350, %v439, 0
    %444 = vmatprep.subr.bf16.mxu0 0
    %445 = vmatpush1.bf16.msra.mxu0 %v264
    %446 = vmatprep.subr.bf16.mxu0 0
    %447 = vmatpush1.bf16.msra.mxu0 0
    %448 = vmatprep.subr.bf16.mxu0 0
    %449 = vmatpush1.bf16.msra.mxu0 0
    %450 = vmatprep.subr.bf16.mxu0 0
    %451 = vmatpush1.bf16.msra.mxu0 0
    %452 = vmatprep.subr.bf16.mxu0 0
    %453 = vmatpush1.bf16.msra.mxu0 0
    %454 = vmatprep.subr.bf16.mxu0 0
    %455 = vmatpush1.bf16.msra.mxu0 0
    %456 = vmatprep.subr.bf16.mxu0 0
    %457 = vmatpush1.bf16.msra.mxu0 0
    %458 = vmatprep.subr.bf16.mxu0 0
    %459 = vmatpush1.bf16.msra.mxu0 0
    %460 = vmatprep.subr.bf16.mxu0 0
    %461 = vmatpush1.bf16.msra.mxu0 0
    %462 = vmatprep.subr.bf16.mxu0 0
    %463 = vmatpush1.bf16.msra.mxu0 0
    %464 = vmatprep.subr.bf16.mxu0 0
    %465 = vmatpush1.bf16.msra.mxu0 0
    %466 = vmatprep.subr.bf16.mxu0 0
    %467 = vmatpush1.bf16.msra.mxu0 0
    %468 = vmatprep.subr.bf16.mxu0 0
    %469 = vmatpush1.bf16.msra.mxu0 0
    %470 = vmatprep.subr.bf16.mxu0 0
    %471 = vmatpush1.bf16.msra.mxu0 0
    %472 = vmatprep.subr.bf16.mxu0 0
    %473 = vmatpush1.bf16.msra.mxu0 0
    %474 = vmatprep.subr.bf16.mxu0 0
    %475 = vmatpush1.bf16.msra.mxu0 0
    %476 = vmatprep.mubr.bf16.mxu0 0
    %477 = vmatmul.mubr.bf16.gmra.mrb[0].mxu0 %v442
    %v478 = vpop.f32.mrb[0].mxu0
    %v479 = vadd.f32 0.0, %v478
    %v480 = vpop.f32.mrb[0].mxu0
    %v481 = vpop.f32.mrb[0].mxu0
    %v482 = vadd.f32 0.0, %v481
    %v483 = vpop.f32.mrb[0].mxu0
    %484 = vdwg.mxu0
    %v486 = vsel %vm350, %v440, 0
    %488 = vmatprep.subr.bf16.mxu0 0
    %489 = vmatpush1.bf16.msra.mxu0 %v265
    %490 = vmatprep.subr.bf16.mxu0 0
    %491 = vmatpush1.bf16.msra.mxu0 0
    %492 = vmatprep.subr.bf16.mxu0 0
    %493 = vmatpush1.bf16.msra.mxu0 0
    %494 = vmatprep.subr.bf16.mxu0 0
    %495 = vmatpush1.bf16.msra.mxu0 0
    %496 = vmatprep.subr.bf16.mxu0 0
    %497 = vmatpush1.bf16.msra.mxu0 0
    %498 = vmatprep.subr.bf16.mxu0 0
    %499 = vmatpush1.bf16.msra.mxu0 0
    %500 = vmatprep.subr.bf16.mxu0 0
    %501 = vmatpush1.bf16.msra.mxu0 0
    %502 = vmatprep.subr.bf16.mxu0 0
    %503 = vmatpush1.bf16.msra.mxu0 0
    %504 = vmatprep.subr.bf16.mxu0 0
    %505 = vmatpush1.bf16.msra.mxu0 0
    %506 = vmatprep.subr.bf16.mxu0 0
    %507 = vmatpush1.bf16.msra.mxu0 0
    %508 = vmatprep.subr.bf16.mxu0 0
    %509 = vmatpush1.bf16.msra.mxu0 0
    %510 = vmatprep.subr.bf16.mxu0 0
    %511 = vmatpush1.bf16.msra.mxu0 0
    %512 = vmatprep.subr.bf16.mxu0 0
    %513 = vmatpush1.bf16.msra.mxu0 0
    %514 = vmatprep.subr.bf16.mxu0 0
    %515 = vmatpush1.bf16.msra.mxu0 0
    %516 = vmatprep.subr.bf16.mxu0 0
    %517 = vmatpush1.bf16.msra.mxu0 0
    %518 = vmatprep.subr.bf16.mxu0 0
    %519 = vmatpush1.bf16.msra.mxu0 0
    %520 = vmatprep.mubr.bf16.mxu0 0
    %521 = vmatmul.mubr.bf16.gmra.mrb[0].mxu0 %v486
    %v522 = vpop.f32.mrb[0].mxu0
    %v523 = vadd.f32 0.0, %v522
    %v524 = vpop.f32.mrb[0].mxu0
    %v525 = vpop.f32.mrb[0].mxu0
    %v526 = vadd.f32 0.0, %v525
    %v527 = vpop.f32.mrb[0].mxu0
    %528 = vdwg.mxu0
    %v529 = vsel %vm431, -inf, %v301
    %v530 = vsel %vm432, -inf, %v304
    %v531 = vsel %vm433, -inf, %v342
    %v532 = vsel %vm434, -inf, %v345
    %v533 = vsel %vm350, %v529, -inf
    %534 = vmax.xlane.f32.xlu0 %v533
    %v535 = vpop.xlane.xlu0 %534
    %v536 = vsel %vm350, %v530, -inf
    %537 = vmax.xlane.f32.xlu0 %v536
    %v538 = vpop.xlane.xlu0 %537
    %v539 = vsel %vm350, %v531, -inf
    %540 = vmax.xlane.f32.xlu0 %v539
    %v541 = vpop.xlane.xlu0 %540
    %v542 = vsel %vm350, %v532, -inf
    %543 = vmax.xlane.f32.xlu0 %v542
    %v544 = vpop.xlane.xlu0 %543
    %vm545 = vcmp.eq.f32.partialorder %v529, %v535
    %vm546 = vcmp.eq.f32.partialorder %v530, %v538
    %vm547 = vcmp.eq.f32.partialorder %v531, %v541
    %vm548 = vcmp.eq.f32.partialorder %v532, %v544
    %v549 = vsel %vm545, %v349, 16
    %v550 = vsel %vm546, %v349, 16
    %v551 = vsel %vm547, %v349, 16
    %v552 = vsel %vm548, %v349, 16
    %v553 = vsel %vm350, %v549, 2147483647
    %v554 = vand.u32 %v553, 65535
    %v555 = vshra.s32 %v553, 16
    %v556 = vcvt.s32.f32 %v554
    %v557 = vcvt.s32.f32 %v555
    %558 = vmin.xlane.f32.xlu0 %v557
    %v559 = vpop.xlane.xlu0 %558
    %vm560 = vcmp.eq.f32.partialorder %v557, %v559
    %v561 = vsel %vm560, %v556, inf
    %562 = vmin.xlane.f32.xlu0 %v561
    %v563 = vpop.xlane.xlu0 %562
    %v564 = vcvt.f32.s32 %v563
    %v565 = vcvt.f32.s32 %v559
    %v566 = vshll.u32 %v565, 16
    %v567 = vadd.s32 %v566, %v564
    %v568 = vsel %vm350, %v550, 2147483647
    %v569 = vand.u32 %v568, 65535
    %v570 = vshra.s32 %v568, 16
    %v571 = vcvt.s32.f32 %v569
    %v572 = vcvt.s32.f32 %v570
    %573 = vmin.xlane.f32.xlu0 %v572
    %v574 = vpop.xlane.xlu0 %573
    %vm575 = vcmp.eq.f32.partialorder %v572, %v574
    %v576 = vsel %vm575, %v571, inf
    %577 = vmin.xlane.f32.xlu0 %v576
    %v578 = vpop.xlane.xlu0 %577
    %v579 = vcvt.f32.s32 %v578
    %v580 = vcvt.f32.s32 %v574
    %v581 = vshll.u32 %v580, 16
    %v582 = vadd.s32 %v581, %v579
    %v583 = vsel %vm350, %v551, 2147483647
    %v584 = vand.u32 %v583, 65535
    %v585 = vshra.s32 %v583, 16
    %v586 = vcvt.s32.f32 %v584
    %v587 = vcvt.s32.f32 %v585
    %588 = vmin.xlane.f32.xlu0 %v587
    %v589 = vpop.xlane.xlu0 %588
    %vm590 = vcmp.eq.f32.partialorder %v587, %v589
    %v591 = vsel %vm590, %v586, inf
    %592 = vmin.xlane.f32.xlu0 %v591
    %v593 = vpop.xlane.xlu0 %592
    %v594 = vcvt.f32.s32 %v593
    %v595 = vcvt.f32.s32 %v589
    %v596 = vshll.u32 %v595, 16
    %v597 = vadd.s32 %v596, %v594
    %v598 = vsel %vm350, %v552, 2147483647
    %v599 = vand.u32 %v598, 65535
    %v600 = vshra.s32 %v598, 16
    %v601 = vcvt.s32.f32 %v599
    %v602 = vcvt.s32.f32 %v600
    %603 = vmin.xlane.f32.xlu0 %v602
    %v604 = vpop.xlane.xlu0 %603
    %vm605 = vcmp.eq.f32.partialorder %v602, %v604
    %v606 = vsel %vm605, %v601, inf
    %607 = vmin.xlane.f32.xlu0 %v606
    %v608 = vpop.xlane.xlu0 %607
    %v609 = vcvt.f32.s32 %v608
    %v610 = vcvt.f32.s32 %v604
    %v611 = vshll.u32 %v610, 16
    %v612 = vadd.s32 %v611, %v609
    %vm613 = vcmp.eq.s32.totalorder %v349, %v567
    %vm614 = vcmp.eq.s32.totalorder %v349, %v582
    %vm615 = vcmp.eq.s32.totalorder %v349, %v597
    %vm616 = vcmp.eq.s32.totalorder %v349, %v612
    %v617 = vsel %vm613, 1.0, 0.0
    %v618 = vsel %vm614, 1.0, 0.0
    %v619 = vsel %vm615, 1.0, 0.0
    %v620 = vsel %vm616, 1.0, 0.0
    %v621 = vpack.c.bf16 %v618, %v617
    %v622 = vpack.c.bf16 %v620, %v619
    %v624 = vsel %vm350, %v621, 0
    %626 = vmatprep.subr.bf16.mxu0 0
    %627 = vmatpush1.bf16.msra.mxu0 %v264
    %628 = vmatprep.subr.bf16.mxu0 0
    %629 = vmatpush1.bf16.msra.mxu0 0
    %630 = vmatprep.subr.bf16.mxu0 0
    %631 = vmatpush1.bf16.msra.mxu0 0
    %632 = vmatprep.subr.bf16.mxu0 0
    %633 = vmatpush1.bf16.msra.mxu0 0
    %634 = vmatprep.subr.bf16.mxu0 0
    %635 = vmatpush1.bf16.msra.mxu0 0
    %636 = vmatprep.subr.bf16.mxu0 0
    %637 = vmatpush1.bf16.msra.mxu0 0
    %638 = vmatprep.subr.bf16.mxu0 0
    %639 = vmatpush1.bf16.msra.mxu0 0
    %640 = vmatprep.subr.bf16.mxu0 0
    %641 = vmatpush1.bf16.msra.mxu0 0
    %642 = vmatprep.subr.bf16.mxu0 0
    %643 = vmatpush1.bf16.msra.mxu0 0
    %644 = vmatprep.subr.bf16.mxu0 0
    %645 = vmatpush1.bf16.msra.mxu0 0
    %646 = vmatprep.subr.bf16.mxu0 0
    %647 = vmatpush1.bf16.msra.mxu0 0
    %648 = vmatprep.subr.bf16.mxu0 0
    %649 = vmatpush1.bf16.msra.mxu0 0
    %650 = vmatprep.subr.bf16.mxu0 0
    %651 = vmatpush1.bf16.msra.mxu0 0
    %652 = vmatprep.subr.bf16.mxu0 0
    %653 = vmatpush1.bf16.msra.mxu0 0
    %654 = vmatprep.subr.bf16.mxu0 0
    %655 = vmatpush1.bf16.msra.mxu0 0
    %656 = vmatprep.subr.bf16.mxu0 0
    %657 = vmatpush1.bf16.msra.mxu0 0
    %658 = vmatprep.mubr.bf16.mxu0 0
    %659 = vmatmul.mubr.bf16.gmra.mrb[0].mxu0 %v624
    %v660 = vpop.f32.mrb[0].mxu0
    %v661 = vadd.f32 0.0, %v660
    %v662 = vpop.f32.mrb[0].mxu0
    %v663 = vpop.f32.mrb[0].mxu0
    %v664 = vadd.f32 0.0, %v663
    %v665 = vpop.f32.mrb[0].mxu0
    %666 = vdwg.mxu0
    %v668 = vsel %vm350, %v622, 0
    %670 = vmatprep.subr.bf16.mxu0 0
    %671 = vmatpush1.bf16.msra.mxu0 %v265
    %672 = vmatprep.subr.bf16.mxu0 0
    %673 = vmatpush1.bf16.msra.mxu0 0
    %674 = vmatprep.subr.bf16.mxu0 0
    %675 = vmatpush1.bf16.msra.mxu0 0
    %676 = vmatprep.subr.bf16.mxu0 0
    %677 = vmatpush1.bf16.msra.mxu0 0
    %678 = vmatprep.subr.bf16.mxu0 0
    %679 = vmatpush1.bf16.msra.mxu0 0
    %680 = vmatprep.subr.bf16.mxu0 0
    %681 = vmatpush1.bf16.msra.mxu0 0
    %682 = vmatprep.subr.bf16.mxu0 0
    %683 = vmatpush1.bf16.msra.mxu0 0
    %684 = vmatprep.subr.bf16.mxu0 0
    %685 = vmatpush1.bf16.msra.mxu0 0
    %686 = vmatprep.subr.bf16.mxu0 0
    %687 = vmatpush1.bf16.msra.mxu0 0
    %688 = vmatprep.subr.bf16.mxu0 0
    %689 = vmatpush1.bf16.msra.mxu0 0
    %690 = vmatprep.subr.bf16.mxu0 0
    %691 = vmatpush1.bf16.msra.mxu0 0
    %692 = vmatprep.subr.bf16.mxu0 0
    %693 = vmatpush1.bf16.msra.mxu0 0
    %694 = vmatprep.subr.bf16.mxu0 0
    %695 = vmatpush1.bf16.msra.mxu0 0
    %696 = vmatprep.subr.bf16.mxu0 0
    %697 = vmatpush1.bf16.msra.mxu0 0
    %698 = vmatprep.subr.bf16.mxu0 0
    %699 = vmatpush1.bf16.msra.mxu0 0
    %700 = vmatprep.subr.bf16.mxu0 0
    %701 = vmatpush1.bf16.msra.mxu0 0
    %702 = vmatprep.mubr.bf16.mxu0 0
    %703 = vmatmul.mubr.bf16.gmra.mrb[0].mxu0 %v668
    %v704 = vpop.f32.mrb[0].mxu0
    %v705 = vadd.f32 0.0, %v704
    %v706 = vpop.f32.mrb[0].mxu0
    %v707 = vpop.f32.mrb[0].mxu0
    %v708 = vadd.f32 0.0, %v707
    %v709 = vpop.f32.mrb[0].mxu0
    %710 = vdwg.mxu0
    %v711 = vmax.f32 %v479, %v661
    %v712 = vmax.f32 %v482, %v664
    %v713 = vmax.f32 %v523, %v705
    %v714 = vmax.f32 %v526, %v708
    %v715 = vsel %vm613, -inf, %v529
    %v716 = vsel %vm614, -inf, %v530
    %v717 = vsel %vm615, -inf, %v531
    %v718 = vsel %vm616, -inf, %v532
    %v719 = vsel %vm350, %v715, -inf
    %720 = vmax.xlane.f32.xlu0 %v719
    %v721 = vpop.xlane.xlu0 %720
    %v722 = vsel %vm350, %v716, -inf
    %723 = vmax.xlane.f32.xlu0 %v722
    %v724 = vpop.xlane.xlu0 %723
    %v725 = vsel %vm350, %v717, -inf
    %726 = vmax.xlane.f32.xlu0 %v725
    %v727 = vpop.xlane.xlu0 %726
    %v728 = vsel %vm350, %v718, -inf
    %729 = vmax.xlane.f32.xlu0 %v728
    %v730 = vpop.xlane.xlu0 %729
    %vm731 = vcmp.eq.f32.partialorder %v715, %v721
    %vm732 = vcmp.eq.f32.partialorder %v716, %v724
    %vm733 = vcmp.eq.f32.partialorder %v717, %v727
    %vm734 = vcmp.eq.f32.partialorder %v718, %v730
    %v735 = vsel %vm731, %v349, 16
    %v736 = vsel %vm732, %v349, 16
    %v737 = vsel %vm733, %v349, 16
    %v738 = vsel %vm734, %v349, 16
    %v739 = vsel %vm350, %v735, 2147483647
    %v740 = vand.u32 %v739, 65535
    %v741 = vshra.s32 %v739, 16
    %v742 = vcvt.s32.f32 %v740
    %v743 = vcvt.s32.f32 %v741
    %744 = vmin.xlane.f32.xlu0 %v743
    %v745 = vpop.xlane.xlu0 %744
    %vm746 = vcmp.eq.f32.partialorder %v743, %v745
    %v747 = vsel %vm746, %v742, inf
    %748 = vmin.xlane.f32.xlu0 %v747
    %v749 = vpop.xlane.xlu0 %748
    %v750 = vcvt.f32.s32 %v749
    %v751 = vcvt.f32.s32 %v745
    %v752 = vshll.u32 %v751, 16
    %v753 = vadd.s32 %v752, %v750
    %v754 = vsel %vm350, %v736, 2147483647
    %v755 = vand.u32 %v754, 65535
    %v756 = vshra.s32 %v754, 16
    %v757 = vcvt.s32.f32 %v755
    %v758 = vcvt.s32.f32 %v756
    %759 = vmin.xlane.f32.xlu0 %v758
    %v760 = vpop.xlane.xlu0 %759
    %vm761 = vcmp.eq.f32.partialorder %v758, %v760
    %v762 = vsel %vm761, %v757, inf
    %763 = vmin.xlane.f32.xlu0 %v762
    %v764 = vpop.xlane.xlu0 %763
    %v765 = vcvt.f32.s32 %v764
    %v766 = vcvt.f32.s32 %v760
    %v767 = vshll.u32 %v766, 16
    %v768 = vadd.s32 %v767, %v765
    %v769 = vsel %vm350, %v737, 2147483647
    %v770 = vand.u32 %v769, 65535
    %v771 = vshra.s32 %v769, 16
    %v772 = vcvt.s32.f32 %v770
    %v773 = vcvt.s32.f32 %v771
    %774 = vmin.xlane.f32.xlu0 %v773
    %v775 = vpop.xlane.xlu0 %774
    %vm776 = vcmp.eq.f32.partialorder %v773, %v775
    %v777 = vsel %vm776, %v772, inf
    %778 = vmin.xlane.f32.xlu0 %v777
    %v779 = vpop.xlane.xlu0 %778
    %v780 = vcvt.f32.s32 %v779
    %v781 = vcvt.f32.s32 %v775
    %v782 = vshll.u32 %v781, 16
    %v783 = vadd.s32 %v782, %v780
    %v784 = vsel %vm350, %v738, 2147483647
    %v785 = vand.u32 %v784, 65535
    %v786 = vshra.s32 %v784, 16
    %v787 = vcvt.s32.f32 %v785
    %v788 = vcvt.s32.f32 %v786
    %789 = vmin.xlane.f32.xlu0 %v788
    %v790 = vpop.xlane.xlu0 %789
    %vm791 = vcmp.eq.f32.partialorder %v788, %v790
    %v792 = vsel %vm791, %v787, inf
    %793 = vmin.xlane.f32.xlu0 %v792
    %v794 = vpop.xlane.xlu0 %793
    %v795 = vcvt.f32.s32 %v794
    %v796 = vcvt.f32.s32 %v790
    %v797 = vshll.u32 %v796, 16
    %v798 = vadd.s32 %v797, %v795
    %vm799 = vcmp.eq.s32.totalorder %v349, %v753
    %vm800 = vcmp.eq.s32.totalorder %v349, %v768
    %vm801 = vcmp.eq.s32.totalorder %v349, %v783
    %vm802 = vcmp.eq.s32.totalorder %v349, %v798
    %v803 = vsel %vm799, 1.0, 0.0
    %v804 = vsel %vm800, 1.0, 0.0
    %v805 = vsel %vm801, 1.0, 0.0
    %v806 = vsel %vm802, 1.0, 0.0
    %v807 = vpack.c.bf16 %v804, %v803
    %v808 = vpack.c.bf16 %v806, %v805
    %v810 = vsel %vm350, %v807, 0
    %812 = vmatprep.subr.bf16.mxu0 0
    %813 = vmatpush1.bf16.msra.mxu0 %v264
    %814 = vmatprep.subr.bf16.mxu0 0
    %815 = vmatpush1.bf16.msra.mxu0 0
    %816 = vmatprep.subr.bf16.mxu0 0
    %817 = vmatpush1.bf16.msra.mxu0 0
    %818 = vmatprep.subr.bf16.mxu0 0
    %819 = vmatpush1.bf16.msra.mxu0 0
    %820 = vmatprep.subr.bf16.mxu0 0
    %821 = vmatpush1.bf16.msra.mxu0 0
    %822 = vmatprep.subr.bf16.mxu0 0
    %823 = vmatpush1.bf16.msra.mxu0 0
    %824 = vmatprep.subr.bf16.mxu0 0
    %825 = vmatpush1.bf16.msra.mxu0 0
    %826 = vmatprep.subr.bf16.mxu0 0
    %827 = vmatpush1.bf16.msra.mxu0 0
    %828 = vmatprep.subr.bf16.mxu0 0
    %829 = vmatpush1.bf16.msra.mxu0 0
    %830 = vmatprep.subr.bf16.mxu0 0
    %831 = vmatpush1.bf16.msra.mxu0 0
    %832 = vmatprep.subr.bf16.mxu0 0
    %833 = vmatpush1.bf16.msra.mxu0 0
    %834 = vmatprep.subr.bf16.mxu0 0
    %835 = vmatpush1.bf16.msra.mxu0 0
    %836 = vmatprep.subr.bf16.mxu0 0
    %837 = vmatpush1.bf16.msra.mxu0 0
    %838 = vmatprep.subr.bf16.mxu0 0
    %839 = vmatpush1.bf16.msra.mxu0 0
    %840 = vmatprep.subr.bf16.mxu0 0
    %841 = vmatpush1.bf16.msra.mxu0 0
    %842 = vmatprep.subr.bf16.mxu0 0
    %843 = vmatpush1.bf16.msra.mxu0 0
    %844 = vmatprep.mubr.bf16.mxu0 0
    %845 = vmatmul.mubr.bf16.gmra.mrb[0].mxu0 %v810
    %v846 = vpop.f32.mrb[0].mxu0
    %v847 = vadd.f32 0.0, %v846
    %v848 = vpop.f32.mrb[0].mxu0
    %v849 = vpop.f32.mrb[0].mxu0
    %v850 = vadd.f32 0.0, %v849
    %v851 = vpop.f32.mrb[0].mxu0
    %852 = vdwg.mxu0
    %v854 = vsel %vm350, %v808, 0
    %856 = vmatprep.subr.bf16.mxu0 0
    %857 = vmatpush1.bf16.msra.mxu0 %v265
    %858 = vmatprep.subr.bf16.mxu0 0
    %859 = vmatpush1.bf16.msra.mxu0 0
    %860 = vmatprep.subr.bf16.mxu0 0
    %861 = vmatpush1.bf16.msra.mxu0 0
    %862 = vmatprep.subr.bf16.mxu0 0
    %863 = vmatpush1.bf16.msra.mxu0 0
    %864 = vmatprep.subr.bf16.mxu0 0
    %865 = vmatpush1.bf16.msra.mxu0 0
    %866 = vmatprep.subr.bf16.mxu0 0
    %867 = vmatpush1.bf16.msra.mxu0 0
    %868 = vmatprep.subr.bf16.mxu0 0
    %869 = vmatpush1.bf16.msra.mxu0 0
    %870 = vmatprep.subr.bf16.mxu0 0
    %871 = vmatpush1.bf16.msra.mxu0 0
    %872 = vmatprep.subr.bf16.mxu0 0
    %873 = vmatpush1.bf16.msra.mxu0 0
    %874 = vmatprep.subr.bf16.mxu0 0
    %875 = vmatpush1.bf16.msra.mxu0 0
    %876 = vmatprep.subr.bf16.mxu0 0
    %877 = vmatpush1.bf16.msra.mxu0 0
    %878 = vmatprep.subr.bf16.mxu0 0
    %879 = vmatpush1.bf16.msra.mxu0 0
    %880 = vmatprep.subr.bf16.mxu0 0
    %881 = vmatpush1.bf16.msra.mxu0 0
    %882 = vmatprep.subr.bf16.mxu0 0
    %883 = vmatpush1.bf16.msra.mxu0 0
    %884 = vmatprep.subr.bf16.mxu0 0
    %885 = vmatpush1.bf16.msra.mxu0 0
    %886 = vmatprep.subr.bf16.mxu0 0
    %887 = vmatpush1.bf16.msra.mxu0 0
    %888 = vmatprep.mubr.bf16.mxu0 0
    %889 = vmatmul.mubr.bf16.gmra.mrb[0].mxu0 %v854
    %v890 = vpop.f32.mrb[0].mxu0
    %v891 = vadd.f32 0.0, %v890
    %v892 = vpop.f32.mrb[0].mxu0
    %v893 = vpop.f32.mrb[0].mxu0
    %v894 = vadd.f32 0.0, %v893
    %v895 = vpop.f32.mrb[0].mxu0
    %896 = vdwg.mxu0
    %v897 = vmax.f32 %v711, %v847
    %v898 = vmax.f32 %v712, %v850
    %v899 = vmax.f32 %v713, %v891
    %v900 = vmax.f32 %v714, %v894
    %v901 = vsel %vm799, -inf, %v715
    %v902 = vsel %vm800, -inf, %v716
    %v903 = vsel %vm801, -inf, %v717
    %v904 = vsel %vm802, -inf, %v718
    %v905 = vsel %vm350, %v901, -inf
    %906 = vmax.xlane.f32.xlu0 %v905
    %v907 = vpop.xlane.xlu0 %906
    %v908 = vsel %vm350, %v902, -inf
    %909 = vmax.xlane.f32.xlu0 %v908
    %v910 = vpop.xlane.xlu0 %909
    %v911 = vsel %vm350, %v903, -inf
    %912 = vmax.xlane.f32.xlu0 %v911
    %v913 = vpop.xlane.xlu0 %912
    %v914 = vsel %vm350, %v904, -inf
    %915 = vmax.xlane.f32.xlu0 %v914
    %v916 = vpop.xlane.xlu0 %915
    %vm917 = vcmp.eq.f32.partialorder %v901, %v907
    %vm918 = vcmp.eq.f32.partialorder %v902, %v910
    %vm919 = vcmp.eq.f32.partialorder %v903, %v913
    %vm920 = vcmp.eq.f32.partialorder %v904, %v916
    %v921 = vsel %vm917, %v349, 16
    %v922 = vsel %vm918, %v349, 16
    %v923 = vsel %vm919, %v349, 16
    %v924 = vsel %vm920, %v349, 16
    %v925 = vsel %vm350, %v921, 2147483647
    %v926 = vand.u32 %v925, 65535
    %v927 = vshra.s32 %v925, 16
    %v928 = vcvt.s32.f32 %v926
    %v929 = vcvt.s32.f32 %v927
    %930 = vmin.xlane.f32.xlu0 %v929
    %v931 = vpop.xlane.xlu0 %930
    %vm932 = vcmp.eq.f32.partialorder %v929, %v931
    %v933 = vsel %vm932, %v928, inf
    %934 = vmin.xlane.f32.xlu0 %v933
    %v935 = vpop.xlane.xlu0 %934
    %v936 = vcvt.f32.s32 %v935
    %v937 = vcvt.f32.s32 %v931
    %v938 = vshll.u32 %v937, 16
    %v939 = vadd.s32 %v938, %v936
    %v940 = vsel %vm350, %v922, 2147483647
    %v941 = vand.u32 %v940, 65535
    %v942 = vshra.s32 %v940, 16
    %v943 = vcvt.s32.f32 %v941
    %v944 = vcvt.s32.f32 %v942
    %945 = vmin.xlane.f32.xlu0 %v944
    %v946 = vpop.xlane.xlu0 %945
    %vm947 = vcmp.eq.f32.partialorder %v944, %v946
    %v948 = vsel %vm947, %v943, inf
    %949 = vmin.xlane.f32.xlu0 %v948
    %v950 = vpop.xlane.xlu0 %949
    %v951 = vcvt.f32.s32 %v950
    %v952 = vcvt.f32.s32 %v946
    %v953 = vshll.u32 %v952, 16
    %v954 = vadd.s32 %v953, %v951
    %v955 = vsel %vm350, %v923, 2147483647
    %v956 = vand.u32 %v955, 65535
    %v957 = vshra.s32 %v955, 16
    %v958 = vcvt.s32.f32 %v956
    %v959 = vcvt.s32.f32 %v957
    %960 = vmin.xlane.f32.xlu0 %v959
    %v961 = vpop.xlane.xlu0 %960
    %vm962 = vcmp.eq.f32.partialorder %v959, %v961
    %v963 = vsel %vm962, %v958, inf
    %964 = vmin.xlane.f32.xlu0 %v963
    %v965 = vpop.xlane.xlu0 %964
    %v966 = vcvt.f32.s32 %v965
    %v967 = vcvt.f32.s32 %v961
    %v968 = vshll.u32 %v967, 16
    %v969 = vadd.s32 %v968, %v966
    %v970 = vsel %vm350, %v924, 2147483647
    %v971 = vand.u32 %v970, 65535
    %v972 = vshra.s32 %v970, 16
    %v973 = vcvt.s32.f32 %v971
    %v974 = vcvt.s32.f32 %v972
    %975 = vmin.xlane.f32.xlu0 %v974
    %v976 = vpop.xlane.xlu0 %975
    %vm977 = vcmp.eq.f32.partialorder %v974, %v976
    %v978 = vsel %vm977, %v973, inf
    %979 = vmin.xlane.f32.xlu0 %v978
    %v980 = vpop.xlane.xlu0 %979
    %v981 = vcvt.f32.s32 %v980
    %v982 = vcvt.f32.s32 %v976
    %v983 = vshll.u32 %v982, 16
    %v984 = vadd.s32 %v983, %v981
    %vm985 = vcmp.eq.s32.totalorder %v349, %v939
    %vm986 = vcmp.eq.s32.totalorder %v349, %v954
    %vm987 = vcmp.eq.s32.totalorder %v349, %v969
    %vm988 = vcmp.eq.s32.totalorder %v349, %v984
    %v989 = vsel %vm985, 1.0, 0.0
    %v990 = vsel %vm986, 1.0, 0.0
    %v991 = vsel %vm987, 1.0, 0.0
    %v992 = vsel %vm988, 1.0, 0.0
    %v993 = vpack.c.bf16 %v990, %v989
    %v994 = vpack.c.bf16 %v992, %v991
    %v996 = vsel %vm350, %v993, 0
    %998 = vmatprep.subr.bf16.mxu0 0
    %999 = vmatpush1.bf16.msra.mxu0 %v264
    %1000 = vmatprep.subr.bf16.mxu0 0
    %1001 = vmatpush1.bf16.msra.mxu0 0
    %1002 = vmatprep.subr.bf16.mxu0 0
    %1003 = vmatpush1.bf16.msra.mxu0 0
    %1004 = vmatprep.subr.bf16.mxu0 0
    %1005 = vmatpush1.bf16.msra.mxu0 0
    %1006 = vmatprep.subr.bf16.mxu0 0
    %1007 = vmatpush1.bf16.msra.mxu0 0
    %1008 = vmatprep.subr.bf16.mxu0 0
    %1009 = vmatpush1.bf16.msra.mxu0 0
    %1010 = vmatprep.subr.bf16.mxu0 0
    %1011 = vmatpush1.bf16.msra.mxu0 0
    %1012 = vmatprep.subr.bf16.mxu0 0
    %1013 = vmatpush1.bf16.msra.mxu0 0
    %1014 = vmatprep.subr.bf16.mxu0 0
    %1015 = vmatpush1.bf16.msra.mxu0 0
    %1016 = vmatprep.subr.bf16.mxu0 0
    %1017 = vmatpush1.bf16.msra.mxu0 0
    %1018 = vmatprep.subr.bf16.mxu0 0
    %1019 = vmatpush1.bf16.msra.mxu0 0
    %1020 = vmatprep.subr.bf16.mxu0 0
    %1021 = vmatpush1.bf16.msra.mxu0 0
    %1022 = vmatprep.subr.bf16.mxu0 0
    %1023 = vmatpush1.bf16.msra.mxu0 0
    %1024 = vmatprep.subr.bf16.mxu0 0
    %1025 = vmatpush1.bf16.msra.mxu0 0
    %1026 = vmatprep.subr.bf16.mxu0 0
    %1027 = vmatpush1.bf16.msra.mxu0 0
    %1028 = vmatprep.subr.bf16.mxu0 0
    %1029 = vmatpush1.bf16.msra.mxu0 0
    %1030 = vmatprep.mubr.bf16.mxu0 0
    %1031 = vmatmul.mubr.bf16.gmra.mrb[0].mxu0 %v996
    %v1032 = vpop.f32.mrb[0].mxu0
    %v1033 = vadd.f32 0.0, %v1032
    %v1034 = vpop.f32.mrb[0].mxu0
    %v1035 = vpop.f32.mrb[0].mxu0
    %v1036 = vadd.f32 0.0, %v1035
    %v1037 = vpop.f32.mrb[0].mxu0
    %1038 = vdwg.mxu0
    %v1040 = vsel %vm350, %v994, 0
    %1042 = vmatprep.subr.bf16.mxu0 0
    %1043 = vmatpush1.bf16.msra.mxu0 %v265
    %1044 = vmatprep.subr.bf16.mxu0 0
    %1045 = vmatpush1.bf16.msra.mxu0 0
    %1046 = vmatprep.subr.bf16.mxu0 0
    %1047 = vmatpush1.bf16.msra.mxu0 0
    %1048 = vmatprep.subr.bf16.mxu0 0
    %1049 = vmatpush1.bf16.msra.mxu0 0
    %1050 = vmatprep.subr.bf16.mxu0 0
    %1051 = vmatpush1.bf16.msra.mxu0 0
    %1052 = vmatprep.subr.bf16.mxu0 0
    %1053 = vmatpush1.bf16.msra.mxu0 0
    %1054 = vmatprep.subr.bf16.mxu0 0
    %1055 = vmatpush1.bf16.msra.mxu0 0
    %1056 = vmatprep.subr.bf16.mxu0 0
    %1057 = vmatpush1.bf16.msra.mxu0 0
    %1058 = vmatprep.subr.bf16.mxu0 0
    %1059 = vmatpush1.bf16.msra.mxu0 0
    %1060 = vmatprep.subr.bf16.mxu0 0
    %1061 = vmatpush1.bf16.msra.mxu0 0
    %1062 = vmatprep.subr.bf16.mxu0 0
    %1063 = vmatpush1.bf16.msra.mxu0 0
    %1064 = vmatprep.subr.bf16.mxu0 0
    %1065 = vmatpush1.bf16.msra.mxu0 0
    %1066 = vmatprep.subr.bf16.mxu0 0
    %1067 = vmatpush1.bf16.msra.mxu0 0
    %1068 = vmatprep.subr.bf16.mxu0 0
    %1069 = vmatpush1.bf16.msra.mxu0 0
    %1070 = vmatprep.subr.bf16.mxu0 0
    %1071 = vmatpush1.bf16.msra.mxu0 0
    %1072 = vmatprep.subr.bf16.mxu0 0
    %1073 = vmatpush1.bf16.msra.mxu0 0
    %1074 = vmatprep.mubr.bf16.mxu0 0
    %1075 = vmatmul.mubr.bf16.gmra.mrb[0].mxu0 %v1040
    %v1076 = vpop.f32.mrb[0].mxu0
    %v1077 = vadd.f32 0.0, %v1076
    %v1078 = vpop.f32.mrb[0].mxu0
    %v1079 = vpop.f32.mrb[0].mxu0
    %v1080 = vadd.f32 0.0, %v1079
    %v1081 = vpop.f32.mrb[0].mxu0
    %1082 = vdwg.mxu0
    %v1083 = vmax.f32 %v897, %v1033
    %v1084 = vmax.f32 %v898, %v1036
    %v1085 = vmax.f32 %v899, %v1077
    %v1086 = vmax.f32 %v900, %v1080
    %v1087 = vsel %vm985, -inf, %v901
    %v1088 = vsel %vm986, -inf, %v902
    %v1089 = vsel %vm987, -inf, %v903
    %v1090 = vsel %vm988, -inf, %v904
    %v1091 = vsel %vm350, %v1087, -inf
    %1092 = vmax.xlane.f32.xlu0 %v1091
    %v1093 = vpop.xlane.xlu0 %1092
    %v1094 = vsel %vm350, %v1088, -inf
    %1095 = vmax.xlane.f32.xlu0 %v1094
    %v1096 = vpop.xlane.xlu0 %1095
    %v1097 = vsel %vm350, %v1089, -inf
    %1098 = vmax.xlane.f32.xlu0 %v1097
    %v1099 = vpop.xlane.xlu0 %1098
    %v1100 = vsel %vm350, %v1090, -inf
    %1101 = vmax.xlane.f32.xlu0 %v1100
    %v1102 = vpop.xlane.xlu0 %1101
    %vm1103 = vcmp.eq.f32.partialorder %v1087, %v1093
    %vm1104 = vcmp.eq.f32.partialorder %v1088, %v1096
    %vm1105 = vcmp.eq.f32.partialorder %v1089, %v1099
    %vm1106 = vcmp.eq.f32.partialorder %v1090, %v1102
    %v1107 = vsel %vm1103, %v349, 16
    %v1108 = vsel %vm1104, %v349, 16
    %v1109 = vsel %vm1105, %v349, 16
    %v1110 = vsel %vm1106, %v349, 16
    %v1111 = vsel %vm350, %v1107, 2147483647
    %v1112 = vand.u32 %v1111, 65535
    %v1113 = vshra.s32 %v1111, 16
    %v1114 = vcvt.s32.f32 %v1112
    %v1115 = vcvt.s32.f32 %v1113
    %1116 = vmin.xlane.f32.xlu0 %v1115
    %v1117 = vpop.xlane.xlu0 %1116
    %vm1118 = vcmp.eq.f32.partialorder %v1115, %v1117
    %v1119 = vsel %vm1118, %v1114, inf
    %1120 = vmin.xlane.f32.xlu0 %v1119
    %v1121 = vpop.xlane.xlu0 %1120
    %v1122 = vcvt.f32.s32 %v1121
    %v1123 = vcvt.f32.s32 %v1117
    %v1124 = vshll.u32 %v1123, 16
    %v1125 = vadd.s32 %v1124, %v1122
    %v1126 = vsel %vm350, %v1108, 2147483647
    %v1127 = vand.u32 %v1126, 65535
    %v1128 = vshra.s32 %v1126, 16
    %v1129 = vcvt.s32.f32 %v1127
    %v1130 = vcvt.s32.f32 %v1128
    %1131 = vmin.xlane.f32.xlu0 %v1130
    %v1132 = vpop.xlane.xlu0 %1131
    %vm1133 = vcmp.eq.f32.partialorder %v1130, %v1132
    %v1134 = vsel %vm1133, %v1129, inf
    %1135 = vmin.xlane.f32.xlu0 %v1134
    %v1136 = vpop.xlane.xlu0 %1135
    %v1137 = vcvt.f32.s32 %v1136
    %v1138 = vcvt.f32.s32 %v1132
    %v1139 = vshll.u32 %v1138, 16
    %v1140 = vadd.s32 %v1139, %v1137
    %v1141 = vsel %vm350, %v1109, 2147483647
    %v1142 = vand.u32 %v1141, 65535
    %v1143 = vshra.s32 %v1141, 16
    %v1144 = vcvt.s32.f32 %v1142
    %v1145 = vcvt.s32.f32 %v1143
    %1146 = vmin.xlane.f32.xlu0 %v1145
    %v1147 = vpop.xlane.xlu0 %1146
    %vm1148 = vcmp.eq.f32.partialorder %v1145, %v1147
    %v1149 = vsel %vm1148, %v1144, inf
    %1150 = vmin.xlane.f32.xlu0 %v1149
    %v1151 = vpop.xlane.xlu0 %1150
    %v1152 = vcvt.f32.s32 %v1151
    %v1153 = vcvt.f32.s32 %v1147
    %v1154 = vshll.u32 %v1153, 16
    %v1155 = vadd.s32 %v1154, %v1152
    %v1156 = vsel %vm350, %v1110, 2147483647
    %v1157 = vand.u32 %v1156, 65535
    %v1158 = vshra.s32 %v1156, 16
    %v1159 = vcvt.s32.f32 %v1157
    %v1160 = vcvt.s32.f32 %v1158
    %1161 = vmin.xlane.f32.xlu0 %v1160
    %v1162 = vpop.xlane.xlu0 %1161
    %vm1163 = vcmp.eq.f32.partialorder %v1160, %v1162
    %v1164 = vsel %vm1163, %v1159, inf
    %1165 = vmin.xlane.f32.xlu0 %v1164
    %v1166 = vpop.xlane.xlu0 %1165
    %v1167 = vcvt.f32.s32 %v1166
    %v1168 = vcvt.f32.s32 %v1162
    %v1169 = vshll.u32 %v1168, 16
    %v1170 = vadd.s32 %v1169, %v1167
    %vm1171 = vcmp.eq.s32.totalorder %v349, %v1125
    %vm1172 = vcmp.eq.s32.totalorder %v349, %v1140
    %vm1173 = vcmp.eq.s32.totalorder %v349, %v1155
    %vm1174 = vcmp.eq.s32.totalorder %v349, %v1170
    %v1175 = vsel %vm1171, 1.0, 0.0
    %v1176 = vsel %vm1172, 1.0, 0.0
    %v1177 = vsel %vm1173, 1.0, 0.0
    %v1178 = vsel %vm1174, 1.0, 0.0
    %v1179 = vpack.c.bf16 %v1176, %v1175
    %v1180 = vpack.c.bf16 %v1178, %v1177
    %v1182 = vsel %vm350, %v1179, 0
    %1184 = vmatprep.subr.bf16.mxu0 0
    %1185 = vmatpush1.bf16.msra.mxu0 %v264
    %1186 = vmatprep.subr.bf16.mxu0 0
    %1187 = vmatpush1.bf16.msra.mxu0 0
    %1188 = vmatprep.subr.bf16.mxu0 0
    %1189 = vmatpush1.bf16.msra.mxu0 0
    %1190 = vmatprep.subr.bf16.mxu0 0
    %1191 = vmatpush1.bf16.msra.mxu0 0
    %1192 = vmatprep.subr.bf16.mxu0 0
    %1193 = vmatpush1.bf16.msra.mxu0 0
    %1194 = vmatprep.subr.bf16.mxu0 0
    %1195 = vmatpush1.bf16.msra.mxu0 0
    %1196 = vmatprep.subr.bf16.mxu0 0
    %1197 = vmatpush1.bf16.msra.mxu0 0
    %1198 = vmatprep.subr.bf16.mxu0 0
    %1199 = vmatpush1.bf16.msra.mxu0 0
    %1200 = vmatprep.subr.bf16.mxu0 0
    %1201 = vmatpush1.bf16.msra.mxu0 0
    %1202 = vmatprep.subr.bf16.mxu0 0
    %1203 = vmatpush1.bf16.msra.mxu0 0
    %1204 = vmatprep.subr.bf16.mxu0 0
    %1205 = vmatpush1.bf16.msra.mxu0 0
    %1206 = vmatprep.subr.bf16.mxu0 0
    %1207 = vmatpush1.bf16.msra.mxu0 0
    %1208 = vmatprep.subr.bf16.mxu0 0
    %1209 = vmatpush1.bf16.msra.mxu0 0
    %1210 = vmatprep.subr.bf16.mxu0 0
    %1211 = vmatpush1.bf16.msra.mxu0 0
    %1212 = vmatprep.subr.bf16.mxu0 0
    %1213 = vmatpush1.bf16.msra.mxu0 0
    %1214 = vmatprep.subr.bf16.mxu0 0
    %1215 = vmatpush1.bf16.msra.mxu0 0
    %1216 = vmatprep.mubr.bf16.mxu0 0
    %1217 = vmatmul.mubr.bf16.gmra.mrb[0].mxu0 %v1182
    %v1218 = vpop.f32.mrb[0].mxu0
    %v1219 = vadd.f32 0.0, %v1218
    %v1220 = vpop.f32.mrb[0].mxu0
    %v1221 = vpop.f32.mrb[0].mxu0
    %v1222 = vadd.f32 0.0, %v1221
    %v1223 = vpop.f32.mrb[0].mxu0
    %1224 = vdwg.mxu0
    %v1226 = vsel %vm350, %v1180, 0
    %1228 = vmatprep.subr.bf16.mxu0 0
    %1229 = vmatpush1.bf16.msra.mxu0 %v265
    %1230 = vmatprep.subr.bf16.mxu0 0
    %1231 = vmatpush1.bf16.msra.mxu0 0
    %1232 = vmatprep.subr.bf16.mxu0 0
    %1233 = vmatpush1.bf16.msra.mxu0 0
    %1234 = vmatprep.subr.bf16.mxu0 0
    %1235 = vmatpush1.bf16.msra.mxu0 0
    %1236 = vmatprep.subr.bf16.mxu0 0
    %1237 = vmatpush1.bf16.msra.mxu0 0
    %1238 = vmatprep.subr.bf16.mxu0 0
    %1239 = vmatpush1.bf16.msra.mxu0 0
    %1240 = vmatprep.subr.bf16.mxu0 0
    %1241 = vmatpush1.bf16.msra.mxu0 0
    %1242 = vmatprep.subr.bf16.mxu0 0
    %1243 = vmatpush1.bf16.msra.mxu0 0
    %1244 = vmatprep.subr.bf16.mxu0 0
    %1245 = vmatpush1.bf16.msra.mxu0 0
    %1246 = vmatprep.subr.bf16.mxu0 0
    %1247 = vmatpush1.bf16.msra.mxu0 0
    %1248 = vmatprep.subr.bf16.mxu0 0
    %1249 = vmatpush1.bf16.msra.mxu0 0
    %1250 = vmatprep.subr.bf16.mxu0 0
    %1251 = vmatpush1.bf16.msra.mxu0 0
    %1252 = vmatprep.subr.bf16.mxu0 0
    %1253 = vmatpush1.bf16.msra.mxu0 0
    %1254 = vmatprep.subr.bf16.mxu0 0
    %1255 = vmatpush1.bf16.msra.mxu0 0
    %1256 = vmatprep.subr.bf16.mxu0 0
    %1257 = vmatpush1.bf16.msra.mxu0 0
    %1258 = vmatprep.subr.bf16.mxu0 0
    %1259 = vmatpush1.bf16.msra.mxu0 0
    %1260 = vmatprep.mubr.bf16.mxu0 0
    %1261 = vmatmul.mubr.bf16.gmra.mrb[0].mxu0 %v1226
    %v1262 = vpop.f32.mrb[0].mxu0
    %v1263 = vadd.f32 0.0, %v1262
    %v1264 = vpop.f32.mrb[0].mxu0
    %v1265 = vpop.f32.mrb[0].mxu0
    %v1266 = vadd.f32 0.0, %v1265
    %v1267 = vpop.f32.mrb[0].mxu0
    %1268 = vdwg.mxu0
    %v1269 = vmax.f32 %v1083, %v1219
    %v1270 = vmax.f32 %v1084, %v1222
    %v1271 = vmax.f32 %v1085, %v1263
    %v1272 = vmax.f32 %v1086, %v1266
    %v1273 = vsel %vm1171, -inf, %v1087
    %v1274 = vsel %vm1172, -inf, %v1088
    %v1275 = vsel %vm1173, -inf, %v1089
    %v1276 = vsel %vm1174, -inf, %v1090
    %v1277 = vsel %vm350, %v1273, -inf
    %1278 = vmax.xlane.f32.xlu0 %v1277
    %v1279 = vpop.xlane.xlu0 %1278
    %v1280 = vsel %vm350, %v1274, -inf
    %1281 = vmax.xlane.f32.xlu0 %v1280
    %v1282 = vpop.xlane.xlu0 %1281
    %v1283 = vsel %vm350, %v1275, -inf
    %1284 = vmax.xlane.f32.xlu0 %v1283
    %v1285 = vpop.xlane.xlu0 %1284
    %v1286 = vsel %vm350, %v1276, -inf
    %1287 = vmax.xlane.f32.xlu0 %v1286
    %v1288 = vpop.xlane.xlu0 %1287
    %vm1289 = vcmp.eq.f32.partialorder %v1273, %v1279
    %vm1290 = vcmp.eq.f32.partialorder %v1274, %v1282
    %vm1291 = vcmp.eq.f32.partialorder %v1275, %v1285
    %vm1292 = vcmp.eq.f32.partialorder %v1276, %v1288
    %v1293 = vsel %vm1289, %v349, 16
    %v1294 = vsel %vm1290, %v349, 16
    %v1295 = vsel %vm1291, %v349, 16
    %v1296 = vsel %vm1292, %v349, 16
    %v1297 = vsel %vm350, %v1293, 2147483647
    %v1298 = vand.u32 %v1297, 65535
    %v1299 = vshra.s32 %v1297, 16
    %v1300 = vcvt.s32.f32 %v1298
    %v1301 = vcvt.s32.f32 %v1299
    %1302 = vmin.xlane.f32.xlu0 %v1301
    %v1303 = vpop.xlane.xlu0 %1302
    %vm1304 = vcmp.eq.f32.partialorder %v1301, %v1303
    %v1305 = vsel %vm1304, %v1300, inf
    %1306 = vmin.xlane.f32.xlu0 %v1305
    %v1307 = vpop.xlane.xlu0 %1306
    %v1308 = vcvt.f32.s32 %v1307
    %v1309 = vcvt.f32.s32 %v1303
    %v1310 = vshll.u32 %v1309, 16
    %v1311 = vadd.s32 %v1310, %v1308
    %v1312 = vsel %vm350, %v1294, 2147483647
    %v1313 = vand.u32 %v1312, 65535
    %v1314 = vshra.s32 %v1312, 16
    %v1315 = vcvt.s32.f32 %v1313
    %v1316 = vcvt.s32.f32 %v1314
    %1317 = vmin.xlane.f32.xlu0 %v1316
    %v1318 = vpop.xlane.xlu0 %1317
    %vm1319 = vcmp.eq.f32.partialorder %v1316, %v1318
    %v1320 = vsel %vm1319, %v1315, inf
    %1321 = vmin.xlane.f32.xlu0 %v1320
    %v1322 = vpop.xlane.xlu0 %1321
    %v1323 = vcvt.f32.s32 %v1322
    %v1324 = vcvt.f32.s32 %v1318
    %v1325 = vshll.u32 %v1324, 16
    %v1326 = vadd.s32 %v1325, %v1323
    %v1327 = vsel %vm350, %v1295, 2147483647
    %v1328 = vand.u32 %v1327, 65535
    %v1329 = vshra.s32 %v1327, 16
    %v1330 = vcvt.s32.f32 %v1328
    %v1331 = vcvt.s32.f32 %v1329
    %1332 = vmin.xlane.f32.xlu0 %v1331
    %v1333 = vpop.xlane.xlu0 %1332
    %vm1334 = vcmp.eq.f32.partialorder %v1331, %v1333
    %v1335 = vsel %vm1334, %v1330, inf
    %1336 = vmin.xlane.f32.xlu0 %v1335
    %v1337 = vpop.xlane.xlu0 %1336
    %v1338 = vcvt.f32.s32 %v1337
    %v1339 = vcvt.f32.s32 %v1333
    %v1340 = vshll.u32 %v1339, 16
    %v1341 = vadd.s32 %v1340, %v1338
    %v1342 = vsel %vm350, %v1296, 2147483647
    %v1343 = vand.u32 %v1342, 65535
    %v1344 = vshra.s32 %v1342, 16
    %v1345 = vcvt.s32.f32 %v1343
    %v1346 = vcvt.s32.f32 %v1344
    %1347 = vmin.xlane.f32.xlu0 %v1346
    %v1348 = vpop.xlane.xlu0 %1347
    %vm1349 = vcmp.eq.f32.partialorder %v1346, %v1348
    %v1350 = vsel %vm1349, %v1345, inf
    %1351 = vmin.xlane.f32.xlu0 %v1350
    %v1352 = vpop.xlane.xlu0 %1351
    %v1353 = vcvt.f32.s32 %v1352
    %v1354 = vcvt.f32.s32 %v1348
    %v1355 = vshll.u32 %v1354, 16
    %v1356 = vadd.s32 %v1355, %v1353
    %vm1357 = vcmp.eq.s32.totalorder %v349, %v1311
    %vm1358 = vcmp.eq.s32.totalorder %v349, %v1326
    %vm1359 = vcmp.eq.s32.totalorder %v349, %v1341
    %vm1360 = vcmp.eq.s32.totalorder %v349, %v1356
    %v1361 = vsel %vm1357, 1.0, 0.0
    %v1362 = vsel %vm1358, 1.0, 0.0
    %v1363 = vsel %vm1359, 1.0, 0.0
    %v1364 = vsel %vm1360, 1.0, 0.0
    %v1365 = vpack.c.bf16 %v1362, %v1361
    %v1366 = vpack.c.bf16 %v1364, %v1363
    %v1368 = vsel %vm350, %v1365, 0
    %1370 = vmatprep.subr.bf16.mxu0 0
    %1371 = vmatpush1.bf16.msra.mxu0 %v264
    %1372 = vmatprep.subr.bf16.mxu0 0
    %1373 = vmatpush1.bf16.msra.mxu0 0
    %1374 = vmatprep.subr.bf16.mxu0 0
    %1375 = vmatpush1.bf16.msra.mxu0 0
    %1376 = vmatprep.subr.bf16.mxu0 0
    %1377 = vmatpush1.bf16.msra.mxu0 0
    %1378 = vmatprep.subr.bf16.mxu0 0
    %1379 = vmatpush1.bf16.msra.mxu0 0
    %1380 = vmatprep.subr.bf16.mxu0 0
    %1381 = vmatpush1.bf16.msra.mxu0 0
    %1382 = vmatprep.subr.bf16.mxu0 0
    %1383 = vmatpush1.bf16.msra.mxu0 0
    %1384 = vmatprep.subr.bf16.mxu0 0
    %1385 = vmatpush1.bf16.msra.mxu0 0
    %1386 = vmatprep.subr.bf16.mxu0 0
    %1387 = vmatpush1.bf16.msra.mxu0 0
    %1388 = vmatprep.subr.bf16.mxu0 0
    %1389 = vmatpush1.bf16.msra.mxu0 0
    %1390 = vmatprep.subr.bf16.mxu0 0
    %1391 = vmatpush1.bf16.msra.mxu0 0
    %1392 = vmatprep.subr.bf16.mxu0 0
    %1393 = vmatpush1.bf16.msra.mxu0 0
    %1394 = vmatprep.subr.bf16.mxu0 0
    %1395 = vmatpush1.bf16.msra.mxu0 0
    %1396 = vmatprep.subr.bf16.mxu0 0
    %1397 = vmatpush1.bf16.msra.mxu0 0
    %1398 = vmatprep.subr.bf16.mxu0 0
    %1399 = vmatpush1.bf16.msra.mxu0 0
    %1400 = vmatprep.subr.bf16.mxu0 0
    %1401 = vmatpush1.bf16.msra.mxu0 0
    %1402 = vmatprep.mubr.bf16.mxu0 0
    %1403 = vmatmul.mubr.bf16.gmra.mrb[0].mxu0 %v1368
    %v1404 = vpop.f32.mrb[0].mxu0
    %v1405 = vadd.f32 0.0, %v1404
    %v1406 = vpop.f32.mrb[0].mxu0
    %v1407 = vpop.f32.mrb[0].mxu0
    %v1408 = vadd.f32 0.0, %v1407
    %v1409 = vpop.f32.mrb[0].mxu0
    %1410 = vdwg.mxu0
    %v1412 = vsel %vm350, %v1366, 0
    %1414 = vmatprep.subr.bf16.mxu0 0
    %1415 = vmatpush1.bf16.msra.mxu0 %v265
    %1416 = vmatprep.subr.bf16.mxu0 0
    %1417 = vmatpush1.bf16.msra.mxu0 0
    %1418 = vmatprep.subr.bf16.mxu0 0
    %1419 = vmatpush1.bf16.msra.mxu0 0
    %1420 = vmatprep.subr.bf16.mxu0 0
    %1421 = vmatpush1.bf16.msra.mxu0 0
    %1422 = vmatprep.subr.bf16.mxu0 0
    %1423 = vmatpush1.bf16.msra.mxu0 0
    %1424 = vmatprep.subr.bf16.mxu0 0
    %1425 = vmatpush1.bf16.msra.mxu0 0
    %1426 = vmatprep.subr.bf16.mxu0 0
    %1427 = vmatpush1.bf16.msra.mxu0 0
    %1428 = vmatprep.subr.bf16.mxu0 0
    %1429 = vmatpush1.bf16.msra.mxu0 0
    %1430 = vmatprep.subr.bf16.mxu0 0
    %1431 = vmatpush1.bf16.msra.mxu0 0
    %1432 = vmatprep.subr.bf16.mxu0 0
    %1433 = vmatpush1.bf16.msra.mxu0 0
    %1434 = vmatprep.subr.bf16.mxu0 0
    %1435 = vmatpush1.bf16.msra.mxu0 0
    %1436 = vmatprep.subr.bf16.mxu0 0
    %1437 = vmatpush1.bf16.msra.mxu0 0
    %1438 = vmatprep.subr.bf16.mxu0 0
    %1439 = vmatpush1.bf16.msra.mxu0 0
    %1440 = vmatprep.subr.bf16.mxu0 0
    %1441 = vmatpush1.bf16.msra.mxu0 0
    %1442 = vmatprep.subr.bf16.mxu0 0
    %1443 = vmatpush1.bf16.msra.mxu0 0
    %1444 = vmatprep.subr.bf16.mxu0 0
    %1445 = vmatpush1.bf16.msra.mxu0 0
    %1446 = vmatprep.mubr.bf16.mxu0 0
    %1447 = vmatmul.mubr.bf16.gmra.mrb[0].mxu0 %v1412
    %v1448 = vpop.f32.mrb[0].mxu0
    %v1449 = vadd.f32 0.0, %v1448
    %v1450 = vpop.f32.mrb[0].mxu0
    %v1451 = vpop.f32.mrb[0].mxu0
    %v1452 = vadd.f32 0.0, %v1451
    %v1453 = vpop.f32.mrb[0].mxu0
    %1454 = vdwg.mxu0
    %v1455 = vmax.f32 %v1269, %v1405
    %v1456 = vmax.f32 %v1270, %v1408
    %v1457 = vmax.f32 %v1271, %v1449
    %v1458 = vmax.f32 %v1272, %v1452
    %v1459 = vsel %vm1357, -inf, %v1273
    %v1460 = vsel %vm1358, -inf, %v1274
    %v1461 = vsel %vm1359, -inf, %v1275
    %v1462 = vsel %vm1360, -inf, %v1276
    %v1463 = vsel %vm350, %v1459, -inf
    %1464 = vmax.xlane.f32.xlu0 %v1463
    %v1465 = vpop.xlane.xlu0 %1464
    %v1466 = vsel %vm350, %v1460, -inf
    %1467 = vmax.xlane.f32.xlu0 %v1466
    %v1468 = vpop.xlane.xlu0 %1467
    %v1469 = vsel %vm350, %v1461, -inf
    %1470 = vmax.xlane.f32.xlu0 %v1469
    %v1471 = vpop.xlane.xlu0 %1470
    %v1472 = vsel %vm350, %v1462, -inf
    %1473 = vmax.xlane.f32.xlu0 %v1472
    %v1474 = vpop.xlane.xlu0 %1473
    %vm1475 = vcmp.eq.f32.partialorder %v1459, %v1465
    %vm1476 = vcmp.eq.f32.partialorder %v1460, %v1468
    %vm1477 = vcmp.eq.f32.partialorder %v1461, %v1471
    %vm1478 = vcmp.eq.f32.partialorder %v1462, %v1474
    %v1479 = vsel %vm1475, %v349, 16
    %v1480 = vsel %vm1476, %v349, 16
    %v1481 = vsel %vm1477, %v349, 16
    %v1482 = vsel %vm1478, %v349, 16
    %v1483 = vsel %vm350, %v1479, 2147483647
    %v1484 = vand.u32 %v1483, 65535
    %v1485 = vshra.s32 %v1483, 16
    %v1486 = vcvt.s32.f32 %v1484
    %v1487 = vcvt.s32.f32 %v1485
    %1488 = vmin.xlane.f32.xlu0 %v1487
    %v1489 = vpop.xlane.xlu0 %1488
    %vm1490 = vcmp.eq.f32.partialorder %v1487, %v1489
    %v1491 = vsel %vm1490, %v1486, inf
    %1492 = vmin.xlane.f32.xlu0 %v1491
    %v1493 = vpop.xlane.xlu0 %1492
    %v1494 = vcvt.f32.s32 %v1493
    %v1495 = vcvt.f32.s32 %v1489
    %v1496 = vshll.u32 %v1495, 16
    %v1497 = vadd.s32 %v1496, %v1494
    %v1498 = vsel %vm350, %v1480, 2147483647
    %v1499 = vand.u32 %v1498, 65535
    %v1500 = vshra.s32 %v1498, 16
    %v1501 = vcvt.s32.f32 %v1499
    %v1502 = vcvt.s32.f32 %v1500
    %1503 = vmin.xlane.f32.xlu0 %v1502
    %v1504 = vpop.xlane.xlu0 %1503
    %vm1505 = vcmp.eq.f32.partialorder %v1502, %v1504
    %v1506 = vsel %vm1505, %v1501, inf
    %1507 = vmin.xlane.f32.xlu0 %v1506
    %v1508 = vpop.xlane.xlu0 %1507
    %v1509 = vcvt.f32.s32 %v1508
    %v1510 = vcvt.f32.s32 %v1504
    %v1511 = vshll.u32 %v1510, 16
    %v1512 = vadd.s32 %v1511, %v1509
    %v1513 = vsel %vm350, %v1481, 2147483647
    %v1514 = vand.u32 %v1513, 65535
    %v1515 = vshra.s32 %v1513, 16
    %v1516 = vcvt.s32.f32 %v1514
    %v1517 = vcvt.s32.f32 %v1515
    %1518 = vmin.xlane.f32.xlu0 %v1517
    %v1519 = vpop.xlane.xlu0 %1518
    %vm1520 = vcmp.eq.f32.partialorder %v1517, %v1519
    %v1521 = vsel %vm1520, %v1516, inf
    %1522 = vmin.xlane.f32.xlu0 %v1521
    %v1523 = vpop.xlane.xlu0 %1522
    %v1524 = vcvt.f32.s32 %v1523
    %v1525 = vcvt.f32.s32 %v1519
    %v1526 = vshll.u32 %v1525, 16
    %v1527 = vadd.s32 %v1526, %v1524
    %v1528 = vsel %vm350, %v1482, 2147483647
    %v1529 = vand.u32 %v1528, 65535
    %v1530 = vshra.s32 %v1528, 16
    %v1531 = vcvt.s32.f32 %v1529
    %v1532 = vcvt.s32.f32 %v1530
    %1533 = vmin.xlane.f32.xlu0 %v1532
    %v1534 = vpop.xlane.xlu0 %1533
    %vm1535 = vcmp.eq.f32.partialorder %v1532, %v1534
    %v1536 = vsel %vm1535, %v1531, inf
    %1537 = vmin.xlane.f32.xlu0 %v1536
    %v1538 = vpop.xlane.xlu0 %1537
    %v1539 = vcvt.f32.s32 %v1538
    %v1540 = vcvt.f32.s32 %v1534
    %v1541 = vshll.u32 %v1540, 16
    %v1542 = vadd.s32 %v1541, %v1539
    %vm1543 = vcmp.eq.s32.totalorder %v349, %v1497
    %vm1544 = vcmp.eq.s32.totalorder %v349, %v1512
    %vm1545 = vcmp.eq.s32.totalorder %v349, %v1527
    %vm1546 = vcmp.eq.s32.totalorder %v349, %v1542
    %v1547 = vsel %vm1543, 1.0, 0.0
    %v1548 = vsel %vm1544, 1.0, 0.0
    %v1549 = vsel %vm1545, 1.0, 0.0
    %v1550 = vsel %vm1546, 1.0, 0.0
    %v1551 = vpack.c.bf16 %v1548, %v1547
    %v1552 = vpack.c.bf16 %v1550, %v1549
    %v1554 = vsel %vm350, %v1551, 0
    %1556 = vmatprep.subr.bf16.mxu0 0
    %1557 = vmatpush1.bf16.msra.mxu0 %v264
    %1558 = vmatprep.subr.bf16.mxu0 0
    %1559 = vmatpush1.bf16.msra.mxu0 0
    %1560 = vmatprep.subr.bf16.mxu0 0
    %1561 = vmatpush1.bf16.msra.mxu0 0
    %1562 = vmatprep.subr.bf16.mxu0 0
    %1563 = vmatpush1.bf16.msra.mxu0 0
    %1564 = vmatprep.subr.bf16.mxu0 0
    %1565 = vmatpush1.bf16.msra.mxu0 0
    %1566 = vmatprep.subr.bf16.mxu0 0
    %1567 = vmatpush1.bf16.msra.mxu0 0
    %1568 = vmatprep.subr.bf16.mxu0 0
    %1569 = vmatpush1.bf16.msra.mxu0 0
    %1570 = vmatprep.subr.bf16.mxu0 0
    %1571 = vmatpush1.bf16.msra.mxu0 0
    %1572 = vmatprep.subr.bf16.mxu0 0
    %1573 = vmatpush1.bf16.msra.mxu0 0
    %1574 = vmatprep.subr.bf16.mxu0 0
    %1575 = vmatpush1.bf16.msra.mxu0 0
    %1576 = vmatprep.subr.bf16.mxu0 0
    %1577 = vmatpush1.bf16.msra.mxu0 0
    %1578 = vmatprep.subr.bf16.mxu0 0
    %1579 = vmatpush1.bf16.msra.mxu0 0
    %1580 = vmatprep.subr.bf16.mxu0 0
    %1581 = vmatpush1.bf16.msra.mxu0 0
    %1582 = vmatprep.subr.bf16.mxu0 0
    %1583 = vmatpush1.bf16.msra.mxu0 0
    %1584 = vmatprep.subr.bf16.mxu0 0
    %1585 = vmatpush1.bf16.msra.mxu0 0
    %1586 = vmatprep.subr.bf16.mxu0 0
    %1587 = vmatpush1.bf16.msra.mxu0 0
    %1588 = vmatprep.mubr.bf16.mxu0 0
    %1589 = vmatmul.mubr.bf16.gmra.mrb[0].mxu0 %v1554
    %v1590 = vpop.f32.mrb[0].mxu0
    %v1591 = vadd.f32 0.0, %v1590
    %v1592 = vpop.f32.mrb[0].mxu0
    %v1593 = vpop.f32.mrb[0].mxu0
    %v1594 = vadd.f32 0.0, %v1593
    %v1595 = vpop.f32.mrb[0].mxu0
    %1596 = vdwg.mxu0
    %v1598 = vsel %vm350, %v1552, 0
    %1600 = vmatprep.subr.bf16.mxu0 0
    %1601 = vmatpush1.bf16.msra.mxu0 %v265
    %1602 = vmatprep.subr.bf16.mxu0 0
    %1603 = vmatpush1.bf16.msra.mxu0 0
    %1604 = vmatprep.subr.bf16.mxu0 0
    %1605 = vmatpush1.bf16.msra.mxu0 0
    %1606 = vmatprep.subr.bf16.mxu0 0
    %1607 = vmatpush1.bf16.msra.mxu0 0
    %1608 = vmatprep.subr.bf16.mxu0 0
    %1609 = vmatpush1.bf16.msra.mxu0 0
    %1610 = vmatprep.subr.bf16.mxu0 0
    %1611 = vmatpush1.bf16.msra.mxu0 0
    %1612 = vmatprep.subr.bf16.mxu0 0
    %1613 = vmatpush1.bf16.msra.mxu0 0
    %1614 = vmatprep.subr.bf16.mxu0 0
    %1615 = vmatpush1.bf16.msra.mxu0 0
    %1616 = vmatprep.subr.bf16.mxu0 0
    %1617 = vmatpush1.bf16.msra.mxu0 0
    %1618 = vmatprep.subr.bf16.mxu0 0
    %1619 = vmatpush1.bf16.msra.mxu0 0
    %1620 = vmatprep.subr.bf16.mxu0 0
    %1621 = vmatpush1.bf16.msra.mxu0 0
    %1622 = vmatprep.subr.bf16.mxu0 0
    %1623 = vmatpush1.bf16.msra.mxu0 0
    %1624 = vmatprep.subr.bf16.mxu0 0
    %1625 = vmatpush1.bf16.msra.mxu0 0
    %1626 = vmatprep.subr.bf16.mxu0 0
    %1627 = vmatpush1.bf16.msra.mxu0 0
    %1628 = vmatprep.subr.bf16.mxu0 0
    %1629 = vmatpush1.bf16.msra.mxu0 0
    %1630 = vmatprep.subr.bf16.mxu0 0
    %1631 = vmatpush1.bf16.msra.mxu0 0
    %1632 = vmatprep.mubr.bf16.mxu0 0
    %1633 = vmatmul.mubr.bf16.gmra.mrb[0].mxu0 %v1598
    %v1634 = vpop.f32.mrb[0].mxu0
    %v1635 = vadd.f32 0.0, %v1634
    %v1636 = vpop.f32.mrb[0].mxu0
    %v1637 = vpop.f32.mrb[0].mxu0
    %v1638 = vadd.f32 0.0, %v1637
    %v1639 = vpop.f32.mrb[0].mxu0
    %1640 = vdwg.mxu0
    %v1641 = vmax.f32 %v1455, %v1591
    %v1642 = vmax.f32 %v1456, %v1594
    %v1643 = vmax.f32 %v1457, %v1635
    %v1644 = vmax.f32 %v1458, %v1638
    %v1645 = vsel %vm1543, -inf, %v1459
    %v1646 = vsel %vm1544, -inf, %v1460
    %v1647 = vsel %vm1545, -inf, %v1461
    %v1648 = vsel %vm1546, -inf, %v1462
    %v1649 = vsel %vm350, %v1645, -inf
    %1650 = vmax.xlane.f32.xlu0 %v1649
    %v1651 = vpop.xlane.xlu0 %1650
    %v1652 = vsel %vm350, %v1646, -inf
    %1653 = vmax.xlane.f32.xlu0 %v1652
    %v1654 = vpop.xlane.xlu0 %1653
    %v1655 = vsel %vm350, %v1647, -inf
    %1656 = vmax.xlane.f32.xlu0 %v1655
    %v1657 = vpop.xlane.xlu0 %1656
    %v1658 = vsel %vm350, %v1648, -inf
    %1659 = vmax.xlane.f32.xlu0 %v1658
    %v1660 = vpop.xlane.xlu0 %1659
    %vm1661 = vcmp.eq.f32.partialorder %v1645, %v1651
    %vm1662 = vcmp.eq.f32.partialorder %v1646, %v1654
    %vm1663 = vcmp.eq.f32.partialorder %v1647, %v1657
    %vm1664 = vcmp.eq.f32.partialorder %v1648, %v1660
    %v1665 = vsel %vm1661, %v349, 16
    %v1666 = vsel %vm1662, %v349, 16
    %v1667 = vsel %vm1663, %v349, 16
    %v1668 = vsel %vm1664, %v349, 16
    %v1669 = vsel %vm350, %v1665, 2147483647
    %v1670 = vand.u32 %v1669, 65535
    %v1671 = vshra.s32 %v1669, 16
    %v1672 = vcvt.s32.f32 %v1670
    %v1673 = vcvt.s32.f32 %v1671
    %1674 = vmin.xlane.f32.xlu0 %v1673
    %v1675 = vpop.xlane.xlu0 %1674
    %vm1676 = vcmp.eq.f32.partialorder %v1673, %v1675
    %v1677 = vsel %vm1676, %v1672, inf
    %1678 = vmin.xlane.f32.xlu0 %v1677
    %v1679 = vpop.xlane.xlu0 %1678
    %v1680 = vcvt.f32.s32 %v1679
    %v1681 = vcvt.f32.s32 %v1675
    %v1682 = vshll.u32 %v1681, 16
    %v1683 = vadd.s32 %v1682, %v1680
    %v1684 = vsel %vm350, %v1666, 2147483647
    %v1685 = vand.u32 %v1684, 65535
    %v1686 = vshra.s32 %v1684, 16
    %v1687 = vcvt.s32.f32 %v1685
    %v1688 = vcvt.s32.f32 %v1686
    %1689 = vmin.xlane.f32.xlu0 %v1688
    %v1690 = vpop.xlane.xlu0 %1689
    %vm1691 = vcmp.eq.f32.partialorder %v1688, %v1690
    %v1692 = vsel %vm1691, %v1687, inf
    %1693 = vmin.xlane.f32.xlu0 %v1692
    %v1694 = vpop.xlane.xlu0 %1693
    %v1695 = vcvt.f32.s32 %v1694
    %v1696 = vcvt.f32.s32 %v1690
    %v1697 = vshll.u32 %v1696, 16
    %v1698 = vadd.s32 %v1697, %v1695
    %v1699 = vsel %vm350, %v1667, 2147483647
    %v1700 = vand.u32 %v1699, 65535
    %v1701 = vshra.s32 %v1699, 16
    %v1702 = vcvt.s32.f32 %v1700
    %v1703 = vcvt.s32.f32 %v1701
    %1704 = vmin.xlane.f32.xlu0 %v1703
    %v1705 = vpop.xlane.xlu0 %1704
    %vm1706 = vcmp.eq.f32.partialorder %v1703, %v1705
    %v1707 = vsel %vm1706, %v1702, inf
    %1708 = vmin.xlane.f32.xlu0 %v1707
    %v1709 = vpop.xlane.xlu0 %1708
    %v1710 = vcvt.f32.s32 %v1709
    %v1711 = vcvt.f32.s32 %v1705
    %v1712 = vshll.u32 %v1711, 16
    %v1713 = vadd.s32 %v1712, %v1710
    %v1714 = vsel %vm350, %v1668, 2147483647
    %v1715 = vand.u32 %v1714, 65535
    %v1716 = vshra.s32 %v1714, 16
    %v1717 = vcvt.s32.f32 %v1715
    %v1718 = vcvt.s32.f32 %v1716
    %1719 = vmin.xlane.f32.xlu0 %v1718
    %v1720 = vpop.xlane.xlu0 %1719
    %vm1721 = vcmp.eq.f32.partialorder %v1718, %v1720
    %v1722 = vsel %vm1721, %v1717, inf
    %1723 = vmin.xlane.f32.xlu0 %v1722
    %v1724 = vpop.xlane.xlu0 %1723
    %v1725 = vcvt.f32.s32 %v1724
    %v1726 = vcvt.f32.s32 %v1720
    %v1727 = vshll.u32 %v1726, 16
    %v1728 = vadd.s32 %v1727, %v1725
    %vm1729 = vcmp.eq.s32.totalorder %v349, %v1683
    %vm1730 = vcmp.eq.s32.totalorder %v349, %v1698
    %vm1731 = vcmp.eq.s32.totalorder %v349, %v1713
    %vm1732 = vcmp.eq.s32.totalorder %v349, %v1728
    %v1733 = vsel %vm1729, 1.0, 0.0
    %v1734 = vsel %vm1730, 1.0, 0.0
    %v1735 = vsel %vm1731, 1.0, 0.0
    %v1736 = vsel %vm1732, 1.0, 0.0
    %v1737 = vpack.c.bf16 %v1734, %v1733
    %v1738 = vpack.c.bf16 %v1736, %v1735
    %v1740 = vsel %vm350, %v1737, 0
    %1742 = vmatprep.subr.bf16.mxu0 0
    %1743 = vmatpush1.bf16.msra.mxu0 %v264
    %1744 = vmatprep.subr.bf16.mxu0 0
    %1745 = vmatpush1.bf16.msra.mxu0 0
    %1746 = vmatprep.subr.bf16.mxu0 0
    %1747 = vmatpush1.bf16.msra.mxu0 0
    %1748 = vmatprep.subr.bf16.mxu0 0
    %1749 = vmatpush1.bf16.msra.mxu0 0
    %1750 = vmatprep.subr.bf16.mxu0 0
    %1751 = vmatpush1.bf16.msra.mxu0 0
    %1752 = vmatprep.subr.bf16.mxu0 0
    %1753 = vmatpush1.bf16.msra.mxu0 0
    %1754 = vmatprep.subr.bf16.mxu0 0
    %1755 = vmatpush1.bf16.msra.mxu0 0
    %1756 = vmatprep.subr.bf16.mxu0 0
    %1757 = vmatpush1.bf16.msra.mxu0 0
    %1758 = vmatprep.subr.bf16.mxu0 0
    %1759 = vmatpush1.bf16.msra.mxu0 0
    %1760 = vmatprep.subr.bf16.mxu0 0
    %1761 = vmatpush1.bf16.msra.mxu0 0
    %1762 = vmatprep.subr.bf16.mxu0 0
    %1763 = vmatpush1.bf16.msra.mxu0 0
    %1764 = vmatprep.subr.bf16.mxu0 0
    %1765 = vmatpush1.bf16.msra.mxu0 0
    %1766 = vmatprep.subr.bf16.mxu0 0
    %1767 = vmatpush1.bf16.msra.mxu0 0
    %1768 = vmatprep.subr.bf16.mxu0 0
    %1769 = vmatpush1.bf16.msra.mxu0 0
    %1770 = vmatprep.subr.bf16.mxu0 0
    %1771 = vmatpush1.bf16.msra.mxu0 0
    %1772 = vmatprep.subr.bf16.mxu0 0
    %1773 = vmatpush1.bf16.msra.mxu0 0
    %1774 = vmatprep.mubr.bf16.mxu0 0
    %1775 = vmatmul.mubr.bf16.gmra.mrb[0].mxu0 %v1740
    %v1776 = vpop.f32.mrb[0].mxu0
    %v1777 = vadd.f32 0.0, %v1776
    %v1778 = vpop.f32.mrb[0].mxu0
    %v1779 = vpop.f32.mrb[0].mxu0
    %v1780 = vadd.f32 0.0, %v1779
    %v1781 = vpop.f32.mrb[0].mxu0
    %1782 = vdwg.mxu0
    %v1784 = vsel %vm350, %v1738, 0
    %1786 = vmatprep.subr.bf16.mxu0 0
    %1787 = vmatpush1.bf16.msra.mxu0 %v265
    %1788 = vmatprep.subr.bf16.mxu0 0
    %1789 = vmatpush1.bf16.msra.mxu0 0
    %1790 = vmatprep.subr.bf16.mxu0 0
    %1791 = vmatpush1.bf16.msra.mxu0 0
    %1792 = vmatprep.subr.bf16.mxu0 0
    %1793 = vmatpush1.bf16.msra.mxu0 0
    %1794 = vmatprep.subr.bf16.mxu0 0
    %1795 = vmatpush1.bf16.msra.mxu0 0
    %1796 = vmatprep.subr.bf16.mxu0 0
    %1797 = vmatpush1.bf16.msra.mxu0 0
    %1798 = vmatprep.subr.bf16.mxu0 0
    %1799 = vmatpush1.bf16.msra.mxu0 0
    %1800 = vmatprep.subr.bf16.mxu0 0
    %1801 = vmatpush1.bf16.msra.mxu0 0
    %1802 = vmatprep.subr.bf16.mxu0 0
    %1803 = vmatpush1.bf16.msra.mxu0 0
    %1804 = vmatprep.subr.bf16.mxu0 0
    %1805 = vmatpush1.bf16.msra.mxu0 0
    %1806 = vmatprep.subr.bf16.mxu0 0
    %1807 = vmatpush1.bf16.msra.mxu0 0
    %1808 = vmatprep.subr.bf16.mxu0 0
    %1809 = vmatpush1.bf16.msra.mxu0 0
    %1810 = vmatprep.subr.bf16.mxu0 0
    %1811 = vmatpush1.bf16.msra.mxu0 0
    %1812 = vmatprep.subr.bf16.mxu0 0
    %1813 = vmatpush1.bf16.msra.mxu0 0
    %1814 = vmatprep.subr.bf16.mxu0 0
    %1815 = vmatpush1.bf16.msra.mxu0 0
    %1816 = vmatprep.subr.bf16.mxu0 0
    %1817 = vmatpush1.bf16.msra.mxu0 0
    %1818 = vmatprep.mubr.bf16.mxu0 0
    %1819 = vmatmul.mubr.bf16.gmra.mrb[0].mxu0 %v1784
    %v1820 = vpop.f32.mrb[0].mxu0
    %v1821 = vadd.f32 0.0, %v1820
    %v1822 = vpop.f32.mrb[0].mxu0
    %v1823 = vpop.f32.mrb[0].mxu0
    %v1824 = vadd.f32 0.0, %v1823
    %v1825 = vpop.f32.mrb[0].mxu0
    %1826 = vdwg.mxu0
    %v1827 = vmax.f32 %v1641, %v1777
    %v1828 = vmax.f32 %v1642, %v1780
    %v1829 = vmax.f32 %v1643, %v1821
    %v1830 = vmax.f32 %v1644, %v1824
    %v1831 = vsel %vm1729, -inf, %v1645
    %v1832 = vsel %vm1730, -inf, %v1646
    %v1833 = vsel %vm1731, -inf, %v1647
    %v1834 = vsel %vm1732, -inf, %v1648
    %v1835 = vsel %vm350, %v1831, -inf
    %1836 = vmax.xlane.f32.xlu0 %v1835
    %v1837 = vpop.xlane.xlu0 %1836
    %v1838 = vsel %vm350, %v1832, -inf
    %1839 = vmax.xlane.f32.xlu0 %v1838
    %v1840 = vpop.xlane.xlu0 %1839
    %v1841 = vsel %vm350, %v1833, -inf
    %1842 = vmax.xlane.f32.xlu0 %v1841
    %v1843 = vpop.xlane.xlu0 %1842
    %v1844 = vsel %vm350, %v1834, -inf
    %1845 = vmax.xlane.f32.xlu0 %v1844
    %v1846 = vpop.xlane.xlu0 %1845
    %vm1847 = vcmp.eq.f32.partialorder %v1831, %v1837
    %vm1848 = vcmp.eq.f32.partialorder %v1832, %v1840
    %vm1849 = vcmp.eq.f32.partialorder %v1833, %v1843
    %vm1850 = vcmp.eq.f32.partialorder %v1834, %v1846
    %v1851 = vsel %vm1847, %v349, 16
    %v1852 = vsel %vm1848, %v349, 16
    %v1853 = vsel %vm1849, %v349, 16
    %v1854 = vsel %vm1850, %v349, 16
    %v1855 = vsel %vm350, %v1851, 2147483647
    %v1856 = vand.u32 %v1855, 65535
    %v1857 = vshra.s32 %v1855, 16
    %v1858 = vcvt.s32.f32 %v1856
    %v1859 = vcvt.s32.f32 %v1857
    %1860 = vmin.xlane.f32.xlu0 %v1859
    %v1861 = vpop.xlane.xlu0 %1860
    %vm1862 = vcmp.eq.f32.partialorder %v1859, %v1861
    %v1863 = vsel %vm1862, %v1858, inf
    %1864 = vmin.xlane.f32.xlu0 %v1863
    %v1865 = vpop.xlane.xlu0 %1864
    %v1866 = vcvt.f32.s32 %v1865
    %v1867 = vcvt.f32.s32 %v1861
    %v1868 = vshll.u32 %v1867, 16
    %v1869 = vadd.s32 %v1868, %v1866
    %v1870 = vsel %vm350, %v1852, 2147483647
    %v1871 = vand.u32 %v1870, 65535
    %v1872 = vshra.s32 %v1870, 16
    %v1873 = vcvt.s32.f32 %v1871
    %v1874 = vcvt.s32.f32 %v1872
    %1875 = vmin.xlane.f32.xlu0 %v1874
    %v1876 = vpop.xlane.xlu0 %1875
    %vm1877 = vcmp.eq.f32.partialorder %v1874, %v1876
    %v1878 = vsel %vm1877, %v1873, inf
    %1879 = vmin.xlane.f32.xlu0 %v1878
    %v1880 = vpop.xlane.xlu0 %1879
    %v1881 = vcvt.f32.s32 %v1880
    %v1882 = vcvt.f32.s32 %v1876
    %v1883 = vshll.u32 %v1882, 16
    %v1884 = vadd.s32 %v1883, %v1881
    %v1885 = vsel %vm350, %v1853, 2147483647
    %v1886 = vand.u32 %v1885, 65535
    %v1887 = vshra.s32 %v1885, 16
    %v1888 = vcvt.s32.f32 %v1886
    %v1889 = vcvt.s32.f32 %v1887
    %1890 = vmin.xlane.f32.xlu0 %v1889
    %v1891 = vpop.xlane.xlu0 %1890
    %vm1892 = vcmp.eq.f32.partialorder %v1889, %v1891
    %v1893 = vsel %vm1892, %v1888, inf
    %1894 = vmin.xlane.f32.xlu0 %v1893
    %v1895 = vpop.xlane.xlu0 %1894
    %v1896 = vcvt.f32.s32 %v1895
    %v1897 = vcvt.f32.s32 %v1891
    %v1898 = vshll.u32 %v1897, 16
    %v1899 = vadd.s32 %v1898, %v1896
    %v1900 = vsel %vm350, %v1854, 2147483647
    %v1901 = vand.u32 %v1900, 65535
    %v1902 = vshra.s32 %v1900, 16
    %v1903 = vcvt.s32.f32 %v1901
    %v1904 = vcvt.s32.f32 %v1902
    %1905 = vmin.xlane.f32.xlu0 %v1904
    %v1906 = vpop.xlane.xlu0 %1905
    %vm1907 = vcmp.eq.f32.partialorder %v1904, %v1906
    %v1908 = vsel %vm1907, %v1903, inf
    %1909 = vmin.xlane.f32.xlu0 %v1908
    %v1910 = vpop.xlane.xlu0 %1909
    %v1911 = vcvt.f32.s32 %v1910
    %v1912 = vcvt.f32.s32 %v1906
    %v1913 = vshll.u32 %v1912, 16
    %v1914 = vadd.s32 %v1913, %v1911
    %vm1915 = vcmp.eq.s32.totalorder %v349, %v1869
    %vm1916 = vcmp.eq.s32.totalorder %v349, %v1884
    %vm1917 = vcmp.eq.s32.totalorder %v349, %v1899
    %vm1918 = vcmp.eq.s32.totalorder %v349, %v1914
    %v1919 = vsel %vm1915, 1.0, 0.0
    %v1920 = vsel %vm1916, 1.0, 0.0
    %v1921 = vsel %vm1917, 1.0, 0.0
    %v1922 = vsel %vm1918, 1.0, 0.0
    %v1923 = vpack.c.bf16 %v1920, %v1919
    %v1924 = vpack.c.bf16 %v1922, %v1921
    %v1926 = vsel %vm350, %v1923, 0
    %1928 = vmatprep.subr.bf16.mxu0 0
    %1929 = vmatpush1.bf16.msra.mxu0 %v264
    %1930 = vmatprep.subr.bf16.mxu0 0
    %1931 = vmatpush1.bf16.msra.mxu0 0
    %1932 = vmatprep.subr.bf16.mxu0 0
    %1933 = vmatpush1.bf16.msra.mxu0 0
    %1934 = vmatprep.subr.bf16.mxu0 0
    %1935 = vmatpush1.bf16.msra.mxu0 0
    %1936 = vmatprep.subr.bf16.mxu0 0
    %1937 = vmatpush1.bf16.msra.mxu0 0
    %1938 = vmatprep.subr.bf16.mxu0 0
    %1939 = vmatpush1.bf16.msra.mxu0 0
    %1940 = vmatprep.subr.bf16.mxu0 0
    %1941 = vmatpush1.bf16.msra.mxu0 0
    %1942 = vmatprep.subr.bf16.mxu0 0
    %1943 = vmatpush1.bf16.msra.mxu0 0
    %1944 = vmatprep.subr.bf16.mxu0 0
    %1945 = vmatpush1.bf16.msra.mxu0 0
    %1946 = vmatprep.subr.bf16.mxu0 0
    %1947 = vmatpush1.bf16.msra.mxu0 0
    %1948 = vmatprep.subr.bf16.mxu0 0
    %1949 = vmatpush1.bf16.msra.mxu0 0
    %1950 = vmatprep.subr.bf16.mxu0 0
    %1951 = vmatpush1.bf16.msra.mxu0 0
    %1952 = vmatprep.subr.bf16.mxu0 0
    %1953 = vmatpush1.bf16.msra.mxu0 0
    %1954 = vmatprep.subr.bf16.mxu0 0
    %1955 = vmatpush1.bf16.msra.mxu0 0
    %1956 = vmatprep.subr.bf16.mxu0 0
    %1957 = vmatpush1.bf16.msra.mxu0 0
    %1958 = vmatprep.subr.bf16.mxu0 0
    %1959 = vmatpush1.bf16.msra.mxu0 0
    %1960 = vmatprep.mubr.bf16.mxu0 0
    %1961 = vmatmul.mubr.bf16.gmra.mrb[0].mxu0 %v1926
    %v1962 = vpop.f32.mrb[0].mxu0
    %v1963 = vadd.f32 0.0, %v1962
    %v1964 = vpop.f32.mrb[0].mxu0
    %v1965 = vpop.f32.mrb[0].mxu0
    %v1966 = vadd.f32 0.0, %v1965
    %v1967 = vpop.f32.mrb[0].mxu0
    %1968 = vdwg.mxu0
    %v1970 = vsel %vm350, %v1924, 0
    %1972 = vmatprep.subr.bf16.mxu0 0
    %1973 = vmatpush1.bf16.msra.mxu0 %v265
    %1974 = vmatprep.subr.bf16.mxu0 0
    %1975 = vmatpush1.bf16.msra.mxu0 0
    %1976 = vmatprep.subr.bf16.mxu0 0
    %1977 = vmatpush1.bf16.msra.mxu0 0
    %1978 = vmatprep.subr.bf16.mxu0 0
    %1979 = vmatpush1.bf16.msra.mxu0 0
    %1980 = vmatprep.subr.bf16.mxu0 0
    %1981 = vmatpush1.bf16.msra.mxu0 0
    %1982 = vmatprep.subr.bf16.mxu0 0
    %1983 = vmatpush1.bf16.msra.mxu0 0
    %1984 = vmatprep.subr.bf16.mxu0 0
    %1985 = vmatpush1.bf16.msra.mxu0 0
    %1986 = vmatprep.subr.bf16.mxu0 0
    %1987 = vmatpush1.bf16.msra.mxu0 0
    %1988 = vmatprep.subr.bf16.mxu0 0
    %1989 = vmatpush1.bf16.msra.mxu0 0
    %1990 = vmatprep.subr.bf16.mxu0 0
    %1991 = vmatpush1.bf16.msra.mxu0 0
    %1992 = vmatprep.subr.bf16.mxu0 0
    %1993 = vmatpush1.bf16.msra.mxu0 0
    %1994 = vmatprep.subr.bf16.mxu0 0
    %1995 = vmatpush1.bf16.msra.mxu0 0
    %1996 = vmatprep.subr.bf16.mxu0 0
    %1997 = vmatpush1.bf16.msra.mxu0 0
    %1998 = vmatprep.subr.bf16.mxu0 0
    %1999 = vmatpush1.bf16.msra.mxu0 0
    %2000 = vmatprep.subr.bf16.mxu0 0
    %2001 = vmatpush1.bf16.msra.mxu0 0
    %2002 = vmatprep.subr.bf16.mxu0 0
    %2003 = vmatpush1.bf16.msra.mxu0 0
    %2004 = vmatprep.mubr.bf16.mxu0 0
    %2005 = vmatmul.mubr.bf16.gmra.mrb[0].mxu0 %v1970
    %v2006 = vpop.f32.mrb[0].mxu0
    %v2007 = vadd.f32 0.0, %v2006
    %v2008 = vpop.f32.mrb[0].mxu0
    %v2009 = vpop.f32.mrb[0].mxu0
    %v2010 = vadd.f32 0.0, %v2009
    %v2011 = vpop.f32.mrb[0].mxu0
    %2012 = vdwg.mxu0
    %v2013 = vmax.f32 %v1827, %v1963
    %v2014 = vmax.f32 %v1828, %v1966
    %v2015 = vmax.f32 %v1829, %v2007
    %v2016 = vmax.f32 %v1830, %v2010
    %v2017 = vsub.f32 %v2013, %v250
    %v2018 = vsub.f32 %v2014, %v253
    %v2019 = vsub.f32 %v2015, %v258
    %v2020 = vsub.f32 %v2016, %v261
    %v2021 = vld [vmem:[#allocation7] sm:$0xf]
    %v2022 = vld [vmem:[#allocation7 + $0x4] sm:$0xf]
    %v2023 = vld [vmem:[#allocation7 + $0x8] sm:$0xf]
    %v2024 = vld [vmem:[#allocation7 + $0xc] sm:$0xf]
    %v2025 = vld [vmem:[#allocation7 + $0x10] sm:$0xf]
    %v2026 = vld [vmem:[#allocation7 + $0x14] sm:$0xf]
    %v2027 = vld [vmem:[#allocation7 + $0x18] sm:$0xf]
    %v2028 = vld [vmem:[#allocation7 + $0x1c] sm:$0xf]
    %v2029 = vld [vmem:[#allocation7 + $0x20] sm:$0xf]
    %v2030 = vld [vmem:[#allocation7 + $0x24] sm:$0xf]
    %v2031 = vld [vmem:[#allocation7 + $0x28] sm:$0xf]
    %v2032 = vld [vmem:[#allocation7 + $0x2c] sm:$0xf]
    %v2033 = vld [vmem:[#allocation7 + $0x30] sm:$0xf]
    %v2034 = vld [vmem:[#allocation7 + $0x34] sm:$0xf]
    %v2035 = vld [vmem:[#allocation7 + $0x38] sm:$0xf]
    %v2036 = vld [vmem:[#allocation7 + $0x3c] sm:$0xf]
    %v2037 = vpack.c.bf16 %v2018, %v2017
    %v2038 = vpack.c.bf16 %v2020, %v2019
    %v2039 = vld [vmem:[#allocation8] sm:$0xf]
    %v2040 = vld [vmem:[#allocation8 + $0x4] sm:$0xf]
    %v2041 = vld [vmem:[#allocation8 + $0x8] sm:$0xf]
    %v2042 = vld [vmem:[#allocation8 + $0xc] sm:$0xf]
    %v2043 = vld [vmem:[#allocation8 + $0x10] sm:$0xf]
    %v2044 = vld [vmem:[#allocation8 + $0x14] sm:$0xf]
    %v2045 = vld [vmem:[#allocation8 + $0x18] sm:$0xf]
    %v2046 = vld [vmem:[#allocation8 + $0x1c] sm:$0xf]
    %v2047 = vld [vmem:[#allocation8 + $0x20] sm:$0xf]
    %v2048 = vld [vmem:[#allocation8 + $0x24] sm:$0xf]
    %v2049 = vld [vmem:[#allocation8 + $0x28] sm:$0xf]
    %v2050 = vld [vmem:[#allocation8 + $0x2c] sm:$0xf]
    %v2051 = vld [vmem:[#allocation8 + $0x30] sm:$0xf]
    %v2052 = vld [vmem:[#allocation8 + $0x34] sm:$0xf]
    %v2053 = vld [vmem:[#allocation8 + $0x38] sm:$0xf]
    %v2054 = vld [vmem:[#allocation8 + $0x3c] sm:$0xf]
    %v2071 = vunpack.c.l.b16 %v2039
    %v2072 = vunpack.c.l.b16 %v2040
    %v2073 = vunpack.c.l.b16 %v2041
    %v2074 = vunpack.c.l.b16 %v2042
    %v2075 = vunpack.c.l.b16 %v2043
    %v2076 = vunpack.c.l.b16 %v2044
    %v2077 = vunpack.c.l.b16 %v2045
    %v2078 = vunpack.c.l.b16 %v2046
    %v2079 = vunpack.c.l.b16 %v2047
    %v2080 = vunpack.c.l.b16 %v2048
    %v2081 = vunpack.c.l.b16 %v2049
    %v2082 = vunpack.c.l.b16 %v2050
    %v2083 = vunpack.c.l.b16 %v2051
    %v2084 = vunpack.c.l.b16 %v2052
    %v2085 = vunpack.c.l.b16 %v2053
    %v2086 = vunpack.c.l.b16 %v2054
    %v2087 = vpack.c.b16 %v2072, %v2071
    %v2088 = vpack.c.b16 %v2074, %v2073
    %v2089 = vpack.c.b16 %v2076, %v2075
    %v2090 = vpack.c.b16 %v2078, %v2077
    %v2091 = vpack.c.b16 %v2080, %v2079
    %v2092 = vpack.c.b16 %v2082, %v2081
    %v2093 = vpack.c.b16 %v2084, %v2083
    %v2094 = vpack.c.b16 %v2086, %v2085
    %2103 = vmatprep.subr.bf16.mxu0 0
    %2104 = vmatpush1.bf16.msra.mxu0 %v2087
    %2105 = vmatprep.subr.bf16.mxu0 0
    %2106 = vmatpush1.bf16.msra.mxu0 %v2088
    %2107 = vmatprep.subr.bf16.mxu0 0
    %2108 = vmatpush1.bf16.msra.mxu0 %v2089
    %2109 = vmatprep.subr.bf16.mxu0 0
    %2110 = vmatpush1.bf16.msra.mxu0 %v2090
    %2111 = vmatprep.subr.bf16.mxu0 0
    %2112 = vmatpush1.bf16.msra.mxu0 %v2091
    %2113 = vmatprep.subr.bf16.mxu0 0
    %2114 = vmatpush1.bf16.msra.mxu0 %v2092
    %2115 = vmatprep.subr.bf16.mxu0 0
    %2116 = vmatpush1.bf16.msra.mxu0 %v2093
    %2117 = vmatprep.subr.bf16.mxu0 0
    %2118 = vmatpush1.bf16.msra.mxu0 %v2094
    %2119 = vmatprep.subr.bf16.mxu0 0
    %2120 = vmatpush1.bf16.msra.mxu0 0
    %2121 = vmatprep.subr.bf16.mxu0 0
    %2122 = vmatpush1.bf16.msra.mxu0 0
    %2123 = vmatprep.subr.bf16.mxu0 0
    %2124 = vmatpush1.bf16.msra.mxu0 0
    %2125 = vmatprep.subr.bf16.mxu0 0
    %2126 = vmatpush1.bf16.msra.mxu0 0
    %2127 = vmatprep.subr.bf16.mxu0 0
    %2128 = vmatpush1.bf16.msra.mxu0 0
    %2129 = vmatprep.subr.bf16.mxu0 0
    %2130 = vmatpush1.bf16.msra.mxu0 0
    %2131 = vmatprep.subr.bf16.mxu0 0
    %2132 = vmatpush1.bf16.msra.mxu0 0
    %2133 = vmatprep.subr.bf16.mxu0 0
    %2134 = vmatpush1.bf16.msra.mxu0 0
    %2135 = vmatprep.mubr.bf16.mxu0 0
    %2136 = vmatmul.mubr.bf16.gmra.mrb[0].mxu0 %v2037
    %v2137 = vpop.f32.mrb[0].mxu0
    %v2138 = vadd.f32 0.0, %v2137
    %v2139 = vpop.f32.mrb[0].mxu0
    %v2140 = vpop.f32.mrb[0].mxu0
    %v2141 = vadd.f32 0.0, %v2140
    %v2142 = vpop.f32.mrb[0].mxu0
    %2143 = vmatprep.mubr.bf16.mxu0 0
    %2144 = vmatmul.mubr.bf16.gmra.mrb[0].mxu0 %v2038
    %v2145 = vpop.f32.mrb[0].mxu0
    %v2146 = vadd.f32 0.0, %v2145
    %v2147 = vpop.f32.mrb[0].mxu0
    %v2148 = vpop.f32.mrb[0].mxu0
    %v2149 = vadd.f32 0.0, %v2148
    %v2150 = vpop.f32.mrb[0].mxu0
    %2151 = vdwg.mxu0
    %v2168 = vunpack.c.l.b16 %v2021
    %v2169 = vunpack.c.l.b16 %v2022
    %v2170 = vunpack.c.l.b16 %v2023
    %v2171 = vunpack.c.l.b16 %v2024
    %v2172 = vunpack.c.l.b16 %v2025
    %v2173 = vunpack.c.l.b16 %v2026
    %v2174 = vunpack.c.l.b16 %v2027
    %v2175 = vunpack.c.l.b16 %v2028
    %v2176 = vunpack.c.l.b16 %v2029
    %v2177 = vunpack.c.l.b16 %v2030
    %v2178 = vunpack.c.l.b16 %v2031
    %v2179 = vunpack.c.l.b16 %v2032
    %v2180 = vunpack.c.l.b16 %v2033
    %v2181 = vunpack.c.l.b16 %v2034
    %v2182 = vunpack.c.l.b16 %v2035
    %v2183 = vunpack.c.l.b16 %v2036
    %v2184 = vpack.c.b16 %v2169, %v2168
    %v2185 = vpack.c.b16 %v2171, %v2170
    %v2186 = vpack.c.b16 %v2173, %v2172
    %v2187 = vpack.c.b16 %v2175, %v2174
    %v2188 = vpack.c.b16 %v2177, %v2176
    %v2189 = vpack.c.b16 %v2179, %v2178
    %v2190 = vpack.c.b16 %v2181, %v2180
    %v2191 = vpack.c.b16 %v2183, %v2182
    %2200 = vmatprep.subr.bf16.mxu0 0
    %2201 = vmatpush1.bf16.msra.mxu0 %v2184
    %2202 = vmatprep.subr.bf16.mxu0 0
    %2203 = vmatpush1.bf16.msra.mxu0 %v2185
    %2204 = vmatprep.subr.bf16.mxu0 0
    %2205 = vmatpush1.bf16.msra.mxu0 %v2186
    %2206 = vmatprep.subr.bf16.mxu0 0
    %2207 = vmatpush1.bf16.msra.mxu0 %v2187
    %2208 = vmatprep.subr.bf16.mxu0 0
    %2209 = vmatpush1.bf16.msra.mxu0 %v2188
    %2210 = vmatprep.subr.bf16.mxu0 0
    %2211 = vmatpush1.bf16.msra.mxu0 %v2189
    %2212 = vmatprep.subr.bf16.mxu0 0
    %2213 = vmatpush1.bf16.msra.mxu0 %v2190
    %2214 = vmatprep.subr.bf16.mxu0 0
    %2215 = vmatpush1.bf16.msra.mxu0 %v2191
    %2216 = vmatprep.subr.bf16.mxu0 0
    %2217 = vmatpush1.bf16.msra.mxu0 0
    %2218 = vmatprep.subr.bf16.mxu0 0
    %2219 = vmatpush1.bf16.msra.mxu0 0
    %2220 = vmatprep.subr.bf16.mxu0 0
    %2221 = vmatpush1.bf16.msra.mxu0 0
    %2222 = vmatprep.subr.bf16.mxu0 0
    %2223 = vmatpush1.bf16.msra.mxu0 0
    %2224 = vmatprep.subr.bf16.mxu0 0
    %2225 = vmatpush1.bf16.msra.mxu0 0
    %2226 = vmatprep.subr.bf16.mxu0 0
    %2227 = vmatpush1.bf16.msra.mxu0 0
    %2228 = vmatprep.subr.bf16.mxu0 0
    %2229 = vmatpush1.bf16.msra.mxu0 0
    %2230 = vmatprep.subr.bf16.mxu0 0
    %2231 = vmatpush1.bf16.msra.mxu0 0
    %2232 = vmatprep.mubr.bf16.mxu0 0
    %2233 = vmatmul.mubr.bf16.gmra.mrb[0].mxu0 %v264
    %v2234 = vpop.f32.mrb[0].mxu0
    %v2235 = vadd.f32 %v2138, %v2234
    %v2236 = vpop.f32.mrb[0].mxu0
    %v2237 = vpop.f32.mrb[0].mxu0
    %v2238 = vadd.f32 %v2141, %v2237
    %v2239 = vpop.f32.mrb[0].mxu0
    %2240 = vmatprep.mubr.bf16.mxu0 0
    %2241 = vmatmul.mubr.bf16.gmra.mrb[0].mxu0 %v265
    %v2242 = vpop.f32.mrb[0].mxu0
    %v2243 = vadd.f32 %v2146, %v2242
    %v2244 = vpop.f32.mrb[0].mxu0
    %v2245 = vpop.f32.mrb[0].mxu0
    %v2246 = vadd.f32 %v2149, %v2245
    %v2247 = vpop.f32.mrb[0].mxu0
    %2248 = vdwg.mxu0
    %v2249 = vld [vmem:[%s5] sm:$0x1]
    %v2251 = vlaneseq
    %v2252 = vshrl.u32 %v2251, 7
    %v2253 = vsub.s32 0, %v2252
    %v2254 = vrot.slane %v2249, %v2253
    %v2256 = vadd.f32 %v2235, %v2254
    %v2257 = vadd.f32 %v2238, %v2254
    %v2258 = vadd.f32 %v2243, %v2254
    %v2259 = vadd.f32 %v2246, %v2254
    %v2260 = vmul.f32 %v2256, 0.5
    %v2261 = vmul.f32 %v2257, 0.5
    %v2262 = vmul.f32 %v2258, 0.5
    %v2263 = vmul.f32 %v2259, 0.5
    %v2264 = vmul.f32 %v2256, 0.70710677
    %v2265 = vmul.f32 %v2257, 0.70710677
    %v2266 = vmul.f32 %v2258, 0.70710677
    %v2267 = vmul.f32 %v2259, 0.70710677
    %v2268 = vand.u32 2147483647, %v2264
    %v2269 = vand.u32 2147483647, %v2265
    %v2270 = vand.u32 2147483647, %v2266
    %v2271 = vand.u32 2147483647, %v2267
    %v2272 = vmul.f32 %v2268, 0.3275911
    %v2273 = vmul.f32 %v2269, 0.3275911
    %v2274 = vmul.f32 %v2270, 0.3275911
    %v2275 = vmul.f32 %v2271, 0.3275911
    %v2276 = vadd.f32 %v2272, 1.0
    %v2277 = vadd.f32 %v2273, 1.0
    %v2278 = vadd.f32 %v2274, 1.0
    %v2279 = vadd.f32 %v2275, 1.0
    %v2280 = vrcp.pop %v2276
    %v2281 = vmul.f32 1.0, %v2280
    %v2282 = vrcp.pop %v2277
    %v2283 = vmul.f32 1.0, %v2282
    %v2284 = vrcp.pop %v2278
    %v2285 = vmul.f32 1.0, %v2284
    %v2286 = vrcp.pop %v2279
    %v2287 = vmul.f32 1.0, %v2286
    %v2288 = vmul.f32 %v2281, 1.0614054
    %v2289 = vmul.f32 %v2283, 1.0614054
    %v2290 = vmul.f32 %v2285, 1.0614054
    %v2291 = vmul.f32 %v2287, 1.0614054
    %v2292 = vadd.f32 %v2288, -1.4531521
    %v2293 = vadd.f32 %v2289, -1.4531521
    %v2294 = vadd.f32 %v2290, -1.4531521
    %v2295 = vadd.f32 %v2291, -1.4531521
    %v2296 = vmul.f32 %v2281, %v2292
    %v2297 = vmul.f32 %v2283, %v2293
    %v2298 = vmul.f32 %v2285, %v2294
    %v2299 = vmul.f32 %v2287, %v2295
    %v2300 = vadd.f32 %v2296, 1.4214138
    %v2301 = vadd.f32 %v2297, 1.4214138
    %v2302 = vadd.f32 %v2298, 1.4214138
    %v2303 = vadd.f32 %v2299, 1.4214138
    %v2304 = vmul.f32 %v2281, %v2300
    %v2305 = vmul.f32 %v2283, %v2301
    %v2306 = vmul.f32 %v2285, %v2302
    %v2307 = vmul.f32 %v2287, %v2303
    %v2308 = vadd.f32 %v2304, -0.28449672
    %v2309 = vadd.f32 %v2305, -0.28449672
    %v2310 = vadd.f32 %v2306, -0.28449672
    %v2311 = vadd.f32 %v2307, -0.28449672
    %v2312 = vmul.f32 %v2281, %v2308
    %v2313 = vmul.f32 %v2283, %v2309
    %v2314 = vmul.f32 %v2285, %v2310
    %v2315 = vmul.f32 %v2287, %v2311
    %v2316 = vadd.f32 %v2312, 0.2548296
    %v2317 = vadd.f32 %v2313, 0.2548296
    %v2318 = vadd.f32 %v2314, 0.2548296
    %v2319 = vadd.f32 %v2315, 0.2548296
    %v2320 = vmul.f32 %v2281, %v2316
    %v2321 = vmul.f32 %v2283, %v2317
    %v2322 = vmul.f32 %v2285, %v2318
    %v2323 = vmul.f32 %v2287, %v2319
    %v2324 = vmul.f32 %v2268, %v2268
    %v2325 = vmul.f32 %v2269, %v2269
    %v2326 = vmul.f32 %v2270, %v2270
    %v2327 = vmul.f32 %v2271, %v2271
    %v2328 = vsub.f32 0.0, %v2324
    %v2329 = vsub.f32 0.0, %v2325
    %v2330 = vsub.f32 0.0, %v2326
    %v2331 = vsub.f32 0.0, %v2327
    %v2332 = vmul.f32 %v2328, 1.442695
    %v2333 = vpow.pop %v2332
    %v2334 = vmul.f32 %v2329, 1.442695
    %v2335 = vpow.pop %v2334
    %v2336 = vmul.f32 %v2330, 1.442695
    %v2337 = vpow.pop %v2336
    %v2338 = vmul.f32 %v2331, 1.442695
    %v2339 = vpow.pop %v2338
    %v2340 = vmul.f32 %v2320, %v2333
    %v2341 = vmul.f32 %v2321, %v2335
    %v2342 = vmul.f32 %v2322, %v2337
    %v2343 = vmul.f32 %v2323, %v2339
    %v2344 = vsub.f32 1.0, %v2340
    %v2345 = vsub.f32 1.0, %v2341
    %v2346 = vsub.f32 1.0, %v2342
    %v2347 = vsub.f32 1.0, %v2343
    %vm2348 = vcmp.lt.f32.partialorder %v2264, 0.0
    %vm2349 = vcmp.lt.f32.partialorder %v2265, 0.0
    %vm2350 = vcmp.lt.f32.partialorder %v2266, 0.0
    %vm2351 = vcmp.lt.f32.partialorder %v2267, 0.0
    %v2352 = vsub.f32 0.0, %v2344
    %v2353 = vsub.f32 0.0, %v2345
    %v2354 = vsub.f32 0.0, %v2346
    %v2355 = vsub.f32 0.0, %v2347
    %v2356 = vsel %vm2348, %v2352, %v2344
    %v2357 = vsel %vm2349, %v2353, %v2345
    %v2358 = vsel %vm2350, %v2354, %v2346
    %v2359 = vsel %vm2351, %v2355, %v2347
    %v2360 = vadd.f32 %v2356, 1.0
    %v2361 = vadd.f32 %v2357, 1.0
    %v2362 = vadd.f32 %v2358, 1.0
    %v2363 = vadd.f32 %v2359, 1.0
    %v2364 = vmul.f32 %v2260, %v2360
    %v2365 = vmul.f32 %v2261, %v2361
    %v2366 = vmul.f32 %v2262, %v2362
    %v2367 = vmul.f32 %v2263, %v2363
    %v2368 = vpack.c.bf16 %v2365, %v2364
    %v2369 = vpack.c.bf16 %v2367, %v2366
    %v2370 = vld [vmem:[#allocation10] sm:$0xf]
    %v2371 = vld [vmem:[#allocation10 + $0x4] sm:$0xf]
    %v2372 = vld [vmem:[#allocation10 + $0x8] sm:$0xf]
    %v2373 = vld [vmem:[#allocation10 + $0xc] sm:$0xf]
    %v2374 = vld [vmem:[#allocation10 + $0x10] sm:$0xf]
    %v2375 = vld [vmem:[#allocation10 + $0x14] sm:$0xf]
    %v2376 = vld [vmem:[#allocation10 + $0x18] sm:$0xf]
    %v2377 = vld [vmem:[#allocation10 + $0x1c] sm:$0xf]
    %v2378 = vld [vmem:[#allocation10 + $0x20] sm:$0xf]
    %v2379 = vld [vmem:[#allocation10 + $0x24] sm:$0xf]
    %v2380 = vld [vmem:[#allocation10 + $0x28] sm:$0xf]
    %v2381 = vld [vmem:[#allocation10 + $0x2c] sm:$0xf]
    %v2382 = vld [vmem:[#allocation10 + $0x30] sm:$0xf]
    %v2383 = vld [vmem:[#allocation10 + $0x34] sm:$0xf]
    %v2384 = vld [vmem:[#allocation10 + $0x38] sm:$0xf]
    %v2385 = vld [vmem:[#allocation10 + $0x3c] sm:$0xf]
    %v2386 = vld [vmem:[%s7] sm:$0x1]
    %v2388 = vlaneseq
    %v2389 = vshrl.u32 %v2388, 7
    %v2390 = vsub.s32 0, %v2389
    %v2391 = vrot.slane %v2386, %v2390
    %v2409 = vunpack.c.l.b16 %v2370
    %v2410 = vunpack.c.l.b16 %v2371
    %v2411 = vunpack.c.l.b16 %v2372
    %v2412 = vunpack.c.l.b16 %v2373
    %v2413 = vunpack.c.l.b16 %v2374
    %v2414 = vunpack.c.l.b16 %v2375
    %v2415 = vunpack.c.l.b16 %v2376
    %v2416 = vunpack.c.l.b16 %v2377
    %v2417 = vunpack.c.l.b16 %v2378
    %v2418 = vunpack.c.l.b16 %v2379
    %v2419 = vunpack.c.l.b16 %v2380
    %v2420 = vunpack.c.l.b16 %v2381
    %v2421 = vunpack.c.l.b16 %v2382
    %v2422 = vunpack.c.l.b16 %v2383
    %v2423 = vunpack.c.l.b16 %v2384
    %v2424 = vunpack.c.l.b16 %v2385
    %v2425 = vpack.c.b16 %v2410, %v2409
    %v2426 = vpack.c.b16 %v2412, %v2411
    %v2427 = vpack.c.b16 %v2414, %v2413
    %v2428 = vpack.c.b16 %v2416, %v2415
    %v2429 = vpack.c.b16 %v2418, %v2417
    %v2430 = vpack.c.b16 %v2420, %v2419
    %v2431 = vpack.c.b16 %v2422, %v2421
    %v2432 = vpack.c.b16 %v2424, %v2423
    %2441 = vmatprep.subr.bf16.mxu0 0
    %2442 = vmatpush1.bf16.msra.mxu0 %v2425
    %2443 = vmatprep.subr.bf16.mxu0 0
    %2444 = vmatpush1.bf16.msra.mxu0 %v2426
    %2445 = vmatprep.subr.bf16.mxu0 0
    %2446 = vmatpush1.bf16.msra.mxu0 %v2427
    %2447 = vmatprep.subr.bf16.mxu0 0
    %2448 = vmatpush1.bf16.msra.mxu0 %v2428
    %2449 = vmatprep.subr.bf16.mxu0 0
    %2450 = vmatpush1.bf16.msra.mxu0 %v2429
    %2451 = vmatprep.subr.bf16.mxu0 0
    %2452 = vmatpush1.bf16.msra.mxu0 %v2430
    %2453 = vmatprep.subr.bf16.mxu0 0
    %2454 = vmatpush1.bf16.msra.mxu0 %v2431
    %2455 = vmatprep.subr.bf16.mxu0 0
    %2456 = vmatpush1.bf16.msra.mxu0 %v2432
    %2457 = vmatprep.subr.bf16.mxu0 0
    %2458 = vmatpush1.bf16.msra.mxu0 0
    %2459 = vmatprep.subr.bf16.mxu0 0
    %2460 = vmatpush1.bf16.msra.mxu0 0
    %2461 = vmatprep.subr.bf16.mxu0 0
    %2462 = vmatpush1.bf16.msra.mxu0 0
    %2463 = vmatprep.subr.bf16.mxu0 0
    %2464 = vmatpush1.bf16.msra.mxu0 0
    %2465 = vmatprep.subr.bf16.mxu0 0
    %2466 = vmatpush1.bf16.msra.mxu0 0
    %2467 = vmatprep.subr.bf16.mxu0 0
    %2468 = vmatpush1.bf16.msra.mxu0 0
    %2469 = vmatprep.subr.bf16.mxu0 0
    %2470 = vmatpush1.bf16.msra.mxu0 0
    %2471 = vmatprep.subr.bf16.mxu0 0
    %2472 = vmatpush1.bf16.msra.mxu0 0
    %2473 = vmatprep.mubr.bf16.mxu0 0
    %2474 = vmatmul.mubr.bf16.gmra.mrb[0].mxu0 %v2368
    %v2475 = vpop.f32.mrb[0].mxu0
    %v2476 = vadd.f32 %v2391, %v2475
    %v2477 = vpop.f32.mrb[0].mxu0
    %v2478 = vpop.f32.mrb[0].mxu0
    %v2479 = vadd.f32 %v2391, %v2478
    %v2480 = vpop.f32.mrb[0].mxu0
    %2481 = vmatprep.mubr.bf16.mxu0 0
    %2482 = vmatmul.mubr.bf16.gmra.mrb[0].mxu0 %v2369
    %v2483 = vpop.f32.mrb[0].mxu0
    %v2484 = vadd.f32 %v2391, %v2483
    %v2485 = vpop.f32.mrb[0].mxu0
    %v2486 = vpop.f32.mrb[0].mxu0
    %v2487 = vadd.f32 %v2391, %v2486
    %v2488 = vpop.f32.mrb[0].mxu0
    %2489 = vdwg.mxu0
    %v2490 = vadd.f32 %v2476, %v138
    %v2491 = vadd.f32 %v2479, %v139
    %v2492 = vadd.f32 %v2484, %v140
    %v2493 = vadd.f32 %v2487, %v141
    %v2494 = vpack.c.bf16 %v2491, %v2490
    %v2495 = vpack.c.bf16 %v2493, %v2492
    %v2496 = vld [vmem:[#allocation11] sm:$0xf]
    %v2497 = vld [vmem:[#allocation11 + $0x4] sm:$0xf]
    %v2498 = vld [vmem:[#allocation11 + $0x8] sm:$0xf]
    %v2499 = vld [vmem:[#allocation11 + $0xc] sm:$0xf]
    %v2500 = vld [vmem:[#allocation11 + $0x10] sm:$0xf]
    %v2501 = vld [vmem:[#allocation11 + $0x14] sm:$0xf]
    %v2502 = vld [vmem:[#allocation11 + $0x18] sm:$0xf]
    %v2503 = vld [vmem:[#allocation11 + $0x1c] sm:$0xf]
    %v2504 = vld [vmem:[#allocation11 + $0x20] sm:$0xf]
    %v2505 = vld [vmem:[#allocation11 + $0x24] sm:$0xf]
    %v2506 = vld [vmem:[#allocation11 + $0x28] sm:$0xf]
    %v2507 = vld [vmem:[#allocation11 + $0x2c] sm:$0xf]
    %v2508 = vld [vmem:[#allocation11 + $0x30] sm:$0xf]
    %v2509 = vld [vmem:[#allocation11 + $0x34] sm:$0xf]
    %v2510 = vld [vmem:[#allocation11 + $0x38] sm:$0xf]
    %v2511 = vld [vmem:[#allocation11 + $0x3c] sm:$0xf]
    %v2512 = vld [vmem:[%s9] sm:$0x1]
    %v2514 = vlaneseq
    %v2515 = vshrl.u32 %v2514, 7
    %v2516 = vsub.s32 0, %v2515
    %v2517 = vrot.slane %v2512, %v2516
    %v2535 = vunpack.c.l.b16 %v2496
    %v2536 = vunpack.c.l.b16 %v2497
    %v2537 = vunpack.c.l.b16 %v2498
    %v2538 = vunpack.c.l.b16 %v2499
    %v2539 = vunpack.c.l.b16 %v2500
    %v2540 = vunpack.c.l.b16 %v2501
    %v2541 = vunpack.c.l.b16 %v2502
    %v2542 = vunpack.c.l.b16 %v2503
    %v2543 = vunpack.c.l.b16 %v2504
    %v2544 = vunpack.c.l.b16 %v2505
    %v2545 = vunpack.c.l.b16 %v2506
    %v2546 = vunpack.c.l.b16 %v2507
    %v2547 = vunpack.c.l.b16 %v2508
    %v2548 = vunpack.c.l.b16 %v2509
    %v2549 = vunpack.c.l.b16 %v2510
    %v2550 = vunpack.c.l.b16 %v2511
    %v2551 = vpack.c.b16 %v2536, %v2535
    %v2552 = vpack.c.b16 %v2538, %v2537
    %v2553 = vpack.c.b16 %v2540, %v2539
    %v2554 = vpack.c.b16 %v2542, %v2541
    %v2555 = vpack.c.b16 %v2544, %v2543
    %v2556 = vpack.c.b16 %v2546, %v2545
    %v2557 = vpack.c.b16 %v2548, %v2547
    %v2558 = vpack.c.b16 %v2550, %v2549
    %2567 = vmatprep.subr.bf16.mxu0 0
    %2568 = vmatpush1.bf16.msra.mxu0 %v2551
    %2569 = vmatprep.subr.bf16.mxu0 0
    %2570 = vmatpush1.bf16.msra.mxu0 %v2552
    %2571 = vmatprep.subr.bf16.mxu0 0
    %2572 = vmatpush1.bf16.msra.mxu0 %v2553
    %2573 = vmatprep.subr.bf16.mxu0 0
    %2574 = vmatpush1.bf16.msra.mxu0 %v2554
    %2575 = vmatprep.subr.bf16.mxu0 0
    %2576 = vmatpush1.bf16.msra.mxu0 %v2555
    %2577 = vmatprep.subr.bf16.mxu0 0
    %2578 = vmatpush1.bf16.msra.mxu0 %v2556
    %2579 = vmatprep.subr.bf16.mxu0 0
    %2580 = vmatpush1.bf16.msra.mxu0 %v2557
    %2581 = vmatprep.subr.bf16.mxu0 0
    %2582 = vmatpush1.bf16.msra.mxu0 %v2558
    %2583 = vmatprep.subr.bf16.mxu0 0
    %2584 = vmatpush1.bf16.msra.mxu0 0
    %2585 = vmatprep.subr.bf16.mxu0 0
    %2586 = vmatpush1.bf16.msra.mxu0 0
    %2587 = vmatprep.subr.bf16.mxu0 0
    %2588 = vmatpush1.bf16.msra.mxu0 0
    %2589 = vmatprep.subr.bf16.mxu0 0
    %2590 = vmatpush1.bf16.msra.mxu0 0
    %2591 = vmatprep.subr.bf16.mxu0 0
    %2592 = vmatpush1.bf16.msra.mxu0 0
    %2593 = vmatprep.subr.bf16.mxu0 0
    %2594 = vmatpush1.bf16.msra.mxu0 0
    %2595 = vmatprep.subr.bf16.mxu0 0
    %2596 = vmatpush1.bf16.msra.mxu0 0
    %2597 = vmatprep.subr.bf16.mxu0 0
    %2598 = vmatpush1.bf16.msra.mxu0 0
    %2599 = vmatprep.mubr.bf16.mxu0 0
    %2600 = vmatmul.mubr.bf16.gmra.mrb[0].mxu0 %v2494
    %v2601 = vpop.f32.mrb[0].mxu0
    %v2602 = vadd.f32 %v2517, %v2601
    %v2603 = vpop.f32.mrb[0].mxu0
    %v2604 = vpop.f32.mrb[0].mxu0
    %v2605 = vadd.f32 %v2517, %v2604
    %v2606 = vpop.f32.mrb[0].mxu0
    %2607 = vmatprep.mubr.bf16.mxu0 0
    %2608 = vmatmul.mubr.bf16.gmra.mrb[0].mxu0 %v2495
    %v2609 = vpop.f32.mrb[0].mxu0
    %v2610 = vadd.f32 %v2517, %v2609
    %v2611 = vpop.f32.mrb[0].mxu0
    %v2612 = vpop.f32.mrb[0].mxu0
    %v2613 = vadd.f32 %v2517, %v2612
    %v2614 = vpop.f32.mrb[0].mxu0
    %2615 = vdwg.mxu0
    %v2616 = vmul.f32 %v2602, 0.5
    %v2617 = vmul.f32 %v2605, 0.5
    %v2618 = vmul.f32 %v2610, 0.5
    %v2619 = vmul.f32 %v2613, 0.5
    %v2620 = vmul.f32 %v2602, 0.70710677
    %v2621 = vmul.f32 %v2605, 0.70710677
    %v2622 = vmul.f32 %v2610, 0.70710677
    %v2623 = vmul.f32 %v2613, 0.70710677
    %v2624 = vand.u32 2147483647, %v2620
    %v2625 = vand.u32 2147483647, %v2621
    %v2626 = vand.u32 2147483647, %v2622
    %v2627 = vand.u32 2147483647, %v2623
    %v2628 = vmul.f32 %v2624, 0.3275911
    %v2629 = vmul.f32 %v2625, 0.3275911
    %v2630 = vmul.f32 %v2626, 0.3275911
    %v2631 = vmul.f32 %v2627, 0.3275911
    %v2632 = vadd.f32 %v2628, 1.0
    %v2633 = vadd.f32 %v2629, 1.0
    %v2634 = vadd.f32 %v2630, 1.0
    %v2635 = vadd.f32 %v2631, 1.0
    %v2636 = vrcp.pop %v2632
    %v2637 = vmul.f32 1.0, %v2636
    %v2638 = vrcp.pop %v2633
    %v2639 = vmul.f32 1.0, %v2638
    %v2640 = vrcp.pop %v2634
    %v2641 = vmul.f32 1.0, %v2640
    %v2642 = vrcp.pop %v2635
    %v2643 = vmul.f32 1.0, %v2642
    %v2644 = vmul.f32 %v2637, 1.0614054
    %v2645 = vmul.f32 %v2639, 1.0614054
    %v2646 = vmul.f32 %v2641, 1.0614054
    %v2647 = vmul.f32 %v2643, 1.0614054
    %v2648 = vadd.f32 %v2644, -1.4531521
    %v2649 = vadd.f32 %v2645, -1.4531521
    %v2650 = vadd.f32 %v2646, -1.4531521
    %v2651 = vadd.f32 %v2647, -1.4531521
    %v2652 = vmul.f32 %v2637, %v2648
    %v2653 = vmul.f32 %v2639, %v2649
    %v2654 = vmul.f32 %v2641, %v2650
    %v2655 = vmul.f32 %v2643, %v2651
    %v2656 = vadd.f32 %v2652, 1.4214138
    %v2657 = vadd.f32 %v2653, 1.4214138
    %v2658 = vadd.f32 %v2654, 1.4214138
    %v2659 = vadd.f32 %v2655, 1.4214138
    %v2660 = vmul.f32 %v2637, %v2656
    %v2661 = vmul.f32 %v2639, %v2657
    %v2662 = vmul.f32 %v2641, %v2658
    %v2663 = vmul.f32 %v2643, %v2659
    %v2664 = vadd.f32 %v2660, -0.28449672
    %v2665 = vadd.f32 %v2661, -0.28449672
    %v2666 = vadd.f32 %v2662, -0.28449672
    %v2667 = vadd.f32 %v2663, -0.28449672
    %v2668 = vmul.f32 %v2637, %v2664
    %v2669 = vmul.f32 %v2639, %v2665
    %v2670 = vmul.f32 %v2641, %v2666
    %v2671 = vmul.f32 %v2643, %v2667
    %v2672 = vadd.f32 %v2668, 0.2548296
    %v2673 = vadd.f32 %v2669, 0.2548296
    %v2674 = vadd.f32 %v2670, 0.2548296
    %v2675 = vadd.f32 %v2671, 0.2548296
    %v2676 = vmul.f32 %v2637, %v2672
    %v2677 = vmul.f32 %v2639, %v2673
    %v2678 = vmul.f32 %v2641, %v2674
    %v2679 = vmul.f32 %v2643, %v2675
    %v2680 = vmul.f32 %v2624, %v2624
    %v2681 = vmul.f32 %v2625, %v2625
    %v2682 = vmul.f32 %v2626, %v2626
    %v2683 = vmul.f32 %v2627, %v2627
    %v2684 = vsub.f32 0.0, %v2680
    %v2685 = vsub.f32 0.0, %v2681
    %v2686 = vsub.f32 0.0, %v2682
    %v2687 = vsub.f32 0.0, %v2683
    %v2688 = vmul.f32 %v2684, 1.442695
    %v2689 = vpow.pop %v2688
    %v2690 = vmul.f32 %v2685, 1.442695
    %v2691 = vpow.pop %v2690
    %v2692 = vmul.f32 %v2686, 1.442695
    %v2693 = vpow.pop %v2692
    %v2694 = vmul.f32 %v2687, 1.442695
    %v2695 = vpow.pop %v2694
    %v2696 = vmul.f32 %v2676, %v2689
    %v2697 = vmul.f32 %v2677, %v2691
    %v2698 = vmul.f32 %v2678, %v2693
    %v2699 = vmul.f32 %v2679, %v2695
    %v2700 = vsub.f32 1.0, %v2696
    %v2701 = vsub.f32 1.0, %v2697
    %v2702 = vsub.f32 1.0, %v2698
    %v2703 = vsub.f32 1.0, %v2699
    %vm2704 = vcmp.lt.f32.partialorder %v2620, 0.0
    %vm2705 = vcmp.lt.f32.partialorder %v2621, 0.0
    %vm2706 = vcmp.lt.f32.partialorder %v2622, 0.0
    %vm2707 = vcmp.lt.f32.partialorder %v2623, 0.0
    %v2708 = vsub.f32 0.0, %v2700
    %v2709 = vsub.f32 0.0, %v2701
    %v2710 = vsub.f32 0.0, %v2702
    %v2711 = vsub.f32 0.0, %v2703
    %v2712 = vsel %vm2704, %v2708, %v2700
    %v2713 = vsel %vm2705, %v2709, %v2701
    %v2714 = vsel %vm2706, %v2710, %v2702
    %v2715 = vsel %vm2707, %v2711, %v2703
    %v2716 = vadd.f32 %v2712, 1.0
    %v2717 = vadd.f32 %v2713, 1.0
    %v2718 = vadd.f32 %v2714, 1.0
    %v2719 = vadd.f32 %v2715, 1.0
    %v2720 = vmul.f32 %v2616, %v2716
    %v2721 = vmul.f32 %v2617, %v2717
    %v2722 = vmul.f32 %v2618, %v2718
    %v2723 = vmul.f32 %v2619, %v2719
    %v2724 = vpack.c.bf16 %v2721, %v2720
    %v2725 = vpack.c.bf16 %v2723, %v2722
    %v2726 = vld [vmem:[#allocation13] sm:$0xf]
    %v2727 = vld [vmem:[#allocation13 + $0x4] sm:$0xf]
    %v2728 = vld [vmem:[#allocation13 + $0x8] sm:$0xf]
    %v2729 = vld [vmem:[#allocation13 + $0xc] sm:$0xf]
    %v2730 = vld [vmem:[#allocation13 + $0x10] sm:$0xf]
    %v2731 = vld [vmem:[#allocation13 + $0x14] sm:$0xf]
    %v2732 = vld [vmem:[#allocation13 + $0x18] sm:$0xf]
    %v2733 = vld [vmem:[#allocation13 + $0x1c] sm:$0xf]
    %v2734 = vld [vmem:[#allocation13 + $0x20] sm:$0xf]
    %v2735 = vld [vmem:[#allocation13 + $0x24] sm:$0xf]
    %v2736 = vld [vmem:[#allocation13 + $0x28] sm:$0xf]
    %v2737 = vld [vmem:[#allocation13 + $0x2c] sm:$0xf]
    %v2738 = vld [vmem:[#allocation13 + $0x30] sm:$0xf]
    %v2739 = vld [vmem:[#allocation13 + $0x34] sm:$0xf]
    %v2740 = vld [vmem:[#allocation13 + $0x38] sm:$0xf]
    %v2741 = vld [vmem:[#allocation13 + $0x3c] sm:$0xf]
    %v2742 = vld [vmem:[%s11] sm:$0x1]
    %v2744 = vlaneseq
    %v2745 = vshrl.u32 %v2744, 7
    %v2746 = vsub.s32 0, %v2745
    %v2747 = vrot.slane %v2742, %v2746
    %v2765 = vunpack.c.l.b16 %v2726
    %v2766 = vunpack.c.l.b16 %v2727
    %v2767 = vunpack.c.l.b16 %v2728
    %v2768 = vunpack.c.l.b16 %v2729
    %v2769 = vunpack.c.l.b16 %v2730
    %v2770 = vunpack.c.l.b16 %v2731
    %v2771 = vunpack.c.l.b16 %v2732
    %v2772 = vunpack.c.l.b16 %v2733
    %v2773 = vunpack.c.l.b16 %v2734
    %v2774 = vunpack.c.l.b16 %v2735
    %v2775 = vunpack.c.l.b16 %v2736
    %v2776 = vunpack.c.l.b16 %v2737
    %v2777 = vunpack.c.l.b16 %v2738
    %v2778 = vunpack.c.l.b16 %v2739
    %v2779 = vunpack.c.l.b16 %v2740
    %v2780 = vunpack.c.l.b16 %v2741
    %v2781 = vpack.c.b16 %v2766, %v2765
    %v2782 = vpack.c.b16 %v2768, %v2767
    %v2783 = vpack.c.b16 %v2770, %v2769
    %v2784 = vpack.c.b16 %v2772, %v2771
    %v2785 = vpack.c.b16 %v2774, %v2773
    %v2786 = vpack.c.b16 %v2776, %v2775
    %v2787 = vpack.c.b16 %v2778, %v2777
    %v2788 = vpack.c.b16 %v2780, %v2779
    %2797 = vmatprep.subr.bf16.mxu0 0
    %2798 = vmatpush1.bf16.msra.mxu0 %v2781
    %2799 = vmatprep.subr.bf16.mxu0 0
    %2800 = vmatpush1.bf16.msra.mxu0 %v2782
    %2801 = vmatprep.subr.bf16.mxu0 0
    %2802 = vmatpush1.bf16.msra.mxu0 %v2783
    %2803 = vmatprep.subr.bf16.mxu0 0
    %2804 = vmatpush1.bf16.msra.mxu0 %v2784
    %2805 = vmatprep.subr.bf16.mxu0 0
    %2806 = vmatpush1.bf16.msra.mxu0 %v2785
    %2807 = vmatprep.subr.bf16.mxu0 0
    %2808 = vmatpush1.bf16.msra.mxu0 %v2786
    %2809 = vmatprep.subr.bf16.mxu0 0
    %2810 = vmatpush1.bf16.msra.mxu0 %v2787
    %2811 = vmatprep.subr.bf16.mxu0 0
    %2812 = vmatpush1.bf16.msra.mxu0 %v2788
    %2813 = vmatprep.subr.bf16.mxu0 0
    %2814 = vmatpush1.bf16.msra.mxu0 0
    %2815 = vmatprep.subr.bf16.mxu0 0
    %2816 = vmatpush1.bf16.msra.mxu0 0
    %2817 = vmatprep.subr.bf16.mxu0 0
    %2818 = vmatpush1.bf16.msra.mxu0 0
    %2819 = vmatprep.subr.bf16.mxu0 0
    %2820 = vmatpush1.bf16.msra.mxu0 0
    %2821 = vmatprep.subr.bf16.mxu0 0
    %2822 = vmatpush1.bf16.msra.mxu0 0
    %2823 = vmatprep.subr.bf16.mxu0 0
    %2824 = vmatpush1.bf16.msra.mxu0 0
    %2825 = vmatprep.subr.bf16.mxu0 0
    %2826 = vmatpush1.bf16.msra.mxu0 0
    %2827 = vmatprep.subr.bf16.mxu0 0
    %2828 = vmatpush1.bf16.msra.mxu0 0
    %2829 = vmatprep.mubr.bf16.mxu0 0
    %2830 = vmatmul.mubr.bf16.gmra.mrb[0].mxu0 %v2724
    %v2831 = vpop.f32.mrb[0].mxu0
    %v2832 = vadd.f32 %v2747, %v2831
    %v2833 = vpop.f32.mrb[0].mxu0
    %v2834 = vpop.f32.mrb[0].mxu0
    %v2835 = vadd.f32 %v2747, %v2834
    %v2836 = vpop.f32.mrb[0].mxu0
    %2837 = vmatprep.mubr.bf16.mxu0 0
    %2838 = vmatmul.mubr.bf16.gmra.mrb[0].mxu0 %v2725
    %v2839 = vpop.f32.mrb[0].mxu0
    %v2840 = vadd.f32 %v2747, %v2839
    %v2841 = vpop.f32.mrb[0].mxu0
    %v2842 = vpop.f32.mrb[0].mxu0
    %v2843 = vadd.f32 %v2747, %v2842
    %v2844 = vpop.f32.mrb[0].mxu0
    %2845 = vdwg.mxu0
    %v2846 = vadd.f32 %v2490, %v2832
    %v2847 = vadd.f32 %v2491, %v2835
    %v2848 = vadd.f32 %v2492, %v2840
    %v2849 = vadd.f32 %v2493, %v2843
    %2850 = vst [vmem:[#allocation14] sm:$0xff] %v2846
    %2851 = vst [vmem:[#allocation14 + $0x8] sm:$0xff] %v2847
    %2852 = vst [vmem:[#allocation14 + $0x10] sm:$0xff] %v2848
    %2853 = vst [vmem:[#allocation14 + $0x18] sm:$0xff] %v2849
    // Predicated region
    $region78: #{tpu_custom_call.1} parent=1 // pred_check
      _
    $region79: #{tpu_custom_call.1} parent=1 // pred_check_branch
      %2855 = sbr.rel (0) target = $region81
    $region80: #{tpu_custom_call.1} parent=1 // pred_region
      %s2857 = ssub.s32 512, 512
      %2858 = vsyncadd [#allocation4], %s2857
      %s2859 = sshll.u32 [#allocation14], 4
      %s2860 = int_to_ptr.vmem [resolvable:$true] %s2859
      %2865 = dma.vmem_to_hbm [thread:$0]  %s2860, 512, %s12, [#allocation4], 128, 128, 8
    $region81: #{tpu_custom_call.1} parent=1 // pred_fallthru
      _
    // Predicated region
    $region82: #{tpu_custom_call.1} parent=1 // pred_check
      _
    $region83: #{tpu_custom_call.1} parent=1 // pred_check_branch
      %2867 = sbr.rel (0) target = $region85
    $region84: #{tpu_custom_call.1} parent=1 // pred_region
      %2868 = dma.done [#allocation4], 512
    $region85: #{tpu_custom_call.1} parent=1 // pred_fallthru
      _
    %2869 = vsyncpa [#allocation3], 1
    %2870 = vsyncpa [#allocation6], 1
    %2871 = vsyncpa [#allocation9], 1
    %2872 = vsyncpa [#allocation12], 1
    %2873 = vsyncpa [#allocation4], 1

</llo_original>
